<compile_context>
chip_gen: v7x
topology: tpu7x:2x2x1
jax: 0.10.0
libtpu: 0.0.40
codegen_flags: <defaults>
</compile_context>

<pallas_src>
import functools

import jax
import jax.numpy as jnp
from jax import lax
from jax.experimental import pallas as pl
from jax.experimental.pallas import tpu as pltpu


def _round_up(a: int, b: int) -> int:
    return ((a + b - 1) // b) * b


def _fused_kernel(x_ref, w_ref, b_ref, gamma_ref, beta_ref, mw_ref,
                  oh_ref, oht_ref, o_ref, *, inv_gs: float, eps: float):
    # ---- GEMM: cast x to bf16 in-kernel; f32 accumulation on the MXU ----
    xb = x_ref[...].astype(jnp.bfloat16)
    y = jnp.dot(xb, w_ref[...], preferred_element_type=jnp.float32)   # (tb, C)
    y = y + b_ref[...]

    # ---- GroupNorm, two-pass (mean-subtract before square) ----
    # Group reduction / broadcast via exact 0/1 bf16 one-hot matmuls
    # (f32 accumulation); group axis padded to 128 lanes.
    yb = y.astype(jnp.bfloat16)
    sum_g = jnp.dot(yb, oh_ref[...], preferred_element_type=jnp.float32)   # (tb, Gp)
    mean_g = sum_g * inv_gs
    mean_b = jnp.dot(mean_g.astype(jnp.bfloat16), oht_ref[...],
                     preferred_element_type=jnp.float32)                   # (tb, C)
    yc = y - mean_b                                                        # centered, f32
    sq = (yc * yc).astype(jnp.bfloat16)
    ssq_g = jnp.dot(sq, oh_ref[...], preferred_element_type=jnp.float32)   # (tb, Gp)
    inv_g = lax.rsqrt(ssq_g * inv_gs + eps)                                # padded groups -> finite
    inv_b = jnp.dot(inv_g.astype(jnp.bfloat16), oht_ref[...],
                    preferred_element_type=jnp.float32)                    # (tb, C)

    yn = yc * (inv_b * gamma_ref[...]) + beta_ref[...]

    # ---- Swish -> multiply -> Swish ----
    # sigmoid(x) = 0.5*(tanh(0.5*x)+1): one EUP op per element, no divide.
    s1 = yn * (0.5 * (jnp.tanh(0.5 * yn) + 1.0))
    s2 = s1 * mw_ref[...]
    o_ref[...] = (s2 * (0.5 * (jnp.tanh(0.5 * s2) + 1.0))).astype(o_ref.dtype)


def prepare_params(weight, bias, gamma, beta, multiply_weight, *, num_groups: int):
    """One-time parameter preparation (cache the result; do NOT call per step)."""
    C, K = weight.shape
    assert C % num_groups == 0
    gs = C // num_groups
    w_t = jnp.asarray(weight, jnp.float32).T.astype(jnp.bfloat16)          # (K, C)
    g_pad = _round_up(max(num_groups, 128), 128)                           # lane-pad groups
    grp = jnp.arange(C, dtype=jnp.int32) // gs
    onehot = (grp[:, None] == jnp.arange(g_pad, dtype=jnp.int32)[None, :]
              ).astype(jnp.bfloat16)                                       # (C, Gp) exact 0/1
    onehot_t = jnp.transpose(onehot)                                       # (Gp, C)
    f32 = jnp.float32
    return (w_t,
            jnp.asarray(bias, f32).reshape(1, C),
            jnp.asarray(gamma, f32).reshape(1, C),
            jnp.asarray(beta, f32).reshape(1, C),
            jnp.asarray(multiply_weight, f32).reshape(1, C),
            onehot, onehot_t)


@functools.partial(jax.jit,
                   static_argnames=("num_groups", "eps", "tile_b", "out_dtype"))
def gemm_groupnorm_swish_multiply_swish(x, w_t, bias2, gamma2, beta2, mult2,
                                        onehot, onehot_t, *, num_groups: int,
                                        eps: float = 1e-5, tile_b: int = 128,
                                        out_dtype=jnp.float32):
    """x: (B, K) f32; prepared params from prepare_params(); returns (B, C)."""
    B, K = x.shape
    K2, C = w_t.shape
    assert K == K2 and C % num_groups == 0
    gs = C // num_groups
    g_pad = onehot.shape[1]

    # --- batch tile: multiple of 8, prefer >= 4 grid steps (pipelining; 2/TC on v7x) ---
    tb = _round_up(min(tile_b, _round_up(B, 8)), 8)
    while tb > 8 and pl.cdiv(B, tb) < 4:
        tb = _round_up(max(8, tb // 2), 8)
    grid = (pl.cdiv(B, tb),)   # partial last block is masked by Pallas; no padding copy

    kernel = functools.partial(_fused_kernel, inv_gs=1.0 / gs, eps=float(eps))

    # --- advisory cost + VMEM budget computed from the actual footprint ---
    flops = 2 * B * K * C + 8 * B * C * g_pad
    bytes_accessed = (B * K * 4 + K * C * 2 + B * C * 4
                      + 4 * C * 4 + 2 * C * g_pad * 2)
    cost = pl.CostEstimate(flops=int(flops),
                           transcendentals=int(2 * B * C + B * g_pad),
                           bytes_accessed=int(bytes_accessed))
    vmem_need = (2 * tb * K * 4            # x tile (double-buffered)
                 + 2 * K * C * 2           # resident bf16 weight (assume 2 bufs)
                 + 2 * 2 * C * g_pad * 2   # both one-hots
                 + 2 * tb * C * 4          # output tile
                 + 8 * C * 4               # per-channel params
                 + 8 * tb * C * 4)         # f32 intermediates (compiler scratch)
    vmem_limit = min(32 * 1024 * 1024, max(16 * 1024 * 1024, int(vmem_need)))

    out = pl.pallas_call(
        kernel,
        out_shape=jax.ShapeDtypeStruct((B, C), out_dtype),
        grid_spec=pltpu.PrefetchScalarGridSpec(
            num_scalar_prefetch=0,
            grid=grid,
            in_specs=[
                pl.BlockSpec((tb, K), lambda i: (i, 0)),            # x tile (f32)
                pl.BlockSpec((K, C), lambda i: (0, 0)),             # weight^T (bf16, resident)
                pl.BlockSpec((1, C), lambda i: (0, 0)),             # bias
                pl.BlockSpec((1, C), lambda i: (0, 0)),             # gamma
                pl.BlockSpec((1, C), lambda i: (0, 0)),             # beta
                pl.BlockSpec((1, C), lambda i: (0, 0)),             # multiply_weight
                pl.BlockSpec((C, g_pad), lambda i: (0, 0)),         # one-hot (C, Gp)
                pl.BlockSpec((g_pad, C), lambda i: (0, 0)),         # one-hot^T (Gp, C)
            ],
            out_specs=pl.BlockSpec((tb, C), lambda i: (i, 0)),
        ),
        compiler_params=pltpu.CompilerParams(
            dimension_semantics=("parallel",),
            vmem_limit_bytes=vmem_limit,
        ),
        cost_estimate=cost,
    )(x, w_t, bias2, gamma2, beta2, mult2, onehot, onehot_t)
    return out


def _reference(x, weight, bias, gamma, beta, mult_w, num_groups, eps=1e-5):
    # True f32 semantics of the PyTorch module.
    y = jnp.dot(x, weight.T, precision=lax.Precision.HIGHEST) + bias
    B, C = y.shape
    gs = C // num_groups
    yg = y.reshape(B, num_groups, gs)
    mean = yg.mean(axis=-1, keepdims=True)
    var = yg.var(axis=-1, keepdims=True)
    yn = ((yg - mean) * lax.rsqrt(var + eps)).reshape(B, C)
    yn = yn * gamma + beta
    s1 = yn * jax.nn.sigmoid(yn)
    s2 = s1 * mult_w
    return s2 * jax.nn.sigmoid(s2)


if __name__ == "__main__":
    # Module spec: in_features=512, out_features=1024, 16 groups.
    batch = 128
    in_features = 512
    out_features = 1024
    num_groups = 16

    key = jax.random.PRNGKey(0)
    kx, kw, kb, kg, kbt, km = jax.random.split(key, 6)

    x = jax.random.normal(kx, (batch, in_features), dtype=jnp.float32)
    # nn.Linear-like init: weight (out, in) ~ 1/sqrt(in); small bias.
    weight = jax.random.normal(kw, (out_features, in_features),
                               dtype=jnp.float32) * (in_features ** -0.5)
    bias = jax.random.uniform(kb, (out_features,), jnp.float32, -0.04, 0.04)
    gamma = 1.0 + 0.1 * jax.random.normal(kg, (out_features,), dtype=jnp.float32)
    beta = 0.1 * jax.random.normal(kbt, (out_features,), dtype=jnp.float32)
    mult_w = jax.random.normal(km, (out_features,), dtype=jnp.float32)

    params = prepare_params(weight, bias, gamma, beta, mult_w, num_groups=num_groups)
    out = gemm_groupnorm_swish_multiply_swish(x, *params, num_groups=num_groups)
    out = jax.block_until_ready(out)

    ref = _reference(x, weight, bias, gamma, beta, mult_w, num_groups)
    err = jnp.max(jnp.abs(out - ref))
    # bf16 MXU operands (f32 accumulation) -> ~1e-2-level worst-case deviation
    # from the exact f32 PyTorch forward.
    assert jnp.allclose(out, ref, atol=2e-2, rtol=2e-2), f"max err {err}"

    print("KERNEL_OK")
</pallas_src>

<mosaic_0001>
module attributes {stable_mosaic.version = 11 : i64} {
  func.func @_fused_kernel(%arg0: i32, %arg1: memref<32x512xf32, #tpu.memory_space<vmem>>, %arg2: memref<512x1024xbf16, #tpu.memory_space<vmem>>, %arg3: memref<1x1024xf32, #tpu.memory_space<vmem>>, %arg4: memref<1x1024xf32, #tpu.memory_space<vmem>>, %arg5: memref<1x1024xf32, #tpu.memory_space<vmem>>, %arg6: memref<1x1024xf32, #tpu.memory_space<vmem>>, %arg7: memref<1024x128xbf16, #tpu.memory_space<vmem>>, %arg8: memref<128x1024xbf16, #tpu.memory_space<vmem>>, %arg9: memref<32x1024xf32, #tpu.memory_space<vmem>>) attributes {dimension_semantics = [#tpu.dimension_semantics<parallel>], iteration_bounds = array<i64: 4>, scalar_prefetch = 0 : i64, scratch_operands = 0 : i64, tpu.core_type = #tpu.core_type<tc>, window_params = [{transform_indices = @transform_0, window_bounds = array<i64: 32, 512>}, {pipeline_mode = #tpu.pipeline_mode<synchronous>, transform_indices = @transform_1, window_bounds = array<i64: 512, 1024>}, {pipeline_mode = #tpu.pipeline_mode<synchronous>, transform_indices = @transform_2, window_bounds = array<i64: 1, 1024>}, {pipeline_mode = #tpu.pipeline_mode<synchronous>, transform_indices = @transform_3, window_bounds = array<i64: 1, 1024>}, {pipeline_mode = #tpu.pipeline_mode<synchronous>, transform_indices = @transform_4, window_bounds = array<i64: 1, 1024>}, {pipeline_mode = #tpu.pipeline_mode<synchronous>, transform_indices = @transform_5, window_bounds = array<i64: 1, 1024>}, {pipeline_mode = #tpu.pipeline_mode<synchronous>, transform_indices = @transform_6, window_bounds = array<i64: 1024, 128>}, {pipeline_mode = #tpu.pipeline_mode<synchronous>, transform_indices = @transform_7, window_bounds = array<i64: 128, 1024>}, {transform_indices = @transform_8, window_bounds = array<i64: 32, 1024>}]} {
    %c0 = arith.constant 0 : index
    %c0_0 = arith.constant 0 : index
    %0 = vector.load %arg1[%c0, %c0_0] : memref<32x512xf32, #tpu.memory_space<vmem>>, vector<32x512xf32>
    %1 = arith.truncf %0 : vector<32x512xf32> to vector<32x512xbf16>
    %c0_1 = arith.constant 0 : index
    %c0_2 = arith.constant 0 : index
    %2 = vector.load %arg2[%c0_1, %c0_2] : memref<512x1024xbf16, #tpu.memory_space<vmem>>, vector<512x1024xbf16>
    %cst = arith.constant dense<0.000000e+00> : vector<32x1024xf32>
    %3 = tpu.matmul %1, %2, %cst {dimension_numbers = #tpu.dot_dimension_numbers<[1], [0], [0], [1], [0, 0, 1, 1], [], []>} : vector<32x512xbf16>, vector<512x1024xbf16>, vector<32x1024xf32> -> vector<32x1024xf32>
    %c0_3 = arith.constant 0 : index
    %c0_4 = arith.constant 0 : index
    %4 = vector.load %arg3[%c0_3, %c0_4] : memref<1x1024xf32, #tpu.memory_space<vmem>>, vector<1x1024xf32>
    %5 = vector.broadcast %4 : vector<1x1024xf32> to vector<32x1024xf32>
    %6 = arith.addf %3, %5 : vector<32x1024xf32>
    %7 = arith.truncf %6 : vector<32x1024xf32> to vector<32x1024xbf16>
    %c0_5 = arith.constant 0 : index
    %c0_6 = arith.constant 0 : index
    %8 = vector.load %arg7[%c0_5, %c0_6] : memref<1024x128xbf16, #tpu.memory_space<vmem>>, vector<1024x128xbf16>
    %cst_7 = arith.constant dense<0.000000e+00> : vector<32x128xf32>
    %9 = tpu.matmul %7, %8, %cst_7 {dimension_numbers = #tpu.dot_dimension_numbers<[1], [0], [0], [1], [0, 0, 1, 1], [], []>} : vector<32x1024xbf16>, vector<1024x128xbf16>, vector<32x128xf32> -> vector<32x128xf32>
    %cst_8 = arith.constant 1.562500e-02 : f32
    %10 = vector.broadcast %cst_8 : f32 to vector<32x128xf32>
    %11 = arith.mulf %9, %10 : vector<32x128xf32>
    %12 = arith.truncf %11 : vector<32x128xf32> to vector<32x128xbf16>
    %c0_9 = arith.constant 0 : index
    %c0_10 = arith.constant 0 : index
    %13 = vector.load %arg8[%c0_9, %c0_10] : memref<128x1024xbf16, #tpu.memory_space<vmem>>, vector<128x1024xbf16>
    %cst_11 = arith.constant dense<0.000000e+00> : vector<32x1024xf32>
    %14 = tpu.matmul %12, %13, %cst_11 {dimension_numbers = #tpu.dot_dimension_numbers<[1], [0], [0], [1], [0, 0, 1, 1], [], []>} : vector<32x128xbf16>, vector<128x1024xbf16>, vector<32x1024xf32> -> vector<32x1024xf32>
    %15 = arith.subf %6, %14 : vector<32x1024xf32>
    %16 = arith.mulf %15, %15 : vector<32x1024xf32>
    %17 = arith.truncf %16 : vector<32x1024xf32> to vector<32x1024xbf16>
    %c0_12 = arith.constant 0 : index
    %c0_13 = arith.constant 0 : index
    %18 = vector.load %arg7[%c0_12, %c0_13] : memref<1024x128xbf16, #tpu.memory_space<vmem>>, vector<1024x128xbf16>
    %cst_14 = arith.constant dense<0.000000e+00> : vector<32x128xf32>
    %19 = tpu.matmul %17, %18, %cst_14 {dimension_numbers = #tpu.dot_dimension_numbers<[1], [0], [0], [1], [0, 0, 1, 1], [], []>} : vector<32x1024xbf16>, vector<1024x128xbf16>, vector<32x128xf32> -> vector<32x128xf32>
    %cst_15 = arith.constant 1.562500e-02 : f32
    %20 = vector.broadcast %cst_15 : f32 to vector<32x128xf32>
    %21 = arith.mulf %19, %20 : vector<32x128xf32>
    %cst_16 = arith.constant 9.99999974E-6 : f32
    %22 = vector.broadcast %cst_16 : f32 to vector<32x128xf32>
    %23 = arith.addf %21, %22 : vector<32x128xf32>
    %24 = math.rsqrt %23 : vector<32x128xf32>
    %25 = arith.truncf %24 : vector<32x128xf32> to vector<32x128xbf16>
    %c0_17 = arith.constant 0 : index
    %c0_18 = arith.constant 0 : index
    %26 = vector.load %arg8[%c0_17, %c0_18] : memref<128x1024xbf16, #tpu.memory_space<vmem>>, vector<128x1024xbf16>
    %cst_19 = arith.constant dense<0.000000e+00> : vector<32x1024xf32>
    %27 = tpu.matmul %25, %26, %cst_19 {dimension_numbers = #tpu.dot_dimension_numbers<[1], [0], [0], [1], [0, 0, 1, 1], [], []>} : vector<32x128xbf16>, vector<128x1024xbf16>, vector<32x1024xf32> -> vector<32x1024xf32>
    %c0_20 = arith.constant 0 : index
    %c0_21 = arith.constant 0 : index
    %28 = vector.load %arg4[%c0_20, %c0_21] : memref<1x1024xf32, #tpu.memory_space<vmem>>, vector<1x1024xf32>
    %29 = vector.broadcast %28 : vector<1x1024xf32> to vector<32x1024xf32>
    %30 = arith.mulf %27, %29 : vector<32x1024xf32>
    %31 = arith.mulf %15, %30 : vector<32x1024xf32>
    %c0_22 = arith.constant 0 : index
    %c0_23 = arith.constant 0 : index
    %32 = vector.load %arg5[%c0_22, %c0_23] : memref<1x1024xf32, #tpu.memory_space<vmem>>, vector<1x1024xf32>
    %33 = vector.broadcast %32 : vector<1x1024xf32> to vector<32x1024xf32>
    %34 = arith.addf %31, %33 : vector<32x1024xf32>
    %cst_24 = arith.constant 5.000000e-01 : f32
    %35 = vector.broadcast %cst_24 : f32 to vector<32x1024xf32>
    %36 = arith.mulf %35, %34 : vector<32x1024xf32>
    %37 = math.tanh %36 : vector<32x1024xf32>
    %cst_25 = arith.constant 1.000000e+00 : f32
    %38 = vector.broadcast %cst_25 : f32 to vector<32x1024xf32>
    %39 = arith.addf %37, %38 : vector<32x1024xf32>
    %cst_26 = arith.constant 5.000000e-01 : f32
    %40 = vector.broadcast %cst_26 : f32 to vector<32x1024xf32>
    %41 = arith.mulf %40, %39 : vector<32x1024xf32>
    %42 = arith.mulf %34, %41 : vector<32x1024xf32>
    %c0_27 = arith.constant 0 : index
    %c0_28 = arith.constant 0 : index
    %43 = vector.load %arg6[%c0_27, %c0_28] : memref<1x1024xf32, #tpu.memory_space<vmem>>, vector<1x1024xf32>
    %44 = vector.broadcast %43 : vector<1x1024xf32> to vector<32x1024xf32>
    %45 = arith.mulf %42, %44 : vector<32x1024xf32>
    %cst_29 = arith.constant 5.000000e-01 : f32
    %46 = vector.broadcast %cst_29 : f32 to vector<32x1024xf32>
    %47 = arith.mulf %46, %45 : vector<32x1024xf32>
    %48 = math.tanh %47 : vector<32x1024xf32>
    %cst_30 = arith.constant 1.000000e+00 : f32
    %49 = vector.broadcast %cst_30 : f32 to vector<32x1024xf32>
    %50 = arith.addf %48, %49 : vector<32x1024xf32>
    %cst_31 = arith.constant 5.000000e-01 : f32
    %51 = vector.broadcast %cst_31 : f32 to vector<32x1024xf32>
    %52 = arith.mulf %51, %50 : vector<32x1024xf32>
    %53 = arith.mulf %45, %52 : vector<32x1024xf32>
    %c0_32 = arith.constant 0 : index
    %c0_33 = arith.constant 0 : index
    %54 = vector.load %arg9[%c0_32, %c0_33] : memref<32x1024xf32, #tpu.memory_space<vmem>>, vector<32x1024xf32>
    tpu.vector_store %arg9[%c0_32, %c0_33], %53 {strides = array<i32>} : memref<32x1024xf32, #tpu.memory_space<vmem>>, vector<32x1024xf32>,
    return
  }
  func.func @transform_0(%arg0: i32) -> (i32, i32) {
    %c0_i32 = arith.constant 0 : i32
    %c0_i32_0 = arith.constant 0 : i32
    return %arg0, %c0_i32 : i32, i32
  }
  func.func @transform_1(%arg0: i32) -> (i32, i32) {
    %c0_i32 = arith.constant 0 : i32
    %c0_i32_0 = arith.constant 0 : i32
    %c0_i32_1 = arith.constant 0 : i32
    return %c0_i32, %c0_i32_0 : i32, i32
  }
  func.func @transform_2(%arg0: i32) -> (i32, i32) {
    %c0_i32 = arith.constant 0 : i32
    %c0_i32_0 = arith.constant 0 : i32
    %c0_i32_1 = arith.constant 0 : i32
    return %c0_i32, %c0_i32_0 : i32, i32
  }
  func.func @transform_3(%arg0: i32) -> (i32, i32) {
    %c0_i32 = arith.constant 0 : i32
    %c0_i32_0 = arith.constant 0 : i32
    %c0_i32_1 = arith.constant 0 : i32
    return %c0_i32, %c0_i32_0 : i32, i32
  }
  func.func @transform_4(%arg0: i32) -> (i32, i32) {
    %c0_i32 = arith.constant 0 : i32
    %c0_i32_0 = arith.constant 0 : i32
    %c0_i32_1 = arith.constant 0 : i32
    return %c0_i32, %c0_i32_0 : i32, i32
  }
  func.func @transform_5(%arg0: i32) -> (i32, i32) {
    %c0_i32 = arith.constant 0 : i32
    %c0_i32_0 = arith.constant 0 : i32
    %c0_i32_1 = arith.constant 0 : i32
    return %c0_i32, %c0_i32_0 : i32, i32
  }
  func.func @transform_6(%arg0: i32) -> (i32, i32) {
    %c0_i32 = arith.constant 0 : i32
    %c0_i32_0 = arith.constant 0 : i32
    %c0_i32_1 = arith.constant 0 : i32
    return %c0_i32, %c0_i32_0 : i32, i32
  }
  func.func @transform_7(%arg0: i32) -> (i32, i32) {
    %c0_i32 = arith.constant 0 : i32
    %c0_i32_0 = arith.constant 0 : i32
    %c0_i32_1 = arith.constant 0 : i32
    return %c0_i32, %c0_i32_0 : i32, i32
  }
  func.func @transform_8(%arg0: i32) -> (i32, i32) {
    %c0_i32 = arith.constant 0 : i32
    %c0_i32_0 = arith.constant 0 : i32
    return %arg0, %c0_i32 : i32, i32
  }
}

</mosaic_0001>

<llo_original>
// kernel: gemm_groupnorm_swish_multiply_swish.1
$region0: #{gemm_groupnorm_swish_multiply_swish.1}
  #allocation0 [shape = 'u32[]', space=smem, size = 0x4, offset = 0x4, fixed_abs, tag = 'smem constant byte address 0x4 - core index']
  #allocation1 [shape = 'u32[144,128]{1,0:T(1,128)}', space=vmem, size = 0x12000, scoped, tag = 'internal scratch']
  %s0 = inlined_call_operand.hbm [shape: f32[128,512], index: 0, kind: input, shape index: {}]
  %s1 = inlined_call_operand.hbm [shape: bf16[512,1024], index: 1, kind: input, shape index: {}]
  %s2 = inlined_call_operand.hbm [shape: f32[1,1024], index: 2, kind: input, shape index: {}]
  %s3 = inlined_call_operand.vmem [shape: f32[1,1024], index: 3, kind: input, shape index: {}]
  %s4 = inlined_call_operand.hbm [shape: f32[1,1024], index: 4, kind: input, shape index: {}]
  %s5 = inlined_call_operand.vmem [shape: f32[1,1024], index: 5, kind: input, shape index: {}]
  %s6 = inlined_call_operand.hbm [shape: bf16[1024,128], index: 6, kind: input, shape index: {}]
  %s7 = inlined_call_operand.hbm [shape: bf16[128,1024], index: 7, kind: input, shape index: {}]
  %s8 = inlined_call_operand.hbm [shape: f32[128,1024], index: 8, kind: output, shape index: {}]
  %s9 = sld [smem:[#allocation0]]
  $region89: #{gemm_groupnorm_swish_multiply_swish.1} parent=0
    _
  %s11 = ssub.s32 1, %s9
  %s12 = scalar_select 0, %s11, %s9
  $region1: #{gemm_groupnorm_swish_multiply_swish.1} parent=0
    #allocation2 [shape = 'u8[131072]{0}', space=vmem, size = 0x20000, scoped, tag = 'input window, operand 0']
    #allocation3 [shape = 's32[2]{0}', space=sflag, size = 0x8, scoped, tag = 'scoped memory for gemm_groupnorm_swish_multiply_swish.1']
    #allocation4 [shape = 's32[2]{0}', space=sflag, size = 0x8, scoped, tag = 'scoped memory for gemm_groupnorm_swish_multiply_swish.1']
    #allocation5 [shape = 'u8[1048576]{0}', space=vmem, size = 0x100000, scoped, tag = 'input window, operand 1, single buffered']
    #allocation6 [shape = 's32[1]{0}', space=sflag, size = 0x4, scoped, tag = 'scoped memory for gemm_groupnorm_swish_multiply_swish.1']
    #allocation7 [shape = 'u8[4096]{0}', space=vmem, size = 0x1000, scoped, tag = 'input window, operand 2, single buffered']
    #allocation8 [shape = 'u8[4096]{0}', space=vmem, size = 0x1000, scoped, tag = 'input window, operand 4, single buffered']
    #allocation9 [shape = 's32[1]{0}', space=sflag, size = 0x4, scoped, tag = 'scoped memory for gemm_groupnorm_swish_multiply_swish.1']
    #allocation10 [shape = 'u8[262144]{0}', space=vmem, size = 0x40000, scoped, tag = 'input window, operand 6, single buffered']
    #allocation11 [shape = 'u8[262144]{0}', space=vmem, size = 0x40000, scoped, tag = 'input window, operand 7, single buffered']
    #allocation12 [shape = 's32[1]{0}', space=sflag, size = 0x4, scoped, tag = 'scoped memory for gemm_groupnorm_swish_multiply_swish.1']
    #allocation13 [shape = 'u8[262144]{0}', space=vmem, size = 0x40000, scoped, tag = 'output window, operand 0']
    %13 = vsyncpa [#allocation3], 0
    %s14 = scalar_lea.sflag [#allocation3], 1
    %15 = vsyncpa %s14, 0
    %16 = vsyncpa [#allocation6], 0
    %17 = vsyncpa [#allocation9], 0
    %18 = vsyncpa [#allocation12], 0
    %19 = vsyncpa [#allocation4], 0
    %s20 = scalar_lea.sflag [#allocation4], 1
    %21 = vsyncpa %s20, 0
    loop: start=0, step=1, limit=6
    $region2: #{gemm_groupnorm_swish_multiply_swish.1} parent=1 // loop_pre_header
      _
    $region3: #{gemm_groupnorm_swish_multiply_swish.1} parent=1 // loop_header
      %s23 = sphi 0, %s27
      %p24 = scmp.ge.s32.totalorder %s23, 6
      %s33 = sphi 0, %s35
      %s36 = sphi 0, %s33
      %s37 = sphi 0, %s36
      %s53 = sphi 0, %s37
      %s57 = sphi 0, %s57
      %s59 = sphi 0, %s57
      %s60 = sphi 0, %s59
      %s74 = sphi 0, %s60
      %s78 = sphi 0, %s78
      %s80 = sphi 0, %s78
      %s81 = sphi 0, %s80
      %s95 = sphi 0, %s81
      %s99 = sphi 0, %s99
      %s101 = sphi 0, %s99
      %s102 = sphi 0, %s101
      %s116 = sphi 0, %s102
      %s120 = sphi 0, %s120
      %s122 = sphi 0, %s120
      %s123 = sphi 0, %s122
      %s137 = sphi 0, %s123
      %s141 = sphi 0, %s141
      %s143 = sphi 0, %s141
      %s144 = sphi 0, %s143
      %s158 = sphi 0, %s144
      %s162 = sphi 0, %s162
      %s164 = sphi 0, %s162
      %s165 = sphi 0, %s164
      %s179 = sphi 0, %s165
      %s183 = sphi 0, %s183
      %s185 = sphi 0, %s183
      %s186 = sphi 0, %s185
      %s200 = sphi 0, %s186
      %s206 = sphi 0, %s208
      %s209 = sphi 0, %s206
      %s210 = sphi 0, %s209
      %s226 = sphi 0, %s210
    $region4: #{gemm_groupnorm_swish_multiply_swish.1} parent=1 // loop_header_branch
      %26 = sbr.rel (%p24) target = $region8
    $region5: #{gemm_groupnorm_swish_multiply_swish.1} parent=1 // loop_body
      %s28 = ssub.s32 %s23, 1
      %s29 = ssub.s32 %s23, 2
      %s30 = sadd.s32 %s23, 1
      %s31 = ssub.s32 %s23, %s30
      %p32 = scmp.eq.s32.totalorder %s31, 0
      %s34 = sadd.s32 %s33, 1
      %s35 = scalar_select %p32, %s33, %s34
      %p38 = pneg %p32
      %p39 = scmp.eq.s32.totalorder %s23, 3
      %p40 = por %p38, %p39
      %p41 = scmp.ne.s32.totalorder %s33, %s36
      %p42 = scmp.eq.s32.totalorder %s23, 0
      %p43 = por %p41, %p42
      %p44 = scmp.ne.s32.totalorder %s33, %s36
      %p45 = scmp.eq.s32.totalorder %s28, 3
      %p46 = por %p44, %p45
      %p47 = scmp.ne.s32.totalorder %s36, %s37
      %p48 = scmp.eq.s32.totalorder %s28, 0
      %p49 = por %p47, %p48
      %p50 = scmp.ne.s32.totalorder %s36, %s37
      %p51 = scmp.eq.s32.totalorder %s29, 3
      %p52 = por %p50, %p51
      %p54 = scmp.ne.s32.totalorder %s37, %s53
      %p55 = scmp.eq.s32.totalorder %s29, 0
      %p56 = por %p54, %p55
      %s58 = sadd.s32 %s57, 1
      %p61 = scmp.eq.s32.totalorder %s23, 3
      %p62 = scmp.ne.s32.totalorder %s57, %s59
      %p63 = scmp.eq.s32.totalorder %s23, 0
      %p64 = por %p62, %p63
      %p65 = scmp.ne.s32.totalorder %s57, %s59
      %p66 = scmp.eq.s32.totalorder %s28, 3
      %p67 = por %p65, %p66
      %p68 = scmp.ne.s32.totalorder %s59, %s60
      %p69 = scmp.eq.s32.totalorder %s28, 0
      %p70 = por %p68, %p69
      %p71 = scmp.ne.s32.totalorder %s59, %s60
      %p72 = scmp.eq.s32.totalorder %s29, 3
      %p73 = por %p71, %p72
      %p75 = scmp.ne.s32.totalorder %s60, %s74
      %p76 = scmp.eq.s32.totalorder %s29, 0
      %p77 = por %p75, %p76
      %s79 = sadd.s32 %s78, 1
      %p82 = scmp.eq.s32.totalorder %s23, 3
      %p83 = scmp.ne.s32.totalorder %s78, %s80
      %p84 = scmp.eq.s32.totalorder %s23, 0
      %p85 = por %p83, %p84
      %p86 = scmp.ne.s32.totalorder %s78, %s80
      %p87 = scmp.eq.s32.totalorder %s28, 3
      %p88 = por %p86, %p87
      %p89 = scmp.ne.s32.totalorder %s80, %s81
      %p90 = scmp.eq.s32.totalorder %s28, 0
      %p91 = por %p89, %p90
      %p92 = scmp.ne.s32.totalorder %s80, %s81
      %p93 = scmp.eq.s32.totalorder %s29, 3
      %p94 = por %p92, %p93
      %p96 = scmp.ne.s32.totalorder %s81, %s95
      %p97 = scmp.eq.s32.totalorder %s29, 0
      %p98 = por %p96, %p97
      %s100 = sadd.s32 %s99, 1
      %p103 = scmp.eq.s32.totalorder %s23, 3
      %p104 = scmp.ne.s32.totalorder %s99, %s101
      %p105 = scmp.eq.s32.totalorder %s23, 0
      %p106 = por %p104, %p105
      %p107 = scmp.ne.s32.totalorder %s99, %s101
      %p108 = scmp.eq.s32.totalorder %s28, 3
      %p109 = por %p107, %p108
      %p110 = scmp.ne.s32.totalorder %s101, %s102
      %p111 = scmp.eq.s32.totalorder %s28, 0
      %p112 = por %p110, %p111
      %p113 = scmp.ne.s32.totalorder %s101, %s102
      %p114 = scmp.eq.s32.totalorder %s29, 3
      %p115 = por %p113, %p114
      %p117 = scmp.ne.s32.totalorder %s102, %s116
      %p118 = scmp.eq.s32.totalorder %s29, 0
      %p119 = por %p117, %p118
      %s121 = sadd.s32 %s120, 1
      %p124 = scmp.eq.s32.totalorder %s23, 3
      %p125 = scmp.ne.s32.totalorder %s120, %s122
      %p126 = scmp.eq.s32.totalorder %s23, 0
      %p127 = por %p125, %p126
      %p128 = scmp.ne.s32.totalorder %s120, %s122
      %p129 = scmp.eq.s32.totalorder %s28, 3
      %p130 = por %p128, %p129
      %p131 = scmp.ne.s32.totalorder %s122, %s123
      %p132 = scmp.eq.s32.totalorder %s28, 0
      %p133 = por %p131, %p132
      %p134 = scmp.ne.s32.totalorder %s122, %s123
      %p135 = scmp.eq.s32.totalorder %s29, 3
      %p136 = por %p134, %p135
      %p138 = scmp.ne.s32.totalorder %s123, %s137
      %p139 = scmp.eq.s32.totalorder %s29, 0
      %p140 = por %p138, %p139
      %s142 = sadd.s32 %s141, 1
      %p145 = scmp.eq.s32.totalorder %s23, 3
      %p146 = scmp.ne.s32.totalorder %s141, %s143
      %p147 = scmp.eq.s32.totalorder %s23, 0
      %p148 = por %p146, %p147
      %p149 = scmp.ne.s32.totalorder %s141, %s143
      %p150 = scmp.eq.s32.totalorder %s28, 3
      %p151 = por %p149, %p150
      %p152 = scmp.ne.s32.totalorder %s143, %s144
      %p153 = scmp.eq.s32.totalorder %s28, 0
      %p154 = por %p152, %p153
      %p155 = scmp.ne.s32.totalorder %s143, %s144
      %p156 = scmp.eq.s32.totalorder %s29, 3
      %p157 = por %p155, %p156
      %p159 = scmp.ne.s32.totalorder %s144, %s158
      %p160 = scmp.eq.s32.totalorder %s29, 0
      %p161 = por %p159, %p160
      %s163 = sadd.s32 %s162, 1
      %p166 = scmp.eq.s32.totalorder %s23, 3
      %p167 = scmp.ne.s32.totalorder %s162, %s164
      %p168 = scmp.eq.s32.totalorder %s23, 0
      %p169 = por %p167, %p168
      %p170 = scmp.ne.s32.totalorder %s162, %s164
      %p171 = scmp.eq.s32.totalorder %s28, 3
      %p172 = por %p170, %p171
      %p173 = scmp.ne.s32.totalorder %s164, %s165
      %p174 = scmp.eq.s32.totalorder %s28, 0
      %p175 = por %p173, %p174
      %p176 = scmp.ne.s32.totalorder %s164, %s165
      %p177 = scmp.eq.s32.totalorder %s29, 3
      %p178 = por %p176, %p177
      %p180 = scmp.ne.s32.totalorder %s165, %s179
      %p181 = scmp.eq.s32.totalorder %s29, 0
      %p182 = por %p180, %p181
      %s184 = sadd.s32 %s183, 1
      %p187 = scmp.eq.s32.totalorder %s23, 3
      %p188 = scmp.ne.s32.totalorder %s183, %s185
      %p189 = scmp.eq.s32.totalorder %s23, 0
      %p190 = por %p188, %p189
      %p191 = scmp.ne.s32.totalorder %s183, %s185
      %p192 = scmp.eq.s32.totalorder %s28, 3
      %p193 = por %p191, %p192
      %p194 = scmp.ne.s32.totalorder %s185, %s186
      %p195 = scmp.eq.s32.totalorder %s28, 0
      %p196 = por %p194, %p195
      %p197 = scmp.ne.s32.totalorder %s185, %s186
      %p198 = scmp.eq.s32.totalorder %s29, 3
      %p199 = por %p197, %p198
      %p201 = scmp.ne.s32.totalorder %s186, %s200
      %p202 = scmp.eq.s32.totalorder %s29, 0
      %p203 = por %p201, %p202
      %s204 = ssub.s32 %s23, %s30
      %p205 = scmp.eq.s32.totalorder %s204, 0
      %s207 = sadd.s32 %s206, 1
      %s208 = scalar_select %p205, %s206, %s207
      %p211 = pneg %p205
      %p212 = scmp.eq.s32.totalorder %s23, 3
      %p213 = por %p211, %p212
      %p214 = scmp.ne.s32.totalorder %s206, %s209
      %p215 = scmp.eq.s32.totalorder %s23, 0
      %p216 = por %p214, %p215
      %p217 = scmp.ne.s32.totalorder %s206, %s209
      %p218 = scmp.eq.s32.totalorder %s28, 3
      %p219 = por %p217, %p218
      %p220 = scmp.ne.s32.totalorder %s209, %s210
      %p221 = scmp.eq.s32.totalorder %s28, 0
      %p222 = por %p220, %p221
      %p223 = scmp.ne.s32.totalorder %s209, %s210
      %p224 = scmp.eq.s32.totalorder %s29, 3
      %p225 = por %p223, %p224
      %p227 = scmp.ne.s32.totalorder %s210, %s226
      %p228 = scmp.eq.s32.totalorder %s29, 0
      %p229 = por %p227, %p228
      %p230 = scmp.le.s32.totalorder 1, %s23
      %p231 = scmp.lt.s32.totalorder %s23, 5
      %p232 = pnand %p230, %p231
      %p233 = pneg %p232
      // Predicated region
      $region9: #{gemm_groupnorm_swish_multiply_swish.1} parent=5 // pred_check
        _
      $region10: #{gemm_groupnorm_swish_multiply_swish.1} parent=5 // pred_check_branch
        %235 = sbr.rel (%p232) target = $region12
      $region11: #{gemm_groupnorm_swish_multiply_swish.1} parent=5 // pred_region
        %s236 = ssub.s32 %s23, 1
        // Predicated region
        $region13: #{gemm_groupnorm_swish_multiply_swish.1} parent=11 // pred_check
          %p237 = pneg %p70
        $region14: #{gemm_groupnorm_swish_multiply_swish.1} parent=11 // pred_check_branch
          %239 = sbr.rel (%p237) target = $region16
        $region15: #{gemm_groupnorm_swish_multiply_swish.1} parent=11 // pred_region
          %s241 = ssub.s32 32768, 32768
          %242 = vsyncadd [#allocation6], %s241
          %s243 = sshll.u32 [#allocation5], 4
          %s244 = int_to_ptr.vmem [resolvable:$true] %s243
          %249 = dma.hbm_to_vmem [thread:$0]  %s1, 32768, %s244, [#allocation6], 512, 512, 32
        $region16: #{gemm_groupnorm_swish_multiply_swish.1} parent=11 // pred_fallthru
          _
        // Predicated region
        $region17: #{gemm_groupnorm_swish_multiply_swish.1} parent=11 // pred_check
          %p250 = pneg %p91
        $region18: #{gemm_groupnorm_swish_multiply_swish.1} parent=11 // pred_check_branch
          %252 = sbr.rel (%p250) target = $region20
        $region19: #{gemm_groupnorm_swish_multiply_swish.1} parent=11 // pred_region
          %s254 = ssub.s32 128, 128
          %255 = vsyncadd [#allocation6], %s254
          %s257 = sshll.u32 [#allocation7], 4
          %s258 = int_to_ptr.vmem [resolvable:$true] %s257
          %260 = dma.hbm_to_vmem [thread:$0]  %s2, 128, %s258, [#allocation6]
        $region20: #{gemm_groupnorm_swish_multiply_swish.1} parent=11 // pred_fallthru
          _
        // Predicated region
        $region21: #{gemm_groupnorm_swish_multiply_swish.1} parent=11 // pred_check
          %p261 = pneg %p112
        $region22: #{gemm_groupnorm_swish_multiply_swish.1} parent=11 // pred_check_branch
          %263 = sbr.rel (%p261) target = $region24
        $region23: #{gemm_groupnorm_swish_multiply_swish.1} parent=11 // pred_region
          _
        $region24: #{gemm_groupnorm_swish_multiply_swish.1} parent=11 // pred_fallthru
          _
        // Predicated region
        $region25: #{gemm_groupnorm_swish_multiply_swish.1} parent=11 // pred_check
          %p264 = pneg %p133
        $region26: #{gemm_groupnorm_swish_multiply_swish.1} parent=11 // pred_check_branch
          %266 = sbr.rel (%p264) target = $region28
        $region27: #{gemm_groupnorm_swish_multiply_swish.1} parent=11 // pred_region
          %s268 = ssub.s32 128, 128
          %269 = vsyncadd [#allocation9], %s268
          %s271 = sshll.u32 [#allocation8], 4
          %s272 = int_to_ptr.vmem [resolvable:$true] %s271
          %274 = dma.hbm_to_vmem [thread:$0]  %s4, 128, %s272, [#allocation9]
        $region28: #{gemm_groupnorm_swish_multiply_swish.1} parent=11 // pred_fallthru
          _
        // Predicated region
        $region29: #{gemm_groupnorm_swish_multiply_swish.1} parent=11 // pred_check
          %p275 = pneg %p154
        $region30: #{gemm_groupnorm_swish_multiply_swish.1} parent=11 // pred_check_branch
          %277 = sbr.rel (%p275) target = $region32
        $region31: #{gemm_groupnorm_swish_multiply_swish.1} parent=11 // pred_region
          _
        $region32: #{gemm_groupnorm_swish_multiply_swish.1} parent=11 // pred_fallthru
          _
        // Predicated region
        $region33: #{gemm_groupnorm_swish_multiply_swish.1} parent=11 // pred_check
          %p278 = pneg %p175
        $region34: #{gemm_groupnorm_swish_multiply_swish.1} parent=11 // pred_check_branch
          %280 = sbr.rel (%p278) target = $region36
        $region35: #{gemm_groupnorm_swish_multiply_swish.1} parent=11 // pred_region
          %s282 = ssub.s32 8192, 8192
          %283 = vsyncadd [#allocation9], %s282
          %s284 = sshll.u32 [#allocation10], 4
          %s285 = int_to_ptr.vmem [resolvable:$true] %s284
          %290 = dma.hbm_to_vmem [thread:$0]  %s6, 8192, %s285, [#allocation9], 64, 64, 4
        $region36: #{gemm_groupnorm_swish_multiply_swish.1} parent=11 // pred_fallthru
          _
        // Predicated region
        $region37: #{gemm_groupnorm_swish_multiply_swish.1} parent=11 // pred_check
          %p291 = pneg %p196
        $region38: #{gemm_groupnorm_swish_multiply_swish.1} parent=11 // pred_check_branch
          %293 = sbr.rel (%p291) target = $region40
        $region39: #{gemm_groupnorm_swish_multiply_swish.1} parent=11 // pred_region
          %s295 = ssub.s32 8192, 8192
          %296 = vsyncadd [#allocation12], %s295
          %s297 = sshll.u32 [#allocation11], 4
          %s298 = int_to_ptr.vmem [resolvable:$true] %s297
          %303 = dma.hbm_to_vmem [thread:$0]  %s7, 8192, %s298, [#allocation12], 512, 512, 32
        $region40: #{gemm_groupnorm_swish_multiply_swish.1} parent=11 // pred_fallthru
          _
      $region12: #{gemm_groupnorm_swish_multiply_swish.1} parent=5 // pred_fallthru
        _
      %p304 = scmp.lt.s32.totalorder %s23, 4
      // Predicated region
      $region41: #{gemm_groupnorm_swish_multiply_swish.1} parent=5 // pred_check
        %p305 = pneg %p304
      $region42: #{gemm_groupnorm_swish_multiply_swish.1} parent=5 // pred_check_branch
        %307 = sbr.rel (%p305) target = $region44
      $region43: #{gemm_groupnorm_swish_multiply_swish.1} parent=5 // pred_region
        // Predicated region
        $region45: #{gemm_groupnorm_swish_multiply_swish.1} parent=43 // pred_check
          %p308 = pneg %p43
        $region46: #{gemm_groupnorm_swish_multiply_swish.1} parent=43 // pred_check_branch
          %310 = sbr.rel (%p308) target = $region48
        $region47: #{gemm_groupnorm_swish_multiply_swish.1} parent=43 // pred_region
          %s311 = sand.u32 %s33, 1
          %s312 = scalar_lea.sflag [#allocation3], %s311
          %s313 = sand.u32 %s33, 1
          %s314 = smul.addr %s313, 128
          %s315 = scalar_lea.vmem [#allocation2], %s314
          %s316 = smul.u32 4, %s23
          %s318 = ssub.s32 2048, 2048
          %319 = vsyncadd %s312, %s318
          %s320 = smul.addr %s316, 4
          %s321 = smul.addr %s320, 128
          %s322 = scalar_lea.hbm %s0, %s321
          %s323 = sshll.u32 %s315, 4
          %s324 = int_to_ptr.vmem [resolvable:$true] %s323
          %329 = dma.hbm_to_vmem [thread:$0]  %s322, 2048, %s324, %s312, 512, 512, 32
        $region48: #{gemm_groupnorm_swish_multiply_swish.1} parent=43 // pred_fallthru
          _
      $region44: #{gemm_groupnorm_swish_multiply_swish.1} parent=5 // pred_fallthru
        _
      %p330 = scmp.le.s32.totalorder 1, %s23
      %p331 = scmp.lt.s32.totalorder %s23, 5
      %p332 = pnand %p330, %p331
      %p333 = pneg %p332
      // Predicated region
      $region49: #{gemm_groupnorm_swish_multiply_swish.1} parent=5 // pred_check
        _
      $region50: #{gemm_groupnorm_swish_multiply_swish.1} parent=5 // pred_check_branch
        %335 = sbr.rel (%p332) target = $region52
      $region51: #{gemm_groupnorm_swish_multiply_swish.1} parent=5 // pred_region
        %s336 = ssub.s32 %s23, 1
        %s337 = sand.u32 %s36, 1
        %s338 = scalar_lea.sflag [#allocation3], %s337
        %s339 = sand.u32 %s36, 1
        %s340 = smul.addr %s339, 128
        %s341 = scalar_lea.vmem [#allocation2], %s340
        // Predicated region
        $region53: #{gemm_groupnorm_swish_multiply_swish.1} parent=51 // pred_check
          %p342 = pneg %p49
        $region54: #{gemm_groupnorm_swish_multiply_swish.1} parent=51 // pred_check_branch
          %344 = sbr.rel (%p342) target = $region56
        $region55: #{gemm_groupnorm_swish_multiply_swish.1} parent=51 // pred_region
          %345 = dma.done %s338, 2048
        $region56: #{gemm_groupnorm_swish_multiply_swish.1} parent=51 // pred_fallthru
          _
        // Predicated region
        $region57: #{gemm_groupnorm_swish_multiply_swish.1} parent=51 // pred_check
          %p346 = pneg %p70
        $region58: #{gemm_groupnorm_swish_multiply_swish.1} parent=51 // pred_check_branch
          %348 = sbr.rel (%p346) target = $region60
        $region59: #{gemm_groupnorm_swish_multiply_swish.1} parent=51 // pred_region
          %349 = dma.done [#allocation6], 32768
        $region60: #{gemm_groupnorm_swish_multiply_swish.1} parent=51 // pred_fallthru
          _
        // Predicated region
        $region61: #{gemm_groupnorm_swish_multiply_swish.1} parent=51 // pred_check
          %p350 = pneg %p91
        $region62: #{gemm_groupnorm_swish_multiply_swish.1} parent=51 // pred_check_branch
          %352 = sbr.rel (%p350) target = $region64
        $region63: #{gemm_groupnorm_swish_multiply_swish.1} parent=51 // pred_region
          %353 = dma.done [#allocation6], 128
        $region64: #{gemm_groupnorm_swish_multiply_swish.1} parent=51 // pred_fallthru
          _
        // Predicated region
        $region65: #{gemm_groupnorm_swish_multiply_swish.1} parent=51 // pred_check
          %p354 = pneg %p133
        $region66: #{gemm_groupnorm_swish_multiply_swish.1} parent=51 // pred_check_branch
          %356 = sbr.rel (%p354) target = $region68
        $region67: #{gemm_groupnorm_swish_multiply_swish.1} parent=51 // pred_region
          %357 = dma.done [#allocation9], 128
        $region68: #{gemm_groupnorm_swish_multiply_swish.1} parent=51 // pred_fallthru
          _
        // Predicated region
        $region69: #{gemm_groupnorm_swish_multiply_swish.1} parent=51 // pred_check
          %p358 = pneg %p175
        $region70: #{gemm_groupnorm_swish_multiply_swish.1} parent=51 // pred_check_branch
          %360 = sbr.rel (%p358) target = $region72
        $region71: #{gemm_groupnorm_swish_multiply_swish.1} parent=51 // pred_region
          %361 = dma.done [#allocation9], 8192
        $region72: #{gemm_groupnorm_swish_multiply_swish.1} parent=51 // pred_fallthru
          _
        // Predicated region
        $region73: #{gemm_groupnorm_swish_multiply_swish.1} parent=51 // pred_check
          %p362 = pneg %p196
        $region74: #{gemm_groupnorm_swish_multiply_swish.1} parent=51 // pred_check_branch
          %364 = sbr.rel (%p362) target = $region76
        $region75: #{gemm_groupnorm_swish_multiply_swish.1} parent=51 // pred_region
          %365 = dma.done [#allocation12], 8192
        $region76: #{gemm_groupnorm_swish_multiply_swish.1} parent=51 // pred_fallthru
          _
        %s366 = sand.u32 %s36, 1
        %s367 = scalar_lea.sflag [#allocation3], %s366
        %s368 = sand.u32 %s36, 1
        %s369 = smul.addr %s368, 128
        %s370 = scalar_lea.vmem [#allocation2], %s369
        %p371 = pneg %p49
        %p372 = pneg %p46
        %p373 = pneg %p70
        %p374 = pneg %p67
        %p375 = pneg %p91
        %p376 = pneg %p88
        %p377 = pneg %p112
        %p378 = pneg %p109
        %p379 = pneg %p133
        %p380 = pneg %p130
        %p381 = pneg %p154
        %p382 = pneg %p151
        %p383 = pneg %p175
        %p384 = pneg %p172
        %p385 = pneg %p196
        %p386 = pneg %p193
        %p387 = pneg %p222
        %p388 = pneg %p219
        %s389 = sand.u32 %s209, 1
        %s390 = scalar_lea.sflag [#allocation4], %s389
        %s391 = sand.u32 %s209, 1
        %s392 = smul.addr %s391, 256
        %s393 = scalar_lea.vmem [#allocation13], %s392
        %s394 = smul.u32 4, %s28
        %s395 = smul.u32 4, %s28
        %v397 = vld [vmem:[%s341] sm:$0xff]
        %v398 = vld [vmem:[%s341 + $0x8] sm:$0xff]
        %v399 = vld [vmem:[%s341 + $0x10] sm:$0xff]
        %v400 = vld [vmem:[%s341 + $0x18] sm:$0xff]
        %v401 = vld [vmem:[%s341 + $0x20] sm:$0xff]
        %v402 = vld [vmem:[%s341 + $0x28] sm:$0xff]
        %v403 = vld [vmem:[%s341 + $0x30] sm:$0xff]
        %v404 = vld [vmem:[%s341 + $0x38] sm:$0xff]
        %v405 = vld [vmem:[%s341 + $0x40] sm:$0xff]
        %v406 = vld [vmem:[%s341 + $0x48] sm:$0xff]
        %v407 = vld [vmem:[%s341 + $0x50] sm:$0xff]
        %v408 = vld [vmem:[%s341 + $0x58] sm:$0xff]
        %v409 = vld [vmem:[%s341 + $0x60] sm:$0xff]
        %v410 = vld [vmem:[%s341 + $0x68] sm:$0xff]
        %v411 = vld [vmem:[%s341 + $0x70] sm:$0xff]
        %v412 = vld [vmem:[%s341 + $0x78] sm:$0xff]
        %v413 = vpack.c.bf16 %v401, %v397
        %v414 = vpack.c.bf16 %v402, %v398
        %v415 = vpack.c.bf16 %v403, %v399
        %v416 = vpack.c.bf16 %v404, %v400
        %v417 = vpack.c.bf16 %v409, %v405
        %v418 = vpack.c.bf16 %v410, %v406
        %v419 = vpack.c.bf16 %v411, %v407
        %v420 = vpack.c.bf16 %v412, %v408
        %v421 = vld [vmem:[#allocation5] sm:$0xff]
        %v422 = vld [vmem:[#allocation5 + $0x8] sm:$0xff]
        %v423 = vld [vmem:[#allocation5 + $0x10] sm:$0xff]
        %v424 = vld [vmem:[#allocation5 + $0x18] sm:$0xff]
        %v425 = vld [vmem:[#allocation5 + $0x20] sm:$0xff]
        %v426 = vld [vmem:[#allocation5 + $0x28] sm:$0xff]
        %v427 = vld [vmem:[#allocation5 + $0x30] sm:$0xff]
        %v428 = vld [vmem:[#allocation5 + $0x38] sm:$0xff]
        %v429 = vld [vmem:[#allocation5 + $0x40] sm:$0xff]
        %v430 = vld [vmem:[#allocation5 + $0x48] sm:$0xff]
        %v431 = vld [vmem:[#allocation5 + $0x50] sm:$0xff]
        %v432 = vld [vmem:[#allocation5 + $0x58] sm:$0xff]
        %v433 = vld [vmem:[#allocation5 + $0x60] sm:$0xff]
        %v434 = vld [vmem:[#allocation5 + $0x68] sm:$0xff]
        %v435 = vld [vmem:[#allocation5 + $0x70] sm:$0xff]
        %v436 = vld [vmem:[#allocation5 + $0x78] sm:$0xff]
        %v437 = vld [vmem:[#allocation5 + $0x80] sm:$0xff]
        %v438 = vld [vmem:[#allocation5 + $0x88] sm:$0xff]
        %v439 = vld [vmem:[#allocation5 + $0x90] sm:$0xff]
        %v440 = vld [vmem:[#allocation5 + $0x98] sm:$0xff]
        %v441 = vld [vmem:[#allocation5 + $0xa0] sm:$0xff]
        %v442 = vld [vmem:[#allocation5 + $0xa8] sm:$0xff]
        %v443 = vld [vmem:[#allocation5 + $0xb0] sm:$0xff]
        %v444 = vld [vmem:[#allocation5 + $0xb8] sm:$0xff]
        %v445 = vld [vmem:[#allocation5 + $0xc0] sm:$0xff]
        %v446 = vld [vmem:[#allocation5 + $0xc8] sm:$0xff]
        %v447 = vld [vmem:[#allocation5 + $0xd0] sm:$0xff]
        %v448 = vld [vmem:[#allocation5 + $0xd8] sm:$0xff]
        %v449 = vld [vmem:[#allocation5 + $0xe0] sm:$0xff]
        %v450 = vld [vmem:[#allocation5 + $0xe8] sm:$0xff]
        %v451 = vld [vmem:[#allocation5 + $0xf0] sm:$0xff]
        %v452 = vld [vmem:[#allocation5 + $0xf8] sm:$0xff]
        %v453 = vld [vmem:[#allocation5 + $0x100] sm:$0xff]
        %v454 = vld [vmem:[#allocation5 + $0x108] sm:$0xff]
        %v455 = vld [vmem:[#allocation5 + $0x110] sm:$0xff]
        %v456 = vld [vmem:[#allocation5 + $0x118] sm:$0xff]
        %v457 = vld [vmem:[#allocation5 + $0x120] sm:$0xff]
        %v458 = vld [vmem:[#allocation5 + $0x128] sm:$0xff]
        %v459 = vld [vmem:[#allocation5 + $0x130] sm:$0xff]
        %v460 = vld [vmem:[#allocation5 + $0x138] sm:$0xff]
        %v461 = vld [vmem:[#allocation5 + $0x140] sm:$0xff]
        %v462 = vld [vmem:[#allocation5 + $0x148] sm:$0xff]
        %v463 = vld [vmem:[#allocation5 + $0x150] sm:$0xff]
        %v464 = vld [vmem:[#allocation5 + $0x158] sm:$0xff]
        %v465 = vld [vmem:[#allocation5 + $0x160] sm:$0xff]
        %v466 = vld [vmem:[#allocation5 + $0x168] sm:$0xff]
        %v467 = vld [vmem:[#allocation5 + $0x170] sm:$0xff]
        %v468 = vld [vmem:[#allocation5 + $0x178] sm:$0xff]
        %v469 = vld [vmem:[#allocation5 + $0x180] sm:$0xff]
        %v470 = vld [vmem:[#allocation5 + $0x188] sm:$0xff]
        %v471 = vld [vmem:[#allocation5 + $0x190] sm:$0xff]
        %v472 = vld [vmem:[#allocation5 + $0x198] sm:$0xff]
        %v473 = vld [vmem:[#allocation5 + $0x1a0] sm:$0xff]
        %v474 = vld [vmem:[#allocation5 + $0x1a8] sm:$0xff]
        %v475 = vld [vmem:[#allocation5 + $0x1b0] sm:$0xff]
        %v476 = vld [vmem:[#allocation5 + $0x1b8] sm:$0xff]
        %v477 = vld [vmem:[#allocation5 + $0x1c0] sm:$0xff]
        %v478 = vld [vmem:[#allocation5 + $0x1c8] sm:$0xff]
        %v479 = vld [vmem:[#allocation5 + $0x1d0] sm:$0xff]
        %v480 = vld [vmem:[#allocation5 + $0x1d8] sm:$0xff]
        %v481 = vld [vmem:[#allocation5 + $0x1e0] sm:$0xff]
        %v482 = vld [vmem:[#allocation5 + $0x1e8] sm:$0xff]
        %v483 = vld [vmem:[#allocation5 + $0x1f0] sm:$0xff]
        %v484 = vld [vmem:[#allocation5 + $0x1f8] sm:$0xff]
        %v485 = vld [vmem:[#allocation5 + $0x200] sm:$0xff]
        %v486 = vld [vmem:[#allocation5 + $0x208] sm:$0xff]
        %v487 = vld [vmem:[#allocation5 + $0x210] sm:$0xff]
        %v488 = vld [vmem:[#allocation5 + $0x218] sm:$0xff]
        %v489 = vld [vmem:[#allocation5 + $0x220] sm:$0xff]
        %v490 = vld [vmem:[#allocation5 + $0x228] sm:$0xff]
        %v491 = vld [vmem:[#allocation5 + $0x230] sm:$0xff]
        %v492 = vld [vmem:[#allocation5 + $0x238] sm:$0xff]
        %v493 = vld [vmem:[#allocation5 + $0x240] sm:$0xff]
        %v494 = vld [vmem:[#allocation5 + $0x248] sm:$0xff]
        %v495 = vld [vmem:[#allocation5 + $0x250] sm:$0xff]
        %v496 = vld [vmem:[#allocation5 + $0x258] sm:$0xff]
        %v497 = vld [vmem:[#allocation5 + $0x260] sm:$0xff]
        %v498 = vld [vmem:[#allocation5 + $0x268] sm:$0xff]
        %v499 = vld [vmem:[#allocation5 + $0x270] sm:$0xff]
        %v500 = vld [vmem:[#allocation5 + $0x278] sm:$0xff]
        %v501 = vld [vmem:[#allocation5 + $0x280] sm:$0xff]
        %v502 = vld [vmem:[#allocation5 + $0x288] sm:$0xff]
        %v503 = vld [vmem:[#allocation5 + $0x290] sm:$0xff]
        %v504 = vld [vmem:[#allocation5 + $0x298] sm:$0xff]
        %v505 = vld [vmem:[#allocation5 + $0x2a0] sm:$0xff]
        %v506 = vld [vmem:[#allocation5 + $0x2a8] sm:$0xff]
        %v507 = vld [vmem:[#allocation5 + $0x2b0] sm:$0xff]
        %v508 = vld [vmem:[#allocation5 + $0x2b8] sm:$0xff]
        %v509 = vld [vmem:[#allocation5 + $0x2c0] sm:$0xff]
        %v510 = vld [vmem:[#allocation5 + $0x2c8] sm:$0xff]
        %v511 = vld [vmem:[#allocation5 + $0x2d0] sm:$0xff]
        %v512 = vld [vmem:[#allocation5 + $0x2d8] sm:$0xff]
        %v513 = vld [vmem:[#allocation5 + $0x2e0] sm:$0xff]
        %v514 = vld [vmem:[#allocation5 + $0x2e8] sm:$0xff]
        %v515 = vld [vmem:[#allocation5 + $0x2f0] sm:$0xff]
        %v516 = vld [vmem:[#allocation5 + $0x2f8] sm:$0xff]
        %v517 = vld [vmem:[#allocation5 + $0x300] sm:$0xff]
        %v518 = vld [vmem:[#allocation5 + $0x308] sm:$0xff]
        %v519 = vld [vmem:[#allocation5 + $0x310] sm:$0xff]
        %v520 = vld [vmem:[#allocation5 + $0x318] sm:$0xff]
        %v521 = vld [vmem:[#allocation5 + $0x320] sm:$0xff]
        %v522 = vld [vmem:[#allocation5 + $0x328] sm:$0xff]
        %v523 = vld [vmem:[#allocation5 + $0x330] sm:$0xff]
        %v524 = vld [vmem:[#allocation5 + $0x338] sm:$0xff]
        %v525 = vld [vmem:[#allocation5 + $0x340] sm:$0xff]
        %v526 = vld [vmem:[#allocation5 + $0x348] sm:$0xff]
        %v527 = vld [vmem:[#allocation5 + $0x350] sm:$0xff]
        %v528 = vld [vmem:[#allocation5 + $0x358] sm:$0xff]
        %v529 = vld [vmem:[#allocation5 + $0x360] sm:$0xff]
        %v530 = vld [vmem:[#allocation5 + $0x368] sm:$0xff]
        %v531 = vld [vmem:[#allocation5 + $0x370] sm:$0xff]
        %v532 = vld [vmem:[#allocation5 + $0x378] sm:$0xff]
        %v533 = vld [vmem:[#allocation5 + $0x380] sm:$0xff]
        %v534 = vld [vmem:[#allocation5 + $0x388] sm:$0xff]
        %v535 = vld [vmem:[#allocation5 + $0x390] sm:$0xff]
        %v536 = vld [vmem:[#allocation5 + $0x398] sm:$0xff]
        %v537 = vld [vmem:[#allocation5 + $0x3a0] sm:$0xff]
        %v538 = vld [vmem:[#allocation5 + $0x3a8] sm:$0xff]
        %v539 = vld [vmem:[#allocation5 + $0x3b0] sm:$0xff]
        %v540 = vld [vmem:[#allocation5 + $0x3b8] sm:$0xff]
        %v541 = vld [vmem:[#allocation5 + $0x3c0] sm:$0xff]
        %v542 = vld [vmem:[#allocation5 + $0x3c8] sm:$0xff]
        %v543 = vld [vmem:[#allocation5 + $0x3d0] sm:$0xff]
        %v544 = vld [vmem:[#allocation5 + $0x3d8] sm:$0xff]
        %v545 = vld [vmem:[#allocation5 + $0x3e0] sm:$0xff]
        %v546 = vld [vmem:[#allocation5 + $0x3e8] sm:$0xff]
        %v547 = vld [vmem:[#allocation5 + $0x3f0] sm:$0xff]
        %v548 = vld [vmem:[#allocation5 + $0x3f8] sm:$0xff]
        %v549 = vld [vmem:[#allocation5 + $0x400] sm:$0xff]
        %v550 = vld [vmem:[#allocation5 + $0x408] sm:$0xff]
        %v551 = vld [vmem:[#allocation5 + $0x410] sm:$0xff]
        %v552 = vld [vmem:[#allocation5 + $0x418] sm:$0xff]
        %v553 = vld [vmem:[#allocation5 + $0x420] sm:$0xff]
        %v554 = vld [vmem:[#allocation5 + $0x428] sm:$0xff]
        %v555 = vld [vmem:[#allocation5 + $0x430] sm:$0xff]
        %v556 = vld [vmem:[#allocation5 + $0x438] sm:$0xff]
        %v557 = vld [vmem:[#allocation5 + $0x440] sm:$0xff]
        %v558 = vld [vmem:[#allocation5 + $0x448] sm:$0xff]
        %v559 = vld [vmem:[#allocation5 + $0x450] sm:$0xff]
        %v560 = vld [vmem:[#allocation5 + $0x458] sm:$0xff]
        %v561 = vld [vmem:[#allocation5 + $0x460] sm:$0xff]
        %v562 = vld [vmem:[#allocation5 + $0x468] sm:$0xff]
        %v563 = vld [vmem:[#allocation5 + $0x470] sm:$0xff]
        %v564 = vld [vmem:[#allocation5 + $0x478] sm:$0xff]
        %v565 = vld [vmem:[#allocation5 + $0x480] sm:$0xff]
        %v566 = vld [vmem:[#allocation5 + $0x488] sm:$0xff]
        %v567 = vld [vmem:[#allocation5 + $0x490] sm:$0xff]
        %v568 = vld [vmem:[#allocation5 + $0x498] sm:$0xff]
        %v569 = vld [vmem:[#allocation5 + $0x4a0] sm:$0xff]
        %v570 = vld [vmem:[#allocation5 + $0x4a8] sm:$0xff]
        %v571 = vld [vmem:[#allocation5 + $0x4b0] sm:$0xff]
        %v572 = vld [vmem:[#allocation5 + $0x4b8] sm:$0xff]
        %v573 = vld [vmem:[#allocation5 + $0x4c0] sm:$0xff]
        %v574 = vld [vmem:[#allocation5 + $0x4c8] sm:$0xff]
        %v575 = vld [vmem:[#allocation5 + $0x4d0] sm:$0xff]
        %v576 = vld [vmem:[#allocation5 + $0x4d8] sm:$0xff]
        %v577 = vld [vmem:[#allocation5 + $0x4e0] sm:$0xff]
        %v578 = vld [vmem:[#allocation5 + $0x4e8] sm:$0xff]
        %v579 = vld [vmem:[#allocation5 + $0x4f0] sm:$0xff]
        %v580 = vld [vmem:[#allocation5 + $0x4f8] sm:$0xff]
        %v581 = vld [vmem:[#allocation5 + $0x500] sm:$0xff]
        %v582 = vld [vmem:[#allocation5 + $0x508] sm:$0xff]
        %v583 = vld [vmem:[#allocation5 + $0x510] sm:$0xff]
        %v584 = vld [vmem:[#allocation5 + $0x518] sm:$0xff]
        %v585 = vld [vmem:[#allocation5 + $0x520] sm:$0xff]
        %v586 = vld [vmem:[#allocation5 + $0x528] sm:$0xff]
        %v587 = vld [vmem:[#allocation5 + $0x530] sm:$0xff]
        %v588 = vld [vmem:[#allocation5 + $0x538] sm:$0xff]
        %v589 = vld [vmem:[#allocation5 + $0x540] sm:$0xff]
        %v590 = vld [vmem:[#allocation5 + $0x548] sm:$0xff]
        %v591 = vld [vmem:[#allocation5 + $0x550] sm:$0xff]
        %v592 = vld [vmem:[#allocation5 + $0x558] sm:$0xff]
        %v593 = vld [vmem:[#allocation5 + $0x560] sm:$0xff]
        %v594 = vld [vmem:[#allocation5 + $0x568] sm:$0xff]
        %v595 = vld [vmem:[#allocation5 + $0x570] sm:$0xff]
        %v596 = vld [vmem:[#allocation5 + $0x578] sm:$0xff]
        %v597 = vld [vmem:[#allocation5 + $0x580] sm:$0xff]
        %v598 = vld [vmem:[#allocation5 + $0x588] sm:$0xff]
        %v599 = vld [vmem:[#allocation5 + $0x590] sm:$0xff]
        %v600 = vld [vmem:[#allocation5 + $0x598] sm:$0xff]
        %v601 = vld [vmem:[#allocation5 + $0x5a0] sm:$0xff]
        %v602 = vld [vmem:[#allocation5 + $0x5a8] sm:$0xff]
        %v603 = vld [vmem:[#allocation5 + $0x5b0] sm:$0xff]
        %v604 = vld [vmem:[#allocation5 + $0x5b8] sm:$0xff]
        %v605 = vld [vmem:[#allocation5 + $0x5c0] sm:$0xff]
        %v606 = vld [vmem:[#allocation5 + $0x5c8] sm:$0xff]
        %v607 = vld [vmem:[#allocation5 + $0x5d0] sm:$0xff]
        %v608 = vld [vmem:[#allocation5 + $0x5d8] sm:$0xff]
        %v609 = vld [vmem:[#allocation5 + $0x5e0] sm:$0xff]
        %v610 = vld [vmem:[#allocation5 + $0x5e8] sm:$0xff]
        %v611 = vld [vmem:[#allocation5 + $0x5f0] sm:$0xff]
        %v612 = vld [vmem:[#allocation5 + $0x5f8] sm:$0xff]
        %v613 = vld [vmem:[#allocation5 + $0x600] sm:$0xff]
        %v614 = vld [vmem:[#allocation5 + $0x608] sm:$0xff]
        %v615 = vld [vmem:[#allocation5 + $0x610] sm:$0xff]
        %v616 = vld [vmem:[#allocation5 + $0x618] sm:$0xff]
        %v617 = vld [vmem:[#allocation5 + $0x620] sm:$0xff]
        %v618 = vld [vmem:[#allocation5 + $0x628] sm:$0xff]
        %v619 = vld [vmem:[#allocation5 + $0x630] sm:$0xff]
        %v620 = vld [vmem:[#allocation5 + $0x638] sm:$0xff]
        %v621 = vld [vmem:[#allocation5 + $0x640] sm:$0xff]
        %v622 = vld [vmem:[#allocation5 + $0x648] sm:$0xff]
        %v623 = vld [vmem:[#allocation5 + $0x650] sm:$0xff]
        %v624 = vld [vmem:[#allocation5 + $0x658] sm:$0xff]
        %v625 = vld [vmem:[#allocation5 + $0x660] sm:$0xff]
        %v626 = vld [vmem:[#allocation5 + $0x668] sm:$0xff]
        %v627 = vld [vmem:[#allocation5 + $0x670] sm:$0xff]
        %v628 = vld [vmem:[#allocation5 + $0x678] sm:$0xff]
        %v629 = vld [vmem:[#allocation5 + $0x680] sm:$0xff]
        %v630 = vld [vmem:[#allocation5 + $0x688] sm:$0xff]
        %v631 = vld [vmem:[#allocation5 + $0x690] sm:$0xff]
        %v632 = vld [vmem:[#allocation5 + $0x698] sm:$0xff]
        %v633 = vld [vmem:[#allocation5 + $0x6a0] sm:$0xff]
        %v634 = vld [vmem:[#allocation5 + $0x6a8] sm:$0xff]
        %v635 = vld [vmem:[#allocation5 + $0x6b0] sm:$0xff]
        %v636 = vld [vmem:[#allocation5 + $0x6b8] sm:$0xff]
        %v637 = vld [vmem:[#allocation5 + $0x6c0] sm:$0xff]
        %v638 = vld [vmem:[#allocation5 + $0x6c8] sm:$0xff]
        %v639 = vld [vmem:[#allocation5 + $0x6d0] sm:$0xff]
        %v640 = vld [vmem:[#allocation5 + $0x6d8] sm:$0xff]
        %v641 = vld [vmem:[#allocation5 + $0x6e0] sm:$0xff]
        %v642 = vld [vmem:[#allocation5 + $0x6e8] sm:$0xff]
        %v643 = vld [vmem:[#allocation5 + $0x6f0] sm:$0xff]
        %v644 = vld [vmem:[#allocation5 + $0x6f8] sm:$0xff]
        %v645 = vld [vmem:[#allocation5 + $0x700] sm:$0xff]
        %v646 = vld [vmem:[#allocation5 + $0x708] sm:$0xff]
        %v647 = vld [vmem:[#allocation5 + $0x710] sm:$0xff]
        %v648 = vld [vmem:[#allocation5 + $0x718] sm:$0xff]
        %v649 = vld [vmem:[#allocation5 + $0x720] sm:$0xff]
        %v650 = vld [vmem:[#allocation5 + $0x728] sm:$0xff]
        %v651 = vld [vmem:[#allocation5 + $0x730] sm:$0xff]
        %v652 = vld [vmem:[#allocation5 + $0x738] sm:$0xff]
        %v653 = vld [vmem:[#allocation5 + $0x740] sm:$0xff]
        %v654 = vld [vmem:[#allocation5 + $0x748] sm:$0xff]
        %v655 = vld [vmem:[#allocation5 + $0x750] sm:$0xff]
        %v656 = vld [vmem:[#allocation5 + $0x758] sm:$0xff]
        %v657 = vld [vmem:[#allocation5 + $0x760] sm:$0xff]
        %v658 = vld [vmem:[#allocation5 + $0x768] sm:$0xff]
        %v659 = vld [vmem:[#allocation5 + $0x770] sm:$0xff]
        %v660 = vld [vmem:[#allocation5 + $0x778] sm:$0xff]
        %v661 = vld [vmem:[#allocation5 + $0x780] sm:$0xff]
        %v662 = vld [vmem:[#allocation5 + $0x788] sm:$0xff]
        %v663 = vld [vmem:[#allocation5 + $0x790] sm:$0xff]
        %v664 = vld [vmem:[#allocation5 + $0x798] sm:$0xff]
        %v665 = vld [vmem:[#allocation5 + $0x7a0] sm:$0xff]
        %v666 = vld [vmem:[#allocation5 + $0x7a8] sm:$0xff]
        %v667 = vld [vmem:[#allocation5 + $0x7b0] sm:$0xff]
        %v668 = vld [vmem:[#allocation5 + $0x7b8] sm:$0xff]
        %v669 = vld [vmem:[#allocation5 + $0x7c0] sm:$0xff]
        %v670 = vld [vmem:[#allocation5 + $0x7c8] sm:$0xff]
        %v671 = vld [vmem:[#allocation5 + $0x7d0] sm:$0xff]
        %v672 = vld [vmem:[#allocation5 + $0x7d8] sm:$0xff]
        %v673 = vld [vmem:[#allocation5 + $0x7e0] sm:$0xff]
        %v674 = vld [vmem:[#allocation5 + $0x7e8] sm:$0xff]
        %v675 = vld [vmem:[#allocation5 + $0x7f0] sm:$0xff]
        %v676 = vld [vmem:[#allocation5 + $0x7f8] sm:$0xff]
        %v677 = vld [vmem:[#allocation7] sm:$0xff]
        %v679 = vlaneseq
        %v680 = vshrl.u32 %v679, 7
        %v681 = vsub.s32 0, %v680
        %v682 = vrot.slane %v677, %v681
        %v683 = vlaneseq
        %v684 = vshrl.u32 %v683, 7
        %v685 = vsub.s32 1, %v684
        %v686 = vrot.slane %v677, %v685
        %v687 = vlaneseq
        %v688 = vshrl.u32 %v687, 7
        %v689 = vsub.s32 2, %v688
        %v690 = vrot.slane %v677, %v689
        %v691 = vlaneseq
        %v692 = vshrl.u32 %v691, 7
        %v693 = vsub.s32 3, %v692
        %v694 = vrot.slane %v677, %v693
        %v695 = vlaneseq
        %v696 = vshrl.u32 %v695, 7
        %v697 = vsub.s32 4, %v696
        %v698 = vrot.slane %v677, %v697
        %v699 = vlaneseq
        %v700 = vshrl.u32 %v699, 7
        %v701 = vsub.s32 5, %v700
        %v702 = vrot.slane %v677, %v701
        %v703 = vlaneseq
        %v704 = vshrl.u32 %v703, 7
        %v705 = vsub.s32 6, %v704
        %v706 = vrot.slane %v677, %v705
        %v707 = vlaneseq
        %v708 = vshrl.u32 %v707, 7
        %v709 = vsub.s32 7, %v708
        %v710 = vrot.slane %v677, %v709
        %v975 = vunpack.c.l.b16 %v421
        %v976 = vunpack.c.h.b16 %v421
        %v977 = vunpack.c.l.b16 %v422
        %v978 = vunpack.c.h.b16 %v422
        %v979 = vunpack.c.l.b16 %v423
        %v980 = vunpack.c.h.b16 %v423
        %v981 = vunpack.c.l.b16 %v424
        %v982 = vunpack.c.h.b16 %v424
        %v983 = vunpack.c.l.b16 %v425
        %v984 = vunpack.c.h.b16 %v425
        %v985 = vunpack.c.l.b16 %v426
        %v986 = vunpack.c.h.b16 %v426
        %v987 = vunpack.c.l.b16 %v427
        %v988 = vunpack.c.h.b16 %v427
        %v989 = vunpack.c.l.b16 %v428
        %v990 = vunpack.c.h.b16 %v428
        %v991 = vunpack.c.l.b16 %v429
        %v992 = vunpack.c.h.b16 %v429
        %v993 = vunpack.c.l.b16 %v430
        %v994 = vunpack.c.h.b16 %v430
        %v995 = vunpack.c.l.b16 %v431
        %v996 = vunpack.c.h.b16 %v431
        %v997 = vunpack.c.l.b16 %v432
        %v998 = vunpack.c.h.b16 %v432
        %v999 = vunpack.c.l.b16 %v433
        %v1000 = vunpack.c.h.b16 %v433
        %v1001 = vunpack.c.l.b16 %v434
        %v1002 = vunpack.c.h.b16 %v434
        %v1003 = vunpack.c.l.b16 %v435
        %v1004 = vunpack.c.h.b16 %v435
        %v1005 = vunpack.c.l.b16 %v436
        %v1006 = vunpack.c.h.b16 %v436
        %v1007 = vunpack.c.l.b16 %v437
        %v1008 = vunpack.c.h.b16 %v437
        %v1009 = vunpack.c.l.b16 %v438
        %v1010 = vunpack.c.h.b16 %v438
        %v1011 = vunpack.c.l.b16 %v439
        %v1012 = vunpack.c.h.b16 %v439
        %v1013 = vunpack.c.l.b16 %v440
        %v1014 = vunpack.c.h.b16 %v440
        %v1015 = vunpack.c.l.b16 %v441
        %v1016 = vunpack.c.h.b16 %v441
        %v1017 = vunpack.c.l.b16 %v442
        %v1018 = vunpack.c.h.b16 %v442
        %v1019 = vunpack.c.l.b16 %v443
        %v1020 = vunpack.c.h.b16 %v443
        %v1021 = vunpack.c.l.b16 %v444
        %v1022 = vunpack.c.h.b16 %v444
        %v1023 = vunpack.c.l.b16 %v445
        %v1024 = vunpack.c.h.b16 %v445
        %v1025 = vunpack.c.l.b16 %v446
        %v1026 = vunpack.c.h.b16 %v446
        %v1027 = vunpack.c.l.b16 %v447
        %v1028 = vunpack.c.h.b16 %v447
        %v1029 = vunpack.c.l.b16 %v448
        %v1030 = vunpack.c.h.b16 %v448
        %v1031 = vunpack.c.l.b16 %v449
        %v1032 = vunpack.c.h.b16 %v449
        %v1033 = vunpack.c.l.b16 %v450
        %v1034 = vunpack.c.h.b16 %v450
        %v1035 = vunpack.c.l.b16 %v451
        %v1036 = vunpack.c.h.b16 %v451
        %v1037 = vunpack.c.l.b16 %v452
        %v1038 = vunpack.c.h.b16 %v452
        %v1039 = vunpack.c.l.b16 %v453
        %v1040 = vunpack.c.h.b16 %v453
        %v1041 = vunpack.c.l.b16 %v454
        %v1042 = vunpack.c.h.b16 %v454
        %v1043 = vunpack.c.l.b16 %v455
        %v1044 = vunpack.c.h.b16 %v455
        %v1045 = vunpack.c.l.b16 %v456
        %v1046 = vunpack.c.h.b16 %v456
        %v1047 = vunpack.c.l.b16 %v457
        %v1048 = vunpack.c.h.b16 %v457
        %v1049 = vunpack.c.l.b16 %v458
        %v1050 = vunpack.c.h.b16 %v458
        %v1051 = vunpack.c.l.b16 %v459
        %v1052 = vunpack.c.h.b16 %v459
        %v1053 = vunpack.c.l.b16 %v460
        %v1054 = vunpack.c.h.b16 %v460
        %v1055 = vunpack.c.l.b16 %v461
        %v1056 = vunpack.c.h.b16 %v461
        %v1057 = vunpack.c.l.b16 %v462
        %v1058 = vunpack.c.h.b16 %v462
        %v1059 = vunpack.c.l.b16 %v463
        %v1060 = vunpack.c.h.b16 %v463
        %v1061 = vunpack.c.l.b16 %v464
        %v1062 = vunpack.c.h.b16 %v464
        %v1063 = vunpack.c.l.b16 %v465
        %v1064 = vunpack.c.h.b16 %v465
        %v1065 = vunpack.c.l.b16 %v466
        %v1066 = vunpack.c.h.b16 %v466
        %v1067 = vunpack.c.l.b16 %v467
        %v1068 = vunpack.c.h.b16 %v467
        %v1069 = vunpack.c.l.b16 %v468
        %v1070 = vunpack.c.h.b16 %v468
        %v1071 = vunpack.c.l.b16 %v469
        %v1072 = vunpack.c.h.b16 %v469
        %v1073 = vunpack.c.l.b16 %v470
        %v1074 = vunpack.c.h.b16 %v470
        %v1075 = vunpack.c.l.b16 %v471
        %v1076 = vunpack.c.h.b16 %v471
        %v1077 = vunpack.c.l.b16 %v472
        %v1078 = vunpack.c.h.b16 %v472
        %v1079 = vunpack.c.l.b16 %v473
        %v1080 = vunpack.c.h.b16 %v473
        %v1081 = vunpack.c.l.b16 %v474
        %v1082 = vunpack.c.h.b16 %v474
        %v1083 = vunpack.c.l.b16 %v475
        %v1084 = vunpack.c.h.b16 %v475
        %v1085 = vunpack.c.l.b16 %v476
        %v1086 = vunpack.c.h.b16 %v476
        %v1087 = vunpack.c.l.b16 %v477
        %v1088 = vunpack.c.h.b16 %v477
        %v1089 = vunpack.c.l.b16 %v478
        %v1090 = vunpack.c.h.b16 %v478
        %v1091 = vunpack.c.l.b16 %v479
        %v1092 = vunpack.c.h.b16 %v479
        %v1093 = vunpack.c.l.b16 %v480
        %v1094 = vunpack.c.h.b16 %v480
        %v1095 = vunpack.c.l.b16 %v481
        %v1096 = vunpack.c.h.b16 %v481
        %v1097 = vunpack.c.l.b16 %v482
        %v1098 = vunpack.c.h.b16 %v482
        %v1099 = vunpack.c.l.b16 %v483
        %v1100 = vunpack.c.h.b16 %v483
        %v1101 = vunpack.c.l.b16 %v484
        %v1102 = vunpack.c.h.b16 %v484
        %v1103 = vunpack.c.l.b16 %v485
        %v1104 = vunpack.c.h.b16 %v485
        %v1105 = vunpack.c.l.b16 %v486
        %v1106 = vunpack.c.h.b16 %v486
        %v1107 = vunpack.c.l.b16 %v487
        %v1108 = vunpack.c.h.b16 %v487
        %v1109 = vunpack.c.l.b16 %v488
        %v1110 = vunpack.c.h.b16 %v488
        %v1111 = vunpack.c.l.b16 %v489
        %v1112 = vunpack.c.h.b16 %v489
        %v1113 = vunpack.c.l.b16 %v490
        %v1114 = vunpack.c.h.b16 %v490
        %v1115 = vunpack.c.l.b16 %v491
        %v1116 = vunpack.c.h.b16 %v491
        %v1117 = vunpack.c.l.b16 %v492
        %v1118 = vunpack.c.h.b16 %v492
        %v1119 = vunpack.c.l.b16 %v493
        %v1120 = vunpack.c.h.b16 %v493
        %v1121 = vunpack.c.l.b16 %v494
        %v1122 = vunpack.c.h.b16 %v494
        %v1123 = vunpack.c.l.b16 %v495
        %v1124 = vunpack.c.h.b16 %v495
        %v1125 = vunpack.c.l.b16 %v496
        %v1126 = vunpack.c.h.b16 %v496
        %v1127 = vunpack.c.l.b16 %v497
        %v1128 = vunpack.c.h.b16 %v497
        %v1129 = vunpack.c.l.b16 %v498
        %v1130 = vunpack.c.h.b16 %v498
        %v1131 = vunpack.c.l.b16 %v499
        %v1132 = vunpack.c.h.b16 %v499
        %v1133 = vunpack.c.l.b16 %v500
        %v1134 = vunpack.c.h.b16 %v500
        %v1135 = vunpack.c.l.b16 %v501
        %v1136 = vunpack.c.h.b16 %v501
        %v1137 = vunpack.c.l.b16 %v502
        %v1138 = vunpack.c.h.b16 %v502
        %v1139 = vunpack.c.l.b16 %v503
        %v1140 = vunpack.c.h.b16 %v503
        %v1141 = vunpack.c.l.b16 %v504
        %v1142 = vunpack.c.h.b16 %v504
        %v1143 = vunpack.c.l.b16 %v505
        %v1144 = vunpack.c.h.b16 %v505
        %v1145 = vunpack.c.l.b16 %v506
        %v1146 = vunpack.c.h.b16 %v506
        %v1147 = vunpack.c.l.b16 %v507
        %v1148 = vunpack.c.h.b16 %v507
        %v1149 = vunpack.c.l.b16 %v508
        %v1150 = vunpack.c.h.b16 %v508
        %v1151 = vunpack.c.l.b16 %v509
        %v1152 = vunpack.c.h.b16 %v509
        %v1153 = vunpack.c.l.b16 %v510
        %v1154 = vunpack.c.h.b16 %v510
        %v1155 = vunpack.c.l.b16 %v511
        %v1156 = vunpack.c.h.b16 %v511
        %v1157 = vunpack.c.l.b16 %v512
        %v1158 = vunpack.c.h.b16 %v512
        %v1159 = vunpack.c.l.b16 %v513
        %v1160 = vunpack.c.h.b16 %v513
        %v1161 = vunpack.c.l.b16 %v514
        %v1162 = vunpack.c.h.b16 %v514
        %v1163 = vunpack.c.l.b16 %v515
        %v1164 = vunpack.c.h.b16 %v515
        %v1165 = vunpack.c.l.b16 %v516
        %v1166 = vunpack.c.h.b16 %v516
        %v1167 = vunpack.c.l.b16 %v517
        %v1168 = vunpack.c.h.b16 %v517
        %v1169 = vunpack.c.l.b16 %v518
        %v1170 = vunpack.c.h.b16 %v518
        %v1171 = vunpack.c.l.b16 %v519
        %v1172 = vunpack.c.h.b16 %v519
        %v1173 = vunpack.c.l.b16 %v520
        %v1174 = vunpack.c.h.b16 %v520
        %v1175 = vunpack.c.l.b16 %v521
        %v1176 = vunpack.c.h.b16 %v521
        %v1177 = vunpack.c.l.b16 %v522
        %v1178 = vunpack.c.h.b16 %v522
        %v1179 = vunpack.c.l.b16 %v523
        %v1180 = vunpack.c.h.b16 %v523
        %v1181 = vunpack.c.l.b16 %v524
        %v1182 = vunpack.c.h.b16 %v524
        %v1183 = vunpack.c.l.b16 %v525
        %v1184 = vunpack.c.h.b16 %v525
        %v1185 = vunpack.c.l.b16 %v526
        %v1186 = vunpack.c.h.b16 %v526
        %v1187 = vunpack.c.l.b16 %v527
        %v1188 = vunpack.c.h.b16 %v527
        %v1189 = vunpack.c.l.b16 %v528
        %v1190 = vunpack.c.h.b16 %v528
        %v1191 = vunpack.c.l.b16 %v529
        %v1192 = vunpack.c.h.b16 %v529
        %v1193 = vunpack.c.l.b16 %v530
        %v1194 = vunpack.c.h.b16 %v530
        %v1195 = vunpack.c.l.b16 %v531
        %v1196 = vunpack.c.h.b16 %v531
        %v1197 = vunpack.c.l.b16 %v532
        %v1198 = vunpack.c.h.b16 %v532
        %v1199 = vunpack.c.l.b16 %v533
        %v1200 = vunpack.c.h.b16 %v533
        %v1201 = vunpack.c.l.b16 %v534
        %v1202 = vunpack.c.h.b16 %v534
        %v1203 = vunpack.c.l.b16 %v535
        %v1204 = vunpack.c.h.b16 %v535
        %v1205 = vunpack.c.l.b16 %v536
        %v1206 = vunpack.c.h.b16 %v536
        %v1207 = vunpack.c.l.b16 %v537
        %v1208 = vunpack.c.h.b16 %v537
        %v1209 = vunpack.c.l.b16 %v538
        %v1210 = vunpack.c.h.b16 %v538
        %v1211 = vunpack.c.l.b16 %v539
        %v1212 = vunpack.c.h.b16 %v539
        %v1213 = vunpack.c.l.b16 %v540
        %v1214 = vunpack.c.h.b16 %v540
        %v1215 = vunpack.c.l.b16 %v541
        %v1216 = vunpack.c.h.b16 %v541
        %v1217 = vunpack.c.l.b16 %v542
        %v1218 = vunpack.c.h.b16 %v542
        %v1219 = vunpack.c.l.b16 %v543
        %v1220 = vunpack.c.h.b16 %v543
        %v1221 = vunpack.c.l.b16 %v544
        %v1222 = vunpack.c.h.b16 %v544
        %v1223 = vunpack.c.l.b16 %v545
        %v1224 = vunpack.c.h.b16 %v545
        %v1225 = vunpack.c.l.b16 %v546
        %v1226 = vunpack.c.h.b16 %v546
        %v1227 = vunpack.c.l.b16 %v547
        %v1228 = vunpack.c.h.b16 %v547
        %v1229 = vunpack.c.l.b16 %v548
        %v1230 = vunpack.c.h.b16 %v548
        %v1231 = vunpack.c.l.b16 %v549
        %v1232 = vunpack.c.h.b16 %v549
        %v1233 = vunpack.c.l.b16 %v550
        %v1234 = vunpack.c.h.b16 %v550
        %v1235 = vunpack.c.l.b16 %v551
        %v1236 = vunpack.c.h.b16 %v551
        %v1237 = vunpack.c.l.b16 %v552
        %v1238 = vunpack.c.h.b16 %v552
        %v1239 = vunpack.c.l.b16 %v553
        %v1240 = vunpack.c.h.b16 %v553
        %v1241 = vunpack.c.l.b16 %v554
        %v1242 = vunpack.c.h.b16 %v554
        %v1243 = vunpack.c.l.b16 %v555
        %v1244 = vunpack.c.h.b16 %v555
        %v1245 = vunpack.c.l.b16 %v556
        %v1246 = vunpack.c.h.b16 %v556
        %v1247 = vunpack.c.l.b16 %v557
        %v1248 = vunpack.c.h.b16 %v557
        %v1249 = vunpack.c.l.b16 %v558
        %v1250 = vunpack.c.h.b16 %v558
        %v1251 = vunpack.c.l.b16 %v559
        %v1252 = vunpack.c.h.b16 %v559
        %v1253 = vunpack.c.l.b16 %v560
        %v1254 = vunpack.c.h.b16 %v560
        %v1255 = vunpack.c.l.b16 %v561
        %v1256 = vunpack.c.h.b16 %v561
        %v1257 = vunpack.c.l.b16 %v562
        %v1258 = vunpack.c.h.b16 %v562
        %v1259 = vunpack.c.l.b16 %v563
        %v1260 = vunpack.c.h.b16 %v563
        %v1261 = vunpack.c.l.b16 %v564
        %v1262 = vunpack.c.h.b16 %v564
        %v1263 = vunpack.c.l.b16 %v565
        %v1264 = vunpack.c.h.b16 %v565
        %v1265 = vunpack.c.l.b16 %v566
        %v1266 = vunpack.c.h.b16 %v566
        %v1267 = vunpack.c.l.b16 %v567
        %v1268 = vunpack.c.h.b16 %v567
        %v1269 = vunpack.c.l.b16 %v568
        %v1270 = vunpack.c.h.b16 %v568
        %v1271 = vunpack.c.l.b16 %v569
        %v1272 = vunpack.c.h.b16 %v569
        %v1273 = vunpack.c.l.b16 %v570
        %v1274 = vunpack.c.h.b16 %v570
        %v1275 = vunpack.c.l.b16 %v571
        %v1276 = vunpack.c.h.b16 %v571
        %v1277 = vunpack.c.l.b16 %v572
        %v1278 = vunpack.c.h.b16 %v572
        %v1279 = vunpack.c.l.b16 %v573
        %v1280 = vunpack.c.h.b16 %v573
        %v1281 = vunpack.c.l.b16 %v574
        %v1282 = vunpack.c.h.b16 %v574
        %v1283 = vunpack.c.l.b16 %v575
        %v1284 = vunpack.c.h.b16 %v575
        %v1285 = vunpack.c.l.b16 %v576
        %v1286 = vunpack.c.h.b16 %v576
        %v1287 = vunpack.c.l.b16 %v577
        %v1288 = vunpack.c.h.b16 %v577
        %v1289 = vunpack.c.l.b16 %v578
        %v1290 = vunpack.c.h.b16 %v578
        %v1291 = vunpack.c.l.b16 %v579
        %v1292 = vunpack.c.h.b16 %v579
        %v1293 = vunpack.c.l.b16 %v580
        %v1294 = vunpack.c.h.b16 %v580
        %v1295 = vunpack.c.l.b16 %v581
        %v1296 = vunpack.c.h.b16 %v581
        %v1297 = vunpack.c.l.b16 %v582
        %v1298 = vunpack.c.h.b16 %v582
        %v1299 = vunpack.c.l.b16 %v583
        %v1300 = vunpack.c.h.b16 %v583
        %v1301 = vunpack.c.l.b16 %v584
        %v1302 = vunpack.c.h.b16 %v584
        %v1303 = vunpack.c.l.b16 %v585
        %v1304 = vunpack.c.h.b16 %v585
        %v1305 = vunpack.c.l.b16 %v586
        %v1306 = vunpack.c.h.b16 %v586
        %v1307 = vunpack.c.l.b16 %v587
        %v1308 = vunpack.c.h.b16 %v587
        %v1309 = vunpack.c.l.b16 %v588
        %v1310 = vunpack.c.h.b16 %v588
        %v1311 = vunpack.c.l.b16 %v589
        %v1312 = vunpack.c.h.b16 %v589
        %v1313 = vunpack.c.l.b16 %v590
        %v1314 = vunpack.c.h.b16 %v590
        %v1315 = vunpack.c.l.b16 %v591
        %v1316 = vunpack.c.h.b16 %v591
        %v1317 = vunpack.c.l.b16 %v592
        %v1318 = vunpack.c.h.b16 %v592
        %v1319 = vunpack.c.l.b16 %v593
        %v1320 = vunpack.c.h.b16 %v593
        %v1321 = vunpack.c.l.b16 %v594
        %v1322 = vunpack.c.h.b16 %v594
        %v1323 = vunpack.c.l.b16 %v595
        %v1324 = vunpack.c.h.b16 %v595
        %v1325 = vunpack.c.l.b16 %v596
        %v1326 = vunpack.c.h.b16 %v596
        %v1327 = vunpack.c.l.b16 %v597
        %v1328 = vunpack.c.h.b16 %v597
        %v1329 = vunpack.c.l.b16 %v598
        %v1330 = vunpack.c.h.b16 %v598
        %v1331 = vunpack.c.l.b16 %v599
        %v1332 = vunpack.c.h.b16 %v599
        %v1333 = vunpack.c.l.b16 %v600
        %v1334 = vunpack.c.h.b16 %v600
        %v1335 = vunpack.c.l.b16 %v601
        %v1336 = vunpack.c.h.b16 %v601
        %v1337 = vunpack.c.l.b16 %v602
        %v1338 = vunpack.c.h.b16 %v602
        %v1339 = vunpack.c.l.b16 %v603
        %v1340 = vunpack.c.h.b16 %v603
        %v1341 = vunpack.c.l.b16 %v604
        %v1342 = vunpack.c.h.b16 %v604
        %v1343 = vunpack.c.l.b16 %v605
        %v1344 = vunpack.c.h.b16 %v605
        %v1345 = vunpack.c.l.b16 %v606
        %v1346 = vunpack.c.h.b16 %v606
        %v1347 = vunpack.c.l.b16 %v607
        %v1348 = vunpack.c.h.b16 %v607
        %v1349 = vunpack.c.l.b16 %v608
        %v1350 = vunpack.c.h.b16 %v608
        %v1351 = vunpack.c.l.b16 %v609
        %v1352 = vunpack.c.h.b16 %v609
        %v1353 = vunpack.c.l.b16 %v610
        %v1354 = vunpack.c.h.b16 %v610
        %v1355 = vunpack.c.l.b16 %v611
        %v1356 = vunpack.c.h.b16 %v611
        %v1357 = vunpack.c.l.b16 %v612
        %v1358 = vunpack.c.h.b16 %v612
        %v1359 = vunpack.c.l.b16 %v613
        %v1360 = vunpack.c.h.b16 %v613
        %v1361 = vunpack.c.l.b16 %v614
        %v1362 = vunpack.c.h.b16 %v614
        %v1363 = vunpack.c.l.b16 %v615
        %v1364 = vunpack.c.h.b16 %v615
        %v1365 = vunpack.c.l.b16 %v616
        %v1366 = vunpack.c.h.b16 %v616
        %v1367 = vunpack.c.l.b16 %v617
        %v1368 = vunpack.c.h.b16 %v617
        %v1369 = vunpack.c.l.b16 %v618
        %v1370 = vunpack.c.h.b16 %v618
        %v1371 = vunpack.c.l.b16 %v619
        %v1372 = vunpack.c.h.b16 %v619
        %v1373 = vunpack.c.l.b16 %v620
        %v1374 = vunpack.c.h.b16 %v620
        %v1375 = vunpack.c.l.b16 %v621
        %v1376 = vunpack.c.h.b16 %v621
        %v1377 = vunpack.c.l.b16 %v622
        %v1378 = vunpack.c.h.b16 %v622
        %v1379 = vunpack.c.l.b16 %v623
        %v1380 = vunpack.c.h.b16 %v623
        %v1381 = vunpack.c.l.b16 %v624
        %v1382 = vunpack.c.h.b16 %v624
        %v1383 = vunpack.c.l.b16 %v625
        %v1384 = vunpack.c.h.b16 %v625
        %v1385 = vunpack.c.l.b16 %v626
        %v1386 = vunpack.c.h.b16 %v626
        %v1387 = vunpack.c.l.b16 %v627
        %v1388 = vunpack.c.h.b16 %v627
        %v1389 = vunpack.c.l.b16 %v628
        %v1390 = vunpack.c.h.b16 %v628
        %v1391 = vunpack.c.l.b16 %v629
        %v1392 = vunpack.c.h.b16 %v629
        %v1393 = vunpack.c.l.b16 %v630
        %v1394 = vunpack.c.h.b16 %v630
        %v1395 = vunpack.c.l.b16 %v631
        %v1396 = vunpack.c.h.b16 %v631
        %v1397 = vunpack.c.l.b16 %v632
        %v1398 = vunpack.c.h.b16 %v632
        %v1399 = vunpack.c.l.b16 %v633
        %v1400 = vunpack.c.h.b16 %v633
        %v1401 = vunpack.c.l.b16 %v634
        %v1402 = vunpack.c.h.b16 %v634
        %v1403 = vunpack.c.l.b16 %v635
        %v1404 = vunpack.c.h.b16 %v635
        %v1405 = vunpack.c.l.b16 %v636
        %v1406 = vunpack.c.h.b16 %v636
        %v1407 = vunpack.c.l.b16 %v637
        %v1408 = vunpack.c.h.b16 %v637
        %v1409 = vunpack.c.l.b16 %v638
        %v1410 = vunpack.c.h.b16 %v638
        %v1411 = vunpack.c.l.b16 %v639
        %v1412 = vunpack.c.h.b16 %v639
        %v1413 = vunpack.c.l.b16 %v640
        %v1414 = vunpack.c.h.b16 %v640
        %v1415 = vunpack.c.l.b16 %v641
        %v1416 = vunpack.c.h.b16 %v641
        %v1417 = vunpack.c.l.b16 %v642
        %v1418 = vunpack.c.h.b16 %v642
        %v1419 = vunpack.c.l.b16 %v643
        %v1420 = vunpack.c.h.b16 %v643
        %v1421 = vunpack.c.l.b16 %v644
        %v1422 = vunpack.c.h.b16 %v644
        %v1423 = vunpack.c.l.b16 %v645
        %v1424 = vunpack.c.h.b16 %v645
        %v1425 = vunpack.c.l.b16 %v646
        %v1426 = vunpack.c.h.b16 %v646
        %v1427 = vunpack.c.l.b16 %v647
        %v1428 = vunpack.c.h.b16 %v647
        %v1429 = vunpack.c.l.b16 %v648
        %v1430 = vunpack.c.h.b16 %v648
        %v1431 = vunpack.c.l.b16 %v649
        %v1432 = vunpack.c.h.b16 %v649
        %v1433 = vunpack.c.l.b16 %v650
        %v1434 = vunpack.c.h.b16 %v650
        %v1435 = vunpack.c.l.b16 %v651
        %v1436 = vunpack.c.h.b16 %v651
        %v1437 = vunpack.c.l.b16 %v652
        %v1438 = vunpack.c.h.b16 %v652
        %v1439 = vunpack.c.l.b16 %v653
        %v1440 = vunpack.c.h.b16 %v653
        %v1441 = vunpack.c.l.b16 %v654
        %v1442 = vunpack.c.h.b16 %v654
        %v1443 = vunpack.c.l.b16 %v655
        %v1444 = vunpack.c.h.b16 %v655
        %v1445 = vunpack.c.l.b16 %v656
        %v1446 = vunpack.c.h.b16 %v656
        %v1447 = vunpack.c.l.b16 %v657
        %v1448 = vunpack.c.h.b16 %v657
        %v1449 = vunpack.c.l.b16 %v658
        %v1450 = vunpack.c.h.b16 %v658
        %v1451 = vunpack.c.l.b16 %v659
        %v1452 = vunpack.c.h.b16 %v659
        %v1453 = vunpack.c.l.b16 %v660
        %v1454 = vunpack.c.h.b16 %v660
        %v1455 = vunpack.c.l.b16 %v661
        %v1456 = vunpack.c.h.b16 %v661
        %v1457 = vunpack.c.l.b16 %v662
        %v1458 = vunpack.c.h.b16 %v662
        %v1459 = vunpack.c.l.b16 %v663
        %v1460 = vunpack.c.h.b16 %v663
        %v1461 = vunpack.c.l.b16 %v664
        %v1462 = vunpack.c.h.b16 %v664
        %v1463 = vunpack.c.l.b16 %v665
        %v1464 = vunpack.c.h.b16 %v665
        %v1465 = vunpack.c.l.b16 %v666
        %v1466 = vunpack.c.h.b16 %v666
        %v1467 = vunpack.c.l.b16 %v667
        %v1468 = vunpack.c.h.b16 %v667
        %v1469 = vunpack.c.l.b16 %v668
        %v1470 = vunpack.c.h.b16 %v668
        %v1471 = vunpack.c.l.b16 %v669
        %v1472 = vunpack.c.h.b16 %v669
        %v1473 = vunpack.c.l.b16 %v670
        %v1474 = vunpack.c.h.b16 %v670
        %v1475 = vunpack.c.l.b16 %v671
        %v1476 = vunpack.c.h.b16 %v671
        %v1477 = vunpack.c.l.b16 %v672
        %v1478 = vunpack.c.h.b16 %v672
        %v1479 = vunpack.c.l.b16 %v673
        %v1480 = vunpack.c.h.b16 %v673
        %v1481 = vunpack.c.l.b16 %v674
        %v1482 = vunpack.c.h.b16 %v674
        %v1483 = vunpack.c.l.b16 %v675
        %v1484 = vunpack.c.h.b16 %v675
        %v1485 = vunpack.c.l.b16 %v676
        %v1486 = vunpack.c.h.b16 %v676
        %v1487 = vpack.c.b16 %v983, %v975
        %v1488 = vpack.c.b16 %v984, %v976
        %v1489 = vpack.c.b16 %v985, %v977
        %v1490 = vpack.c.b16 %v986, %v978
        %v1491 = vpack.c.b16 %v987, %v979
        %v1492 = vpack.c.b16 %v988, %v980
        %v1493 = vpack.c.b16 %v989, %v981
        %v1494 = vpack.c.b16 %v990, %v982
        %v1495 = vpack.c.b16 %v999, %v991
        %v1496 = vpack.c.b16 %v1000, %v992
        %v1497 = vpack.c.b16 %v1001, %v993
        %v1498 = vpack.c.b16 %v1002, %v994
        %v1499 = vpack.c.b16 %v1003, %v995
        %v1500 = vpack.c.b16 %v1004, %v996
        %v1501 = vpack.c.b16 %v1005, %v997
        %v1502 = vpack.c.b16 %v1006, %v998
        %v1503 = vpack.c.b16 %v1015, %v1007
        %v1504 = vpack.c.b16 %v1016, %v1008
        %v1505 = vpack.c.b16 %v1017, %v1009
        %v1506 = vpack.c.b16 %v1018, %v1010
        %v1507 = vpack.c.b16 %v1019, %v1011
        %v1508 = vpack.c.b16 %v1020, %v1012
        %v1509 = vpack.c.b16 %v1021, %v1013
        %v1510 = vpack.c.b16 %v1022, %v1014
        %v1511 = vpack.c.b16 %v1031, %v1023
        %v1512 = vpack.c.b16 %v1032, %v1024
        %v1513 = vpack.c.b16 %v1033, %v1025
        %v1514 = vpack.c.b16 %v1034, %v1026
        %v1515 = vpack.c.b16 %v1035, %v1027
        %v1516 = vpack.c.b16 %v1036, %v1028
        %v1517 = vpack.c.b16 %v1037, %v1029
        %v1518 = vpack.c.b16 %v1038, %v1030
        %v1519 = vpack.c.b16 %v1047, %v1039
        %v1520 = vpack.c.b16 %v1048, %v1040
        %v1521 = vpack.c.b16 %v1049, %v1041
        %v1522 = vpack.c.b16 %v1050, %v1042
        %v1523 = vpack.c.b16 %v1051, %v1043
        %v1524 = vpack.c.b16 %v1052, %v1044
        %v1525 = vpack.c.b16 %v1053, %v1045
        %v1526 = vpack.c.b16 %v1054, %v1046
        %v1527 = vpack.c.b16 %v1063, %v1055
        %v1528 = vpack.c.b16 %v1064, %v1056
        %v1529 = vpack.c.b16 %v1065, %v1057
        %v1530 = vpack.c.b16 %v1066, %v1058
        %v1531 = vpack.c.b16 %v1067, %v1059
        %v1532 = vpack.c.b16 %v1068, %v1060
        %v1533 = vpack.c.b16 %v1069, %v1061
        %v1534 = vpack.c.b16 %v1070, %v1062
        %v1535 = vpack.c.b16 %v1079, %v1071
        %v1536 = vpack.c.b16 %v1080, %v1072
        %v1537 = vpack.c.b16 %v1081, %v1073
        %v1538 = vpack.c.b16 %v1082, %v1074
        %v1539 = vpack.c.b16 %v1083, %v1075
        %v1540 = vpack.c.b16 %v1084, %v1076
        %v1541 = vpack.c.b16 %v1085, %v1077
        %v1542 = vpack.c.b16 %v1086, %v1078
        %v1543 = vpack.c.b16 %v1095, %v1087
        %v1544 = vpack.c.b16 %v1096, %v1088
        %v1545 = vpack.c.b16 %v1097, %v1089
        %v1546 = vpack.c.b16 %v1098, %v1090
        %v1547 = vpack.c.b16 %v1099, %v1091
        %v1548 = vpack.c.b16 %v1100, %v1092
        %v1549 = vpack.c.b16 %v1101, %v1093
        %v1550 = vpack.c.b16 %v1102, %v1094
        %v1551 = vpack.c.b16 %v1111, %v1103
        %v1552 = vpack.c.b16 %v1112, %v1104
        %v1553 = vpack.c.b16 %v1113, %v1105
        %v1554 = vpack.c.b16 %v1114, %v1106
        %v1555 = vpack.c.b16 %v1115, %v1107
        %v1556 = vpack.c.b16 %v1116, %v1108
        %v1557 = vpack.c.b16 %v1117, %v1109
        %v1558 = vpack.c.b16 %v1118, %v1110
        %v1559 = vpack.c.b16 %v1127, %v1119
        %v1560 = vpack.c.b16 %v1128, %v1120
        %v1561 = vpack.c.b16 %v1129, %v1121
        %v1562 = vpack.c.b16 %v1130, %v1122
        %v1563 = vpack.c.b16 %v1131, %v1123
        %v1564 = vpack.c.b16 %v1132, %v1124
        %v1565 = vpack.c.b16 %v1133, %v1125
        %v1566 = vpack.c.b16 %v1134, %v1126
        %v1567 = vpack.c.b16 %v1143, %v1135
        %v1568 = vpack.c.b16 %v1144, %v1136
        %v1569 = vpack.c.b16 %v1145, %v1137
        %v1570 = vpack.c.b16 %v1146, %v1138
        %v1571 = vpack.c.b16 %v1147, %v1139
        %v1572 = vpack.c.b16 %v1148, %v1140
        %v1573 = vpack.c.b16 %v1149, %v1141
        %v1574 = vpack.c.b16 %v1150, %v1142
        %v1575 = vpack.c.b16 %v1159, %v1151
        %v1576 = vpack.c.b16 %v1160, %v1152
        %v1577 = vpack.c.b16 %v1161, %v1153
        %v1578 = vpack.c.b16 %v1162, %v1154
        %v1579 = vpack.c.b16 %v1163, %v1155
        %v1580 = vpack.c.b16 %v1164, %v1156
        %v1581 = vpack.c.b16 %v1165, %v1157
        %v1582 = vpack.c.b16 %v1166, %v1158
        %v1583 = vpack.c.b16 %v1175, %v1167
        %v1584 = vpack.c.b16 %v1176, %v1168
        %v1585 = vpack.c.b16 %v1177, %v1169
        %v1586 = vpack.c.b16 %v1178, %v1170
        %v1587 = vpack.c.b16 %v1179, %v1171
        %v1588 = vpack.c.b16 %v1180, %v1172
        %v1589 = vpack.c.b16 %v1181, %v1173
        %v1590 = vpack.c.b16 %v1182, %v1174
        %v1591 = vpack.c.b16 %v1191, %v1183
        %v1592 = vpack.c.b16 %v1192, %v1184
        %v1593 = vpack.c.b16 %v1193, %v1185
        %v1594 = vpack.c.b16 %v1194, %v1186
        %v1595 = vpack.c.b16 %v1195, %v1187
        %v1596 = vpack.c.b16 %v1196, %v1188
        %v1597 = vpack.c.b16 %v1197, %v1189
        %v1598 = vpack.c.b16 %v1198, %v1190
        %v1599 = vpack.c.b16 %v1207, %v1199
        %v1600 = vpack.c.b16 %v1208, %v1200
        %v1601 = vpack.c.b16 %v1209, %v1201
        %v1602 = vpack.c.b16 %v1210, %v1202
        %v1603 = vpack.c.b16 %v1211, %v1203
        %v1604 = vpack.c.b16 %v1212, %v1204
        %v1605 = vpack.c.b16 %v1213, %v1205
        %v1606 = vpack.c.b16 %v1214, %v1206
        %v1607 = vpack.c.b16 %v1223, %v1215
        %v1608 = vpack.c.b16 %v1224, %v1216
        %v1609 = vpack.c.b16 %v1225, %v1217
        %v1610 = vpack.c.b16 %v1226, %v1218
        %v1611 = vpack.c.b16 %v1227, %v1219
        %v1612 = vpack.c.b16 %v1228, %v1220
        %v1613 = vpack.c.b16 %v1229, %v1221
        %v1614 = vpack.c.b16 %v1230, %v1222
        %v1615 = vpack.c.b16 %v1239, %v1231
        %v1616 = vpack.c.b16 %v1240, %v1232
        %v1617 = vpack.c.b16 %v1241, %v1233
        %v1618 = vpack.c.b16 %v1242, %v1234
        %v1619 = vpack.c.b16 %v1243, %v1235
        %v1620 = vpack.c.b16 %v1244, %v1236
        %v1621 = vpack.c.b16 %v1245, %v1237
        %v1622 = vpack.c.b16 %v1246, %v1238
        %v1623 = vpack.c.b16 %v1255, %v1247
        %v1624 = vpack.c.b16 %v1256, %v1248
        %v1625 = vpack.c.b16 %v1257, %v1249
        %v1626 = vpack.c.b16 %v1258, %v1250
        %v1627 = vpack.c.b16 %v1259, %v1251
        %v1628 = vpack.c.b16 %v1260, %v1252
        %v1629 = vpack.c.b16 %v1261, %v1253
        %v1630 = vpack.c.b16 %v1262, %v1254
        %v1631 = vpack.c.b16 %v1271, %v1263
        %v1632 = vpack.c.b16 %v1272, %v1264
        %v1633 = vpack.c.b16 %v1273, %v1265
        %v1634 = vpack.c.b16 %v1274, %v1266
        %v1635 = vpack.c.b16 %v1275, %v1267
        %v1636 = vpack.c.b16 %v1276, %v1268
        %v1637 = vpack.c.b16 %v1277, %v1269
        %v1638 = vpack.c.b16 %v1278, %v1270
        %v1639 = vpack.c.b16 %v1287, %v1279
        %v1640 = vpack.c.b16 %v1288, %v1280
        %v1641 = vpack.c.b16 %v1289, %v1281
        %v1642 = vpack.c.b16 %v1290, %v1282
        %v1643 = vpack.c.b16 %v1291, %v1283
        %v1644 = vpack.c.b16 %v1292, %v1284
        %v1645 = vpack.c.b16 %v1293, %v1285
        %v1646 = vpack.c.b16 %v1294, %v1286
        %v1647 = vpack.c.b16 %v1303, %v1295
        %v1648 = vpack.c.b16 %v1304, %v1296
        %v1649 = vpack.c.b16 %v1305, %v1297
        %v1650 = vpack.c.b16 %v1306, %v1298
        %v1651 = vpack.c.b16 %v1307, %v1299
        %v1652 = vpack.c.b16 %v1308, %v1300
        %v1653 = vpack.c.b16 %v1309, %v1301
        %v1654 = vpack.c.b16 %v1310, %v1302
        %v1655 = vpack.c.b16 %v1319, %v1311
        %v1656 = vpack.c.b16 %v1320, %v1312
        %v1657 = vpack.c.b16 %v1321, %v1313
        %v1658 = vpack.c.b16 %v1322, %v1314
        %v1659 = vpack.c.b16 %v1323, %v1315
        %v1660 = vpack.c.b16 %v1324, %v1316
        %v1661 = vpack.c.b16 %v1325, %v1317
        %v1662 = vpack.c.b16 %v1326, %v1318
        %v1663 = vpack.c.b16 %v1335, %v1327
        %v1664 = vpack.c.b16 %v1336, %v1328
        %v1665 = vpack.c.b16 %v1337, %v1329
        %v1666 = vpack.c.b16 %v1338, %v1330
        %v1667 = vpack.c.b16 %v1339, %v1331
        %v1668 = vpack.c.b16 %v1340, %v1332
        %v1669 = vpack.c.b16 %v1341, %v1333
        %v1670 = vpack.c.b16 %v1342, %v1334
        %v1671 = vpack.c.b16 %v1351, %v1343
        %v1672 = vpack.c.b16 %v1352, %v1344
        %v1673 = vpack.c.b16 %v1353, %v1345
        %v1674 = vpack.c.b16 %v1354, %v1346
        %v1675 = vpack.c.b16 %v1355, %v1347
        %v1676 = vpack.c.b16 %v1356, %v1348
        %v1677 = vpack.c.b16 %v1357, %v1349
        %v1678 = vpack.c.b16 %v1358, %v1350
        %v1679 = vpack.c.b16 %v1367, %v1359
        %v1680 = vpack.c.b16 %v1368, %v1360
        %v1681 = vpack.c.b16 %v1369, %v1361
        %v1682 = vpack.c.b16 %v1370, %v1362
        %v1683 = vpack.c.b16 %v1371, %v1363
        %v1684 = vpack.c.b16 %v1372, %v1364
        %v1685 = vpack.c.b16 %v1373, %v1365
        %v1686 = vpack.c.b16 %v1374, %v1366
        %v1687 = vpack.c.b16 %v1383, %v1375
        %v1688 = vpack.c.b16 %v1384, %v1376
        %v1689 = vpack.c.b16 %v1385, %v1377
        %v1690 = vpack.c.b16 %v1386, %v1378
        %v1691 = vpack.c.b16 %v1387, %v1379
        %v1692 = vpack.c.b16 %v1388, %v1380
        %v1693 = vpack.c.b16 %v1389, %v1381
        %v1694 = vpack.c.b16 %v1390, %v1382
        %v1695 = vpack.c.b16 %v1399, %v1391
        %v1696 = vpack.c.b16 %v1400, %v1392
        %v1697 = vpack.c.b16 %v1401, %v1393
        %v1698 = vpack.c.b16 %v1402, %v1394
        %v1699 = vpack.c.b16 %v1403, %v1395
        %v1700 = vpack.c.b16 %v1404, %v1396
        %v1701 = vpack.c.b16 %v1405, %v1397
        %v1702 = vpack.c.b16 %v1406, %v1398
        %v1703 = vpack.c.b16 %v1415, %v1407
        %v1704 = vpack.c.b16 %v1416, %v1408
        %v1705 = vpack.c.b16 %v1417, %v1409
        %v1706 = vpack.c.b16 %v1418, %v1410
        %v1707 = vpack.c.b16 %v1419, %v1411
        %v1708 = vpack.c.b16 %v1420, %v1412
        %v1709 = vpack.c.b16 %v1421, %v1413
        %v1710 = vpack.c.b16 %v1422, %v1414
        %v1711 = vpack.c.b16 %v1431, %v1423
        %v1712 = vpack.c.b16 %v1432, %v1424
        %v1713 = vpack.c.b16 %v1433, %v1425
        %v1714 = vpack.c.b16 %v1434, %v1426
        %v1715 = vpack.c.b16 %v1435, %v1427
        %v1716 = vpack.c.b16 %v1436, %v1428
        %v1717 = vpack.c.b16 %v1437, %v1429
        %v1718 = vpack.c.b16 %v1438, %v1430
        %v1719 = vpack.c.b16 %v1447, %v1439
        %v1720 = vpack.c.b16 %v1448, %v1440
        %v1721 = vpack.c.b16 %v1449, %v1441
        %v1722 = vpack.c.b16 %v1450, %v1442
        %v1723 = vpack.c.b16 %v1451, %v1443
        %v1724 = vpack.c.b16 %v1452, %v1444
        %v1725 = vpack.c.b16 %v1453, %v1445
        %v1726 = vpack.c.b16 %v1454, %v1446
        %v1727 = vpack.c.b16 %v1463, %v1455
        %v1728 = vpack.c.b16 %v1464, %v1456
        %v1729 = vpack.c.b16 %v1465, %v1457
        %v1730 = vpack.c.b16 %v1466, %v1458
        %v1731 = vpack.c.b16 %v1467, %v1459
        %v1732 = vpack.c.b16 %v1468, %v1460
        %v1733 = vpack.c.b16 %v1469, %v1461
        %v1734 = vpack.c.b16 %v1470, %v1462
        %v1735 = vpack.c.b16 %v1479, %v1471
        %v1736 = vpack.c.b16 %v1480, %v1472
        %v1737 = vpack.c.b16 %v1481, %v1473
        %v1738 = vpack.c.b16 %v1482, %v1474
        %v1739 = vpack.c.b16 %v1483, %v1475
        %v1740 = vpack.c.b16 %v1484, %v1476
        %v1741 = vpack.c.b16 %v1485, %v1477
        %v1742 = vpack.c.b16 %v1486, %v1478
        %1999 = vmatprep.subr.bf16.mxu0 %v1488
        %2000 = vmatpush1.bf16.msra.mxu0 %v1487
        %2001 = vmatprep.subr.bf16.mxu0 %v1496
        %2002 = vmatpush1.bf16.msra.mxu0 %v1495
        %2003 = vmatprep.subr.bf16.mxu0 %v1504
        %2004 = vmatpush1.bf16.msra.mxu0 %v1503
        %2005 = vmatprep.subr.bf16.mxu0 %v1512
        %2006 = vmatpush1.bf16.msra.mxu0 %v1511
        %2007 = vmatprep.subr.bf16.mxu0 %v1520
        %2008 = vmatpush1.bf16.msra.mxu0 %v1519
        %2009 = vmatprep.subr.bf16.mxu0 %v1528
        %2010 = vmatpush1.bf16.msra.mxu0 %v1527
        %2011 = vmatprep.subr.bf16.mxu0 %v1536
        %2012 = vmatpush1.bf16.msra.mxu0 %v1535
        %2013 = vmatprep.subr.bf16.mxu0 %v1544
        %2014 = vmatpush1.bf16.msra.mxu0 %v1543
        %2015 = vmatprep.subr.bf16.mxu0 %v1552
        %2016 = vmatpush1.bf16.msra.mxu0 %v1551
        %2017 = vmatprep.subr.bf16.mxu0 %v1560
        %2018 = vmatpush1.bf16.msra.mxu0 %v1559
        %2019 = vmatprep.subr.bf16.mxu0 %v1568
        %2020 = vmatpush1.bf16.msra.mxu0 %v1567
        %2021 = vmatprep.subr.bf16.mxu0 %v1576
        %2022 = vmatpush1.bf16.msra.mxu0 %v1575
        %2023 = vmatprep.subr.bf16.mxu0 %v1584
        %2024 = vmatpush1.bf16.msra.mxu0 %v1583
        %2025 = vmatprep.subr.bf16.mxu0 %v1592
        %2026 = vmatpush1.bf16.msra.mxu0 %v1591
        %2027 = vmatprep.subr.bf16.mxu0 %v1600
        %2028 = vmatpush1.bf16.msra.mxu0 %v1599
        %2029 = vmatprep.subr.bf16.mxu0 %v1608
        %2030 = vmatpush1.bf16.msra.mxu0 %v1607
        %2031 = vmatprep.mubr.bf16.mxu0 %v414
        %2032 = vmatmul.mubr.bf16.gmra.mrb[0].mxu0 %v413
        %v2033 = vpop.f32.mrb[0].mxu0
        %v2034 = vadd.f32 %v682, %v2033
        %v2035 = vpop.f32.mrb[0].mxu0
        %v2036 = vadd.f32 %v686, %v2035
        %v2037 = vpop.f32.mrb[0].mxu0
        %v2038 = vadd.f32 %v682, %v2037
        %v2039 = vpop.f32.mrb[0].mxu0
        %v2040 = vadd.f32 %v686, %v2039
        %2041 = vmatprep.mubr.bf16.mxu0 %v418
        %2042 = vmatmul.mubr.bf16.gmra.mrb[0].mxu0 %v417
        %v2043 = vpop.f32.mrb[0].mxu0
        %v2044 = vadd.f32 %v682, %v2043
        %v2045 = vpop.f32.mrb[0].mxu0
        %v2046 = vadd.f32 %v686, %v2045
        %v2047 = vpop.f32.mrb[0].mxu0
        %v2048 = vadd.f32 %v682, %v2047
        %v2049 = vpop.f32.mrb[0].mxu0
        %v2050 = vadd.f32 %v686, %v2049
        %2051 = vdwg.mxu0
        %2052 = vmatprep.subr.bf16.mxu0 %v1616
        %2053 = vmatpush1.bf16.msra.mxu0 %v1615
        %2054 = vmatprep.subr.bf16.mxu0 %v1624
        %2055 = vmatpush1.bf16.msra.mxu0 %v1623
        %2056 = vmatprep.subr.bf16.mxu0 %v1632
        %2057 = vmatpush1.bf16.msra.mxu0 %v1631
        %2058 = vmatprep.subr.bf16.mxu0 %v1640
        %2059 = vmatpush1.bf16.msra.mxu0 %v1639
        %2060 = vmatprep.subr.bf16.mxu0 %v1648
        %2061 = vmatpush1.bf16.msra.mxu0 %v1647
        %2062 = vmatprep.subr.bf16.mxu0 %v1656
        %2063 = vmatpush1.bf16.msra.mxu0 %v1655
        %2064 = vmatprep.subr.bf16.mxu0 %v1664
        %2065 = vmatpush1.bf16.msra.mxu0 %v1663
        %2066 = vmatprep.subr.bf16.mxu0 %v1672
        %2067 = vmatpush1.bf16.msra.mxu0 %v1671
        %2068 = vmatprep.subr.bf16.mxu0 %v1680
        %2069 = vmatpush1.bf16.msra.mxu0 %v1679
        %2070 = vmatprep.subr.bf16.mxu0 %v1688
        %2071 = vmatpush1.bf16.msra.mxu0 %v1687
        %2072 = vmatprep.subr.bf16.mxu0 %v1696
        %2073 = vmatpush1.bf16.msra.mxu0 %v1695
        %2074 = vmatprep.subr.bf16.mxu0 %v1704
        %2075 = vmatpush1.bf16.msra.mxu0 %v1703
        %2076 = vmatprep.subr.bf16.mxu0 %v1712
        %2077 = vmatpush1.bf16.msra.mxu0 %v1711
        %2078 = vmatprep.subr.bf16.mxu0 %v1720
        %2079 = vmatpush1.bf16.msra.mxu0 %v1719
        %2080 = vmatprep.subr.bf16.mxu0 %v1728
        %2081 = vmatpush1.bf16.msra.mxu0 %v1727
        %2082 = vmatprep.subr.bf16.mxu0 %v1736
        %2083 = vmatpush1.bf16.msra.mxu0 %v1735
        %2084 = vmatprep.mubr.bf16.mxu0 %v416
        %2085 = vmatmul.mubr.bf16.gmra.mrb[0].mxu0 %v415
        %v2086 = vpop.f32.mrb[0].mxu0
        %v2087 = vadd.f32 %v2034, %v2086
        %v2088 = vpop.f32.mrb[0].mxu0
        %v2089 = vadd.f32 %v2036, %v2088
        %v2090 = vpop.f32.mrb[0].mxu0
        %v2091 = vadd.f32 %v2038, %v2090
        %v2092 = vpop.f32.mrb[0].mxu0
        %v2093 = vadd.f32 %v2040, %v2092
        %2094 = vmatprep.mubr.bf16.mxu0 %v420
        %2095 = vmatmul.mubr.bf16.gmra.mrb[0].mxu0 %v419
        %v2096 = vpop.f32.mrb[0].mxu0
        %v2097 = vadd.f32 %v2044, %v2096
        %v2098 = vpop.f32.mrb[0].mxu0
        %v2099 = vadd.f32 %v2046, %v2098
        %v2100 = vpop.f32.mrb[0].mxu0
        %v2101 = vadd.f32 %v2048, %v2100
        %v2102 = vpop.f32.mrb[0].mxu0
        %v2103 = vadd.f32 %v2050, %v2102
        %2104 = vdwg.mxu0
        %2105 = vmatprep.subr.bf16.mxu0 %v1490
        %2106 = vmatpush1.bf16.msra.mxu0 %v1489
        %2107 = vmatprep.subr.bf16.mxu0 %v1498
        %2108 = vmatpush1.bf16.msra.mxu0 %v1497
        %2109 = vmatprep.subr.bf16.mxu0 %v1506
        %2110 = vmatpush1.bf16.msra.mxu0 %v1505
        %2111 = vmatprep.subr.bf16.mxu0 %v1514
        %2112 = vmatpush1.bf16.msra.mxu0 %v1513
        %2113 = vmatprep.subr.bf16.mxu0 %v1522
        %2114 = vmatpush1.bf16.msra.mxu0 %v1521
        %2115 = vmatprep.subr.bf16.mxu0 %v1530
        %2116 = vmatpush1.bf16.msra.mxu0 %v1529
        %2117 = vmatprep.subr.bf16.mxu0 %v1538
        %2118 = vmatpush1.bf16.msra.mxu0 %v1537
        %2119 = vmatprep.subr.bf16.mxu0 %v1546
        %2120 = vmatpush1.bf16.msra.mxu0 %v1545
        %2121 = vmatprep.subr.bf16.mxu0 %v1554
        %2122 = vmatpush1.bf16.msra.mxu0 %v1553
        %2123 = vmatprep.subr.bf16.mxu0 %v1562
        %2124 = vmatpush1.bf16.msra.mxu0 %v1561
        %2125 = vmatprep.subr.bf16.mxu0 %v1570
        %2126 = vmatpush1.bf16.msra.mxu0 %v1569
        %2127 = vmatprep.subr.bf16.mxu0 %v1578
        %2128 = vmatpush1.bf16.msra.mxu0 %v1577
        %2129 = vmatprep.subr.bf16.mxu0 %v1586
        %2130 = vmatpush1.bf16.msra.mxu0 %v1585
        %2131 = vmatprep.subr.bf16.mxu0 %v1594
        %2132 = vmatpush1.bf16.msra.mxu0 %v1593
        %2133 = vmatprep.subr.bf16.mxu0 %v1602
        %2134 = vmatpush1.bf16.msra.mxu0 %v1601
        %2135 = vmatprep.subr.bf16.mxu0 %v1610
        %2136 = vmatpush1.bf16.msra.mxu0 %v1609
        %2137 = vmatprep.mubr.bf16.mxu0 %v414
        %2138 = vmatmul.mubr.bf16.gmra.mrb[0].mxu0 %v413
        %v2139 = vpop.f32.mrb[0].mxu0
        %v2140 = vadd.f32 %v690, %v2139
        %v2141 = vpop.f32.mrb[0].mxu0
        %v2142 = vadd.f32 %v694, %v2141
        %v2143 = vpop.f32.mrb[0].mxu0
        %v2144 = vadd.f32 %v690, %v2143
        %v2145 = vpop.f32.mrb[0].mxu0
        %v2146 = vadd.f32 %v694, %v2145
        %2147 = vmatprep.mubr.bf16.mxu0 %v418
        %2148 = vmatmul.mubr.bf16.gmra.mrb[0].mxu0 %v417
        %v2149 = vpop.f32.mrb[0].mxu0
        %v2150 = vadd.f32 %v690, %v2149
        %v2151 = vpop.f32.mrb[0].mxu0
        %v2152 = vadd.f32 %v694, %v2151
        %v2153 = vpop.f32.mrb[0].mxu0
        %v2154 = vadd.f32 %v690, %v2153
        %v2155 = vpop.f32.mrb[0].mxu0
        %v2156 = vadd.f32 %v694, %v2155
        %2157 = vdwg.mxu0
        %2158 = vmatprep.subr.bf16.mxu0 %v1618
        %2159 = vmatpush1.bf16.msra.mxu0 %v1617
        %2160 = vmatprep.subr.bf16.mxu0 %v1626
        %2161 = vmatpush1.bf16.msra.mxu0 %v1625
        %2162 = vmatprep.subr.bf16.mxu0 %v1634
        %2163 = vmatpush1.bf16.msra.mxu0 %v1633
        %2164 = vmatprep.subr.bf16.mxu0 %v1642
        %2165 = vmatpush1.bf16.msra.mxu0 %v1641
        %2166 = vmatprep.subr.bf16.mxu0 %v1650
        %2167 = vmatpush1.bf16.msra.mxu0 %v1649
        %2168 = vmatprep.subr.bf16.mxu0 %v1658
        %2169 = vmatpush1.bf16.msra.mxu0 %v1657
        %2170 = vmatprep.subr.bf16.mxu0 %v1666
        %2171 = vmatpush1.bf16.msra.mxu0 %v1665
        %2172 = vmatprep.subr.bf16.mxu0 %v1674
        %2173 = vmatpush1.bf16.msra.mxu0 %v1673
        %2174 = vmatprep.subr.bf16.mxu0 %v1682
        %2175 = vmatpush1.bf16.msra.mxu0 %v1681
        %2176 = vmatprep.subr.bf16.mxu0 %v1690
        %2177 = vmatpush1.bf16.msra.mxu0 %v1689
        %2178 = vmatprep.subr.bf16.mxu0 %v1698
        %2179 = vmatpush1.bf16.msra.mxu0 %v1697
        %2180 = vmatprep.subr.bf16.mxu0 %v1706
        %2181 = vmatpush1.bf16.msra.mxu0 %v1705
        %2182 = vmatprep.subr.bf16.mxu0 %v1714
        %2183 = vmatpush1.bf16.msra.mxu0 %v1713
        %2184 = vmatprep.subr.bf16.mxu0 %v1722
        %2185 = vmatpush1.bf16.msra.mxu0 %v1721
        %2186 = vmatprep.subr.bf16.mxu0 %v1730
        %2187 = vmatpush1.bf16.msra.mxu0 %v1729
        %2188 = vmatprep.subr.bf16.mxu0 %v1738
        %2189 = vmatpush1.bf16.msra.mxu0 %v1737
        %2190 = vmatprep.mubr.bf16.mxu0 %v416
        %2191 = vmatmul.mubr.bf16.gmra.mrb[0].mxu0 %v415
        %v2192 = vpop.f32.mrb[0].mxu0
        %v2193 = vadd.f32 %v2140, %v2192
        %v2194 = vpop.f32.mrb[0].mxu0
        %v2195 = vadd.f32 %v2142, %v2194
        %v2196 = vpop.f32.mrb[0].mxu0
        %v2197 = vadd.f32 %v2144, %v2196
        %v2198 = vpop.f32.mrb[0].mxu0
        %v2199 = vadd.f32 %v2146, %v2198
        %2200 = vmatprep.mubr.bf16.mxu0 %v420
        %2201 = vmatmul.mubr.bf16.gmra.mrb[0].mxu0 %v419
        %v2202 = vpop.f32.mrb[0].mxu0
        %v2203 = vadd.f32 %v2150, %v2202
        %v2204 = vpop.f32.mrb[0].mxu0
        %v2205 = vadd.f32 %v2152, %v2204
        %v2206 = vpop.f32.mrb[0].mxu0
        %v2207 = vadd.f32 %v2154, %v2206
        %v2208 = vpop.f32.mrb[0].mxu0
        %v2209 = vadd.f32 %v2156, %v2208
        %2210 = vdwg.mxu0
        %2211 = vmatprep.subr.bf16.mxu0 %v1492
        %2212 = vmatpush1.bf16.msra.mxu0 %v1491
        %2213 = vmatprep.subr.bf16.mxu0 %v1500
        %2214 = vmatpush1.bf16.msra.mxu0 %v1499
        %2215 = vmatprep.subr.bf16.mxu0 %v1508
        %2216 = vmatpush1.bf16.msra.mxu0 %v1507
        %2217 = vmatprep.subr.bf16.mxu0 %v1516
        %2218 = vmatpush1.bf16.msra.mxu0 %v1515
        %2219 = vmatprep.subr.bf16.mxu0 %v1524
        %2220 = vmatpush1.bf16.msra.mxu0 %v1523
        %2221 = vmatprep.subr.bf16.mxu0 %v1532
        %2222 = vmatpush1.bf16.msra.mxu0 %v1531
        %2223 = vmatprep.subr.bf16.mxu0 %v1540
        %2224 = vmatpush1.bf16.msra.mxu0 %v1539
        %2225 = vmatprep.subr.bf16.mxu0 %v1548
        %2226 = vmatpush1.bf16.msra.mxu0 %v1547
        %2227 = vmatprep.subr.bf16.mxu0 %v1556
        %2228 = vmatpush1.bf16.msra.mxu0 %v1555
        %2229 = vmatprep.subr.bf16.mxu0 %v1564
        %2230 = vmatpush1.bf16.msra.mxu0 %v1563
        %2231 = vmatprep.subr.bf16.mxu0 %v1572
        %2232 = vmatpush1.bf16.msra.mxu0 %v1571
        %2233 = vmatprep.subr.bf16.mxu0 %v1580
        %2234 = vmatpush1.bf16.msra.mxu0 %v1579
        %2235 = vmatprep.subr.bf16.mxu0 %v1588
        %2236 = vmatpush1.bf16.msra.mxu0 %v1587
        %2237 = vmatprep.subr.bf16.mxu0 %v1596
        %2238 = vmatpush1.bf16.msra.mxu0 %v1595
        %2239 = vmatprep.subr.bf16.mxu0 %v1604
        %2240 = vmatpush1.bf16.msra.mxu0 %v1603
        %2241 = vmatprep.subr.bf16.mxu0 %v1612
        %2242 = vmatpush1.bf16.msra.mxu0 %v1611
        %2243 = vmatprep.mubr.bf16.mxu0 %v414
        %2244 = vmatmul.mubr.bf16.gmra.mrb[0].mxu0 %v413
        %v2245 = vpop.f32.mrb[0].mxu0
        %v2246 = vadd.f32 %v698, %v2245
        %v2247 = vpop.f32.mrb[0].mxu0
        %v2248 = vadd.f32 %v702, %v2247
        %v2249 = vpop.f32.mrb[0].mxu0
        %v2250 = vadd.f32 %v698, %v2249
        %v2251 = vpop.f32.mrb[0].mxu0
        %v2252 = vadd.f32 %v702, %v2251
        %2253 = vmatprep.mubr.bf16.mxu0 %v418
        %2254 = vmatmul.mubr.bf16.gmra.mrb[0].mxu0 %v417
        %v2255 = vpop.f32.mrb[0].mxu0
        %v2256 = vadd.f32 %v698, %v2255
        %v2257 = vpop.f32.mrb[0].mxu0
        %v2258 = vadd.f32 %v702, %v2257
        %v2259 = vpop.f32.mrb[0].mxu0
        %v2260 = vadd.f32 %v698, %v2259
        %v2261 = vpop.f32.mrb[0].mxu0
        %v2262 = vadd.f32 %v702, %v2261
        %2263 = vdwg.mxu0
        %2264 = vmatprep.subr.bf16.mxu0 %v1620
        %2265 = vmatpush1.bf16.msra.mxu0 %v1619
        %2266 = vmatprep.subr.bf16.mxu0 %v1628
        %2267 = vmatpush1.bf16.msra.mxu0 %v1627
        %2268 = vmatprep.subr.bf16.mxu0 %v1636
        %2269 = vmatpush1.bf16.msra.mxu0 %v1635
        %2270 = vmatprep.subr.bf16.mxu0 %v1644
        %2271 = vmatpush1.bf16.msra.mxu0 %v1643
        %2272 = vmatprep.subr.bf16.mxu0 %v1652
        %2273 = vmatpush1.bf16.msra.mxu0 %v1651
        %2274 = vmatprep.subr.bf16.mxu0 %v1660
        %2275 = vmatpush1.bf16.msra.mxu0 %v1659
        %2276 = vmatprep.subr.bf16.mxu0 %v1668
        %2277 = vmatpush1.bf16.msra.mxu0 %v1667
        %2278 = vmatprep.subr.bf16.mxu0 %v1676
        %2279 = vmatpush1.bf16.msra.mxu0 %v1675
        %2280 = vmatprep.subr.bf16.mxu0 %v1684
        %2281 = vmatpush1.bf16.msra.mxu0 %v1683
        %2282 = vmatprep.subr.bf16.mxu0 %v1692
        %2283 = vmatpush1.bf16.msra.mxu0 %v1691
        %2284 = vmatprep.subr.bf16.mxu0 %v1700
        %2285 = vmatpush1.bf16.msra.mxu0 %v1699
        %2286 = vmatprep.subr.bf16.mxu0 %v1708
        %2287 = vmatpush1.bf16.msra.mxu0 %v1707
        %2288 = vmatprep.subr.bf16.mxu0 %v1716
        %2289 = vmatpush1.bf16.msra.mxu0 %v1715
        %2290 = vmatprep.subr.bf16.mxu0 %v1724
        %2291 = vmatpush1.bf16.msra.mxu0 %v1723
        %2292 = vmatprep.subr.bf16.mxu0 %v1732
        %2293 = vmatpush1.bf16.msra.mxu0 %v1731
        %2294 = vmatprep.subr.bf16.mxu0 %v1740
        %2295 = vmatpush1.bf16.msra.mxu0 %v1739
        %2296 = vmatprep.mubr.bf16.mxu0 %v416
        %2297 = vmatmul.mubr.bf16.gmra.mrb[0].mxu0 %v415
        %v2298 = vpop.f32.mrb[0].mxu0
        %v2299 = vadd.f32 %v2246, %v2298
        %v2300 = vpop.f32.mrb[0].mxu0
        %v2301 = vadd.f32 %v2248, %v2300
        %v2302 = vpop.f32.mrb[0].mxu0
        %v2303 = vadd.f32 %v2250, %v2302
        %v2304 = vpop.f32.mrb[0].mxu0
        %v2305 = vadd.f32 %v2252, %v2304
        %2306 = vmatprep.mubr.bf16.mxu0 %v420
        %2307 = vmatmul.mubr.bf16.gmra.mrb[0].mxu0 %v419
        %v2308 = vpop.f32.mrb[0].mxu0
        %v2309 = vadd.f32 %v2256, %v2308
        %v2310 = vpop.f32.mrb[0].mxu0
        %v2311 = vadd.f32 %v2258, %v2310
        %v2312 = vpop.f32.mrb[0].mxu0
        %v2313 = vadd.f32 %v2260, %v2312
        %v2314 = vpop.f32.mrb[0].mxu0
        %v2315 = vadd.f32 %v2262, %v2314
        %2316 = vdwg.mxu0
        %2317 = vmatprep.subr.bf16.mxu0 %v1494
        %2318 = vmatpush1.bf16.msra.mxu0 %v1493
        %2319 = vmatprep.subr.bf16.mxu0 %v1502
        %2320 = vmatpush1.bf16.msra.mxu0 %v1501
        %2321 = vmatprep.subr.bf16.mxu0 %v1510
        %2322 = vmatpush1.bf16.msra.mxu0 %v1509
        %2323 = vmatprep.subr.bf16.mxu0 %v1518
        %2324 = vmatpush1.bf16.msra.mxu0 %v1517
        %2325 = vmatprep.subr.bf16.mxu0 %v1526
        %2326 = vmatpush1.bf16.msra.mxu0 %v1525
        %2327 = vmatprep.subr.bf16.mxu0 %v1534
        %2328 = vmatpush1.bf16.msra.mxu0 %v1533
        %2329 = vmatprep.subr.bf16.mxu0 %v1542
        %2330 = vmatpush1.bf16.msra.mxu0 %v1541
        %2331 = vmatprep.subr.bf16.mxu0 %v1550
        %2332 = vmatpush1.bf16.msra.mxu0 %v1549
        %2333 = vmatprep.subr.bf16.mxu0 %v1558
        %2334 = vmatpush1.bf16.msra.mxu0 %v1557
        %2335 = vmatprep.subr.bf16.mxu0 %v1566
        %2336 = vmatpush1.bf16.msra.mxu0 %v1565
        %2337 = vmatprep.subr.bf16.mxu0 %v1574
        %2338 = vmatpush1.bf16.msra.mxu0 %v1573
        %2339 = vmatprep.subr.bf16.mxu0 %v1582
        %2340 = vmatpush1.bf16.msra.mxu0 %v1581
        %2341 = vmatprep.subr.bf16.mxu0 %v1590
        %2342 = vmatpush1.bf16.msra.mxu0 %v1589
        %2343 = vmatprep.subr.bf16.mxu0 %v1598
        %2344 = vmatpush1.bf16.msra.mxu0 %v1597
        %2345 = vmatprep.subr.bf16.mxu0 %v1606
        %2346 = vmatpush1.bf16.msra.mxu0 %v1605
        %2347 = vmatprep.subr.bf16.mxu0 %v1614
        %2348 = vmatpush1.bf16.msra.mxu0 %v1613
        %2349 = vmatprep.mubr.bf16.mxu0 %v414
        %2350 = vmatmul.mubr.bf16.gmra.mrb[0].mxu0 %v413
        %v2351 = vpop.f32.mrb[0].mxu0
        %v2352 = vadd.f32 %v706, %v2351
        %v2353 = vpop.f32.mrb[0].mxu0
        %v2354 = vadd.f32 %v710, %v2353
        %v2355 = vpop.f32.mrb[0].mxu0
        %v2356 = vadd.f32 %v706, %v2355
        %v2357 = vpop.f32.mrb[0].mxu0
        %v2358 = vadd.f32 %v710, %v2357
        %2359 = vmatprep.mubr.bf16.mxu0 %v418
        %2360 = vmatmul.mubr.bf16.gmra.mrb[0].mxu0 %v417
        %v2361 = vpop.f32.mrb[0].mxu0
        %v2362 = vadd.f32 %v706, %v2361
        %v2363 = vpop.f32.mrb[0].mxu0
        %v2364 = vadd.f32 %v710, %v2363
        %v2365 = vpop.f32.mrb[0].mxu0
        %v2366 = vadd.f32 %v706, %v2365
        %v2367 = vpop.f32.mrb[0].mxu0
        %v2368 = vadd.f32 %v710, %v2367
        %2369 = vdwg.mxu0
        %2370 = vmatprep.subr.bf16.mxu0 %v1622
        %2371 = vmatpush1.bf16.msra.mxu0 %v1621
        %2372 = vmatprep.subr.bf16.mxu0 %v1630
        %2373 = vmatpush1.bf16.msra.mxu0 %v1629
        %2374 = vmatprep.subr.bf16.mxu0 %v1638
        %2375 = vmatpush1.bf16.msra.mxu0 %v1637
        %2376 = vmatprep.subr.bf16.mxu0 %v1646
        %2377 = vmatpush1.bf16.msra.mxu0 %v1645
        %2378 = vmatprep.subr.bf16.mxu0 %v1654
        %2379 = vmatpush1.bf16.msra.mxu0 %v1653
        %2380 = vmatprep.subr.bf16.mxu0 %v1662
        %2381 = vmatpush1.bf16.msra.mxu0 %v1661
        %2382 = vmatprep.subr.bf16.mxu0 %v1670
        %2383 = vmatpush1.bf16.msra.mxu0 %v1669
        %2384 = vmatprep.subr.bf16.mxu0 %v1678
        %2385 = vmatpush1.bf16.msra.mxu0 %v1677
        %2386 = vmatprep.subr.bf16.mxu0 %v1686
        %2387 = vmatpush1.bf16.msra.mxu0 %v1685
        %2388 = vmatprep.subr.bf16.mxu0 %v1694
        %2389 = vmatpush1.bf16.msra.mxu0 %v1693
        %2390 = vmatprep.subr.bf16.mxu0 %v1702
        %2391 = vmatpush1.bf16.msra.mxu0 %v1701
        %2392 = vmatprep.subr.bf16.mxu0 %v1710
        %2393 = vmatpush1.bf16.msra.mxu0 %v1709
        %2394 = vmatprep.subr.bf16.mxu0 %v1718
        %2395 = vmatpush1.bf16.msra.mxu0 %v1717
        %2396 = vmatprep.subr.bf16.mxu0 %v1726
        %2397 = vmatpush1.bf16.msra.mxu0 %v1725
        %2398 = vmatprep.subr.bf16.mxu0 %v1734
        %2399 = vmatpush1.bf16.msra.mxu0 %v1733
        %2400 = vmatprep.subr.bf16.mxu0 %v1742
        %2401 = vmatpush1.bf16.msra.mxu0 %v1741
        %2402 = vmatprep.mubr.bf16.mxu0 %v416
        %2403 = vmatmul.mubr.bf16.gmra.mrb[0].mxu0 %v415
        %v2404 = vpop.f32.mrb[0].mxu0
        %v2405 = vadd.f32 %v2352, %v2404
        %v2406 = vpop.f32.mrb[0].mxu0
        %v2407 = vadd.f32 %v2354, %v2406
        %v2408 = vpop.f32.mrb[0].mxu0
        %v2409 = vadd.f32 %v2356, %v2408
        %v2410 = vpop.f32.mrb[0].mxu0
        %v2411 = vadd.f32 %v2358, %v2410
        %2412 = vmatprep.mubr.bf16.mxu0 %v420
        %2413 = vmatmul.mubr.bf16.gmra.mrb[0].mxu0 %v419
        %v2414 = vpop.f32.mrb[0].mxu0
        %v2415 = vadd.f32 %v2362, %v2414
        %v2416 = vpop.f32.mrb[0].mxu0
        %v2417 = vadd.f32 %v2364, %v2416
        %v2418 = vpop.f32.mrb[0].mxu0
        %v2419 = vadd.f32 %v2366, %v2418
        %v2420 = vpop.f32.mrb[0].mxu0
        %v2421 = vadd.f32 %v2368, %v2420
        %2422 = vdwg.mxu0
        %v2423 = vpack.c.bf16 %v2091, %v2087
        %v2424 = vpack.c.bf16 %v2093, %v2089
        %v2425 = vpack.c.bf16 %v2197, %v2193
        %v2426 = vpack.c.bf16 %v2199, %v2195
        %v2427 = vpack.c.bf16 %v2303, %v2299
        %v2428 = vpack.c.bf16 %v2305, %v2301
        %v2429 = vpack.c.bf16 %v2409, %v2405
        %v2430 = vpack.c.bf16 %v2411, %v2407
        %v2431 = vpack.c.bf16 %v2101, %v2097
        %v2432 = vpack.c.bf16 %v2103, %v2099
        %v2433 = vpack.c.bf16 %v2207, %v2203
        %v2434 = vpack.c.bf16 %v2209, %v2205
        %v2435 = vpack.c.bf16 %v2313, %v2309
        %v2436 = vpack.c.bf16 %v2315, %v2311
        %v2437 = vpack.c.bf16 %v2419, %v2415
        %v2438 = vpack.c.bf16 %v2421, %v2417
        %v2439 = vld [vmem:[#allocation10] sm:$0xf]
        %v2440 = vld [vmem:[#allocation10 + $0x4] sm:$0xf]
        %v2441 = vld [vmem:[#allocation10 + $0x8] sm:$0xf]
        %v2442 = vld [vmem:[#allocation10 + $0xc] sm:$0xf]
        %v2443 = vld [vmem:[#allocation10 + $0x10] sm:$0xf]
        %v2444 = vld [vmem:[#allocation10 + $0x14] sm:$0xf]
        %v2445 = vld [vmem:[#allocation10 + $0x18] sm:$0xf]
        %v2446 = vld [vmem:[#allocation10 + $0x1c] sm:$0xf]
        %v2447 = vld [vmem:[#allocation10 + $0x20] sm:$0xf]
        %v2448 = vld [vmem:[#allocation10 + $0x24] sm:$0xf]
        %v2449 = vld [vmem:[#allocation10 + $0x28] sm:$0xf]
        %v2450 = vld [vmem:[#allocation10 + $0x2c] sm:$0xf]
        %v2451 = vld [vmem:[#allocation10 + $0x30] sm:$0xf]
        %v2452 = vld [vmem:[#allocation10 + $0x34] sm:$0xf]
        %v2453 = vld [vmem:[#allocation10 + $0x38] sm:$0xf]
        %v2454 = vld [vmem:[#allocation10 + $0x3c] sm:$0xf]
        %v2455 = vld [vmem:[#allocation10 + $0x40] sm:$0xf]
        %v2456 = vld [vmem:[#allocation10 + $0x44] sm:$0xf]
        %v2457 = vld [vmem:[#allocation10 + $0x48] sm:$0xf]
        %v2458 = vld [vmem:[#allocation10 + $0x4c] sm:$0xf]
        %v2459 = vld [vmem:[#allocation10 + $0x50] sm:$0xf]
        %v2460 = vld [vmem:[#allocation10 + $0x54] sm:$0xf]
        %v2461 = vld [vmem:[#allocation10 + $0x58] sm:$0xf]
        %v2462 = vld [vmem:[#allocation10 + $0x5c] sm:$0xf]
        %v2463 = vld [vmem:[#allocation10 + $0x60] sm:$0xf]
        %v2464 = vld [vmem:[#allocation10 + $0x64] sm:$0xf]
        %v2465 = vld [vmem:[#allocation10 + $0x68] sm:$0xf]
        %v2466 = vld [vmem:[#allocation10 + $0x6c] sm:$0xf]
        %v2467 = vld [vmem:[#allocation10 + $0x70] sm:$0xf]
        %v2468 = vld [vmem:[#allocation10 + $0x74] sm:$0xf]
        %v2469 = vld [vmem:[#allocation10 + $0x78] sm:$0xf]
        %v2470 = vld [vmem:[#allocation10 + $0x7c] sm:$0xf]
        %v2471 = vld [vmem:[#allocation10 + $0x80] sm:$0xf]
        %v2472 = vld [vmem:[#allocation10 + $0x84] sm:$0xf]
        %v2473 = vld [vmem:[#allocation10 + $0x88] sm:$0xf]
        %v2474 = vld [vmem:[#allocation10 + $0x8c] sm:$0xf]
        %v2475 = vld [vmem:[#allocation10 + $0x90] sm:$0xf]
        %v2476 = vld [vmem:[#allocation10 + $0x94] sm:$0xf]
        %v2477 = vld [vmem:[#allocation10 + $0x98] sm:$0xf]
        %v2478 = vld [vmem:[#allocation10 + $0x9c] sm:$0xf]
        %v2479 = vld [vmem:[#allocation10 + $0xa0] sm:$0xf]
        %v2480 = vld [vmem:[#allocation10 + $0xa4] sm:$0xf]
        %v2481 = vld [vmem:[#allocation10 + $0xa8] sm:$0xf]
        %v2482 = vld [vmem:[#allocation10 + $0xac] sm:$0xf]
        %v2483 = vld [vmem:[#allocation10 + $0xb0] sm:$0xf]
        %v2484 = vld [vmem:[#allocation10 + $0xb4] sm:$0xf]
        %v2485 = vld [vmem:[#allocation10 + $0xb8] sm:$0xf]
        %v2486 = vld [vmem:[#allocation10 + $0xbc] sm:$0xf]
        %v2487 = vld [vmem:[#allocation10 + $0xc0] sm:$0xf]
        %v2488 = vld [vmem:[#allocation10 + $0xc4] sm:$0xf]
        %v2489 = vld [vmem:[#allocation10 + $0xc8] sm:$0xf]
        %v2490 = vld [vmem:[#allocation10 + $0xcc] sm:$0xf]
        %v2491 = vld [vmem:[#allocation10 + $0xd0] sm:$0xf]
        %v2492 = vld [vmem:[#allocation10 + $0xd4] sm:$0xf]
        %v2493 = vld [vmem:[#allocation10 + $0xd8] sm:$0xf]
        %v2494 = vld [vmem:[#allocation10 + $0xdc] sm:$0xf]
        %v2495 = vld [vmem:[#allocation10 + $0xe0] sm:$0xf]
        %v2496 = vld [vmem:[#allocation10 + $0xe4] sm:$0xf]
        %v2497 = vld [vmem:[#allocation10 + $0xe8] sm:$0xf]
        %v2498 = vld [vmem:[#allocation10 + $0xec] sm:$0xf]
        %v2499 = vld [vmem:[#allocation10 + $0xf0] sm:$0xf]
        %v2500 = vld [vmem:[#allocation10 + $0xf4] sm:$0xf]
        %v2501 = vld [vmem:[#allocation10 + $0xf8] sm:$0xf]
        %v2502 = vld [vmem:[#allocation10 + $0xfc] sm:$0xf]
        %v2503 = vld [vmem:[#allocation10 + $0x100] sm:$0xf]
        %v2504 = vld [vmem:[#allocation10 + $0x104] sm:$0xf]
        %v2505 = vld [vmem:[#allocation10 + $0x108] sm:$0xf]
        %v2506 = vld [vmem:[#allocation10 + $0x10c] sm:$0xf]
        %v2507 = vld [vmem:[#allocation10 + $0x110] sm:$0xf]
        %v2508 = vld [vmem:[#allocation10 + $0x114] sm:$0xf]
        %v2509 = vld [vmem:[#allocation10 + $0x118] sm:$0xf]
        %v2510 = vld [vmem:[#allocation10 + $0x11c] sm:$0xf]
        %v2511 = vld [vmem:[#allocation10 + $0x120] sm:$0xf]
        %v2512 = vld [vmem:[#allocation10 + $0x124] sm:$0xf]
        %v2513 = vld [vmem:[#allocation10 + $0x128] sm:$0xf]
        %v2514 = vld [vmem:[#allocation10 + $0x12c] sm:$0xf]
        %v2515 = vld [vmem:[#allocation10 + $0x130] sm:$0xf]
        %v2516 = vld [vmem:[#allocation10 + $0x134] sm:$0xf]
        %v2517 = vld [vmem:[#allocation10 + $0x138] sm:$0xf]
        %v2518 = vld [vmem:[#allocation10 + $0x13c] sm:$0xf]
        %v2519 = vld [vmem:[#allocation10 + $0x140] sm:$0xf]
        %v2520 = vld [vmem:[#allocation10 + $0x144] sm:$0xf]
        %v2521 = vld [vmem:[#allocation10 + $0x148] sm:$0xf]
        %v2522 = vld [vmem:[#allocation10 + $0x14c] sm:$0xf]
        %v2523 = vld [vmem:[#allocation10 + $0x150] sm:$0xf]
        %v2524 = vld [vmem:[#allocation10 + $0x154] sm:$0xf]
        %v2525 = vld [vmem:[#allocation10 + $0x158] sm:$0xf]
        %v2526 = vld [vmem:[#allocation10 + $0x15c] sm:$0xf]
        %v2527 = vld [vmem:[#allocation10 + $0x160] sm:$0xf]
        %v2528 = vld [vmem:[#allocation10 + $0x164] sm:$0xf]
        %v2529 = vld [vmem:[#allocation10 + $0x168] sm:$0xf]
        %v2530 = vld [vmem:[#allocation10 + $0x16c] sm:$0xf]
        %v2531 = vld [vmem:[#allocation10 + $0x170] sm:$0xf]
        %v2532 = vld [vmem:[#allocation10 + $0x174] sm:$0xf]
        %v2533 = vld [vmem:[#allocation10 + $0x178] sm:$0xf]
        %v2534 = vld [vmem:[#allocation10 + $0x17c] sm:$0xf]
        %v2535 = vld [vmem:[#allocation10 + $0x180] sm:$0xf]
        %v2536 = vld [vmem:[#allocation10 + $0x184] sm:$0xf]
        %v2537 = vld [vmem:[#allocation10 + $0x188] sm:$0xf]
        %v2538 = vld [vmem:[#allocation10 + $0x18c] sm:$0xf]
        %v2539 = vld [vmem:[#allocation10 + $0x190] sm:$0xf]
        %v2540 = vld [vmem:[#allocation10 + $0x194] sm:$0xf]
        %v2541 = vld [vmem:[#allocation10 + $0x198] sm:$0xf]
        %v2542 = vld [vmem:[#allocation10 + $0x19c] sm:$0xf]
        %v2543 = vld [vmem:[#allocation10 + $0x1a0] sm:$0xf]
        %v2544 = vld [vmem:[#allocation10 + $0x1a4] sm:$0xf]
        %v2545 = vld [vmem:[#allocation10 + $0x1a8] sm:$0xf]
        %v2546 = vld [vmem:[#allocation10 + $0x1ac] sm:$0xf]
        %v2547 = vld [vmem:[#allocation10 + $0x1b0] sm:$0xf]
        %v2548 = vld [vmem:[#allocation10 + $0x1b4] sm:$0xf]
        %v2549 = vld [vmem:[#allocation10 + $0x1b8] sm:$0xf]
        %v2550 = vld [vmem:[#allocation10 + $0x1bc] sm:$0xf]
        %v2551 = vld [vmem:[#allocation10 + $0x1c0] sm:$0xf]
        %v2552 = vld [vmem:[#allocation10 + $0x1c4] sm:$0xf]
        %v2553 = vld [vmem:[#allocation10 + $0x1c8] sm:$0xf]
        %v2554 = vld [vmem:[#allocation10 + $0x1cc] sm:$0xf]
        %v2555 = vld [vmem:[#allocation10 + $0x1d0] sm:$0xf]
        %v2556 = vld [vmem:[#allocation10 + $0x1d4] sm:$0xf]
        %v2557 = vld [vmem:[#allocation10 + $0x1d8] sm:$0xf]
        %v2558 = vld [vmem:[#allocation10 + $0x1dc] sm:$0xf]
        %v2559 = vld [vmem:[#allocation10 + $0x1e0] sm:$0xf]
        %v2560 = vld [vmem:[#allocation10 + $0x1e4] sm:$0xf]
        %v2561 = vld [vmem:[#allocation10 + $0x1e8] sm:$0xf]
        %v2562 = vld [vmem:[#allocation10 + $0x1ec] sm:$0xf]
        %v2563 = vld [vmem:[#allocation10 + $0x1f0] sm:$0xf]
        %v2564 = vld [vmem:[#allocation10 + $0x1f4] sm:$0xf]
        %v2565 = vld [vmem:[#allocation10 + $0x1f8] sm:$0xf]
        %v2566 = vld [vmem:[#allocation10 + $0x1fc] sm:$0xf]
        %v2695 = vunpack.c.l.b16 %v2439
        %v2696 = vunpack.c.l.b16 %v2440
        %v2697 = vunpack.c.l.b16 %v2441
        %v2698 = vunpack.c.l.b16 %v2442
        %v2699 = vunpack.c.l.b16 %v2443
        %v2700 = vunpack.c.l.b16 %v2444
        %v2701 = vunpack.c.l.b16 %v2445
        %v2702 = vunpack.c.l.b16 %v2446
        %v2703 = vunpack.c.l.b16 %v2447
        %v2704 = vunpack.c.l.b16 %v2448
        %v2705 = vunpack.c.l.b16 %v2449
        %v2706 = vunpack.c.l.b16 %v2450
        %v2707 = vunpack.c.l.b16 %v2451
        %v2708 = vunpack.c.l.b16 %v2452
        %v2709 = vunpack.c.l.b16 %v2453
        %v2710 = vunpack.c.l.b16 %v2454
        %v2711 = vunpack.c.l.b16 %v2455
        %v2712 = vunpack.c.l.b16 %v2456
        %v2713 = vunpack.c.l.b16 %v2457
        %v2714 = vunpack.c.l.b16 %v2458
        %v2715 = vunpack.c.l.b16 %v2459
        %v2716 = vunpack.c.l.b16 %v2460
        %v2717 = vunpack.c.l.b16 %v2461
        %v2718 = vunpack.c.l.b16 %v2462
        %v2719 = vunpack.c.l.b16 %v2463
        %v2720 = vunpack.c.l.b16 %v2464
        %v2721 = vunpack.c.l.b16 %v2465
        %v2722 = vunpack.c.l.b16 %v2466
        %v2723 = vunpack.c.l.b16 %v2467
        %v2724 = vunpack.c.l.b16 %v2468
        %v2725 = vunpack.c.l.b16 %v2469
        %v2726 = vunpack.c.l.b16 %v2470
        %v2727 = vunpack.c.l.b16 %v2471
        %v2728 = vunpack.c.l.b16 %v2472
        %v2729 = vunpack.c.l.b16 %v2473
        %v2730 = vunpack.c.l.b16 %v2474
        %v2731 = vunpack.c.l.b16 %v2475
        %v2732 = vunpack.c.l.b16 %v2476
        %v2733 = vunpack.c.l.b16 %v2477
        %v2734 = vunpack.c.l.b16 %v2478
        %v2735 = vunpack.c.l.b16 %v2479
        %v2736 = vunpack.c.l.b16 %v2480
        %v2737 = vunpack.c.l.b16 %v2481
        %v2738 = vunpack.c.l.b16 %v2482
        %v2739 = vunpack.c.l.b16 %v2483
        %v2740 = vunpack.c.l.b16 %v2484
        %v2741 = vunpack.c.l.b16 %v2485
        %v2742 = vunpack.c.l.b16 %v2486
        %v2743 = vunpack.c.l.b16 %v2487
        %v2744 = vunpack.c.l.b16 %v2488
        %v2745 = vunpack.c.l.b16 %v2489
        %v2746 = vunpack.c.l.b16 %v2490
        %v2747 = vunpack.c.l.b16 %v2491
        %v2748 = vunpack.c.l.b16 %v2492
        %v2749 = vunpack.c.l.b16 %v2493
        %v2750 = vunpack.c.l.b16 %v2494
        %v2751 = vunpack.c.l.b16 %v2495
        %v2752 = vunpack.c.l.b16 %v2496
        %v2753 = vunpack.c.l.b16 %v2497
        %v2754 = vunpack.c.l.b16 %v2498
        %v2755 = vunpack.c.l.b16 %v2499
        %v2756 = vunpack.c.l.b16 %v2500
        %v2757 = vunpack.c.l.b16 %v2501
        %v2758 = vunpack.c.l.b16 %v2502
        %v2759 = vunpack.c.l.b16 %v2503
        %v2760 = vunpack.c.l.b16 %v2504
        %v2761 = vunpack.c.l.b16 %v2505
        %v2762 = vunpack.c.l.b16 %v2506
        %v2763 = vunpack.c.l.b16 %v2507
        %v2764 = vunpack.c.l.b16 %v2508
        %v2765 = vunpack.c.l.b16 %v2509
        %v2766 = vunpack.c.l.b16 %v2510
        %v2767 = vunpack.c.l.b16 %v2511
        %v2768 = vunpack.c.l.b16 %v2512
        %v2769 = vunpack.c.l.b16 %v2513
        %v2770 = vunpack.c.l.b16 %v2514
        %v2771 = vunpack.c.l.b16 %v2515
        %v2772 = vunpack.c.l.b16 %v2516
        %v2773 = vunpack.c.l.b16 %v2517
        %v2774 = vunpack.c.l.b16 %v2518
        %v2775 = vunpack.c.l.b16 %v2519
        %v2776 = vunpack.c.l.b16 %v2520
        %v2777 = vunpack.c.l.b16 %v2521
        %v2778 = vunpack.c.l.b16 %v2522
        %v2779 = vunpack.c.l.b16 %v2523
        %v2780 = vunpack.c.l.b16 %v2524
        %v2781 = vunpack.c.l.b16 %v2525
        %v2782 = vunpack.c.l.b16 %v2526
        %v2783 = vunpack.c.l.b16 %v2527
        %v2784 = vunpack.c.l.b16 %v2528
        %v2785 = vunpack.c.l.b16 %v2529
        %v2786 = vunpack.c.l.b16 %v2530
        %v2787 = vunpack.c.l.b16 %v2531
        %v2788 = vunpack.c.l.b16 %v2532
        %v2789 = vunpack.c.l.b16 %v2533
        %v2790 = vunpack.c.l.b16 %v2534
        %v2791 = vunpack.c.l.b16 %v2535
        %v2792 = vunpack.c.l.b16 %v2536
        %v2793 = vunpack.c.l.b16 %v2537
        %v2794 = vunpack.c.l.b16 %v2538
        %v2795 = vunpack.c.l.b16 %v2539
        %v2796 = vunpack.c.l.b16 %v2540
        %v2797 = vunpack.c.l.b16 %v2541
        %v2798 = vunpack.c.l.b16 %v2542
        %v2799 = vunpack.c.l.b16 %v2543
        %v2800 = vunpack.c.l.b16 %v2544
        %v2801 = vunpack.c.l.b16 %v2545
        %v2802 = vunpack.c.l.b16 %v2546
        %v2803 = vunpack.c.l.b16 %v2547
        %v2804 = vunpack.c.l.b16 %v2548
        %v2805 = vunpack.c.l.b16 %v2549
        %v2806 = vunpack.c.l.b16 %v2550
        %v2807 = vunpack.c.l.b16 %v2551
        %v2808 = vunpack.c.l.b16 %v2552
        %v2809 = vunpack.c.l.b16 %v2553
        %v2810 = vunpack.c.l.b16 %v2554
        %v2811 = vunpack.c.l.b16 %v2555
        %v2812 = vunpack.c.l.b16 %v2556
        %v2813 = vunpack.c.l.b16 %v2557
        %v2814 = vunpack.c.l.b16 %v2558
        %v2815 = vunpack.c.l.b16 %v2559
        %v2816 = vunpack.c.l.b16 %v2560
        %v2817 = vunpack.c.l.b16 %v2561
        %v2818 = vunpack.c.l.b16 %v2562
        %v2819 = vunpack.c.l.b16 %v2563
        %v2820 = vunpack.c.l.b16 %v2564
        %v2821 = vunpack.c.l.b16 %v2565
        %v2822 = vunpack.c.l.b16 %v2566
        %v2823 = vpack.c.b16 %v2696, %v2695
        %v2824 = vpack.c.b16 %v2698, %v2697
        %v2825 = vpack.c.b16 %v2700, %v2699
        %v2826 = vpack.c.b16 %v2702, %v2701
        %v2827 = vpack.c.b16 %v2704, %v2703
        %v2828 = vpack.c.b16 %v2706, %v2705
        %v2829 = vpack.c.b16 %v2708, %v2707
        %v2830 = vpack.c.b16 %v2710, %v2709
        %v2831 = vpack.c.b16 %v2712, %v2711
        %v2832 = vpack.c.b16 %v2714, %v2713
        %v2833 = vpack.c.b16 %v2716, %v2715
        %v2834 = vpack.c.b16 %v2718, %v2717
        %v2835 = vpack.c.b16 %v2720, %v2719
        %v2836 = vpack.c.b16 %v2722, %v2721
        %v2837 = vpack.c.b16 %v2724, %v2723
        %v2838 = vpack.c.b16 %v2726, %v2725
        %v2839 = vpack.c.b16 %v2728, %v2727
        %v2840 = vpack.c.b16 %v2730, %v2729
        %v2841 = vpack.c.b16 %v2732, %v2731
        %v2842 = vpack.c.b16 %v2734, %v2733
        %v2843 = vpack.c.b16 %v2736, %v2735
        %v2844 = vpack.c.b16 %v2738, %v2737
        %v2845 = vpack.c.b16 %v2740, %v2739
        %v2846 = vpack.c.b16 %v2742, %v2741
        %v2847 = vpack.c.b16 %v2744, %v2743
        %v2848 = vpack.c.b16 %v2746, %v2745
        %v2849 = vpack.c.b16 %v2748, %v2747
        %v2850 = vpack.c.b16 %v2750, %v2749
        %v2851 = vpack.c.b16 %v2752, %v2751
        %v2852 = vpack.c.b16 %v2754, %v2753
        %v2853 = vpack.c.b16 %v2756, %v2755
        %v2854 = vpack.c.b16 %v2758, %v2757
        %v2855 = vpack.c.b16 %v2760, %v2759
        %v2856 = vpack.c.b16 %v2762, %v2761
        %v2857 = vpack.c.b16 %v2764, %v2763
        %v2858 = vpack.c.b16 %v2766, %v2765
        %v2859 = vpack.c.b16 %v2768, %v2767
        %v2860 = vpack.c.b16 %v2770, %v2769
        %v2861 = vpack.c.b16 %v2772, %v2771
        %v2862 = vpack.c.b16 %v2774, %v2773
        %v2863 = vpack.c.b16 %v2776, %v2775
        %v2864 = vpack.c.b16 %v2778, %v2777
        %v2865 = vpack.c.b16 %v2780, %v2779
        %v2866 = vpack.c.b16 %v2782, %v2781
        %v2867 = vpack.c.b16 %v2784, %v2783
        %v2868 = vpack.c.b16 %v2786, %v2785
        %v2869 = vpack.c.b16 %v2788, %v2787
        %v2870 = vpack.c.b16 %v2790, %v2789
        %v2871 = vpack.c.b16 %v2792, %v2791
        %v2872 = vpack.c.b16 %v2794, %v2793
        %v2873 = vpack.c.b16 %v2796, %v2795
        %v2874 = vpack.c.b16 %v2798, %v2797
        %v2875 = vpack.c.b16 %v2800, %v2799
        %v2876 = vpack.c.b16 %v2802, %v2801
        %v2877 = vpack.c.b16 %v2804, %v2803
        %v2878 = vpack.c.b16 %v2806, %v2805
        %v2879 = vpack.c.b16 %v2808, %v2807
        %v2880 = vpack.c.b16 %v2810, %v2809
        %v2881 = vpack.c.b16 %v2812, %v2811
        %v2882 = vpack.c.b16 %v2814, %v2813
        %v2883 = vpack.c.b16 %v2816, %v2815
        %v2884 = vpack.c.b16 %v2818, %v2817
        %v2885 = vpack.c.b16 %v2820, %v2819
        %v2886 = vpack.c.b16 %v2822, %v2821
        %2951 = vmatprep.subr.bf16.mxu0 0
        %2952 = vmatpush1.bf16.msra.mxu0 %v2823
        %2953 = vmatprep.subr.bf16.mxu0 0
        %2954 = vmatpush1.bf16.msra.mxu0 %v2824
        %2955 = vmatprep.subr.bf16.mxu0 0
        %2956 = vmatpush1.bf16.msra.mxu0 %v2825
        %2957 = vmatprep.subr.bf16.mxu0 0
        %2958 = vmatpush1.bf16.msra.mxu0 %v2826
        %2959 = vmatprep.subr.bf16.mxu0 0
        %2960 = vmatpush1.bf16.msra.mxu0 %v2827
        %2961 = vmatprep.subr.bf16.mxu0 0
        %2962 = vmatpush1.bf16.msra.mxu0 %v2828
        %2963 = vmatprep.subr.bf16.mxu0 0
        %2964 = vmatpush1.bf16.msra.mxu0 %v2829
        %2965 = vmatprep.subr.bf16.mxu0 0
        %2966 = vmatpush1.bf16.msra.mxu0 %v2830
        %2967 = vmatprep.subr.bf16.mxu0 0
        %2968 = vmatpush1.bf16.msra.mxu0 %v2831
        %2969 = vmatprep.subr.bf16.mxu0 0
        %2970 = vmatpush1.bf16.msra.mxu0 %v2832
        %2971 = vmatprep.subr.bf16.mxu0 0
        %2972 = vmatpush1.bf16.msra.mxu0 %v2833
        %2973 = vmatprep.subr.bf16.mxu0 0
        %2974 = vmatpush1.bf16.msra.mxu0 %v2834
        %2975 = vmatprep.subr.bf16.mxu0 0
        %2976 = vmatpush1.bf16.msra.mxu0 %v2835
        %2977 = vmatprep.subr.bf16.mxu0 0
        %2978 = vmatpush1.bf16.msra.mxu0 %v2836
        %2979 = vmatprep.subr.bf16.mxu0 0
        %2980 = vmatpush1.bf16.msra.mxu0 %v2837
        %2981 = vmatprep.subr.bf16.mxu0 0
        %2982 = vmatpush1.bf16.msra.mxu0 %v2838
        %2983 = vmatprep.mubr.bf16.mxu0 %v2424
        %2984 = vmatmul.mubr.bf16.gmra.mrb[0].mxu0 %v2423
        %v2985 = vpop.f32.mrb[0].mxu0
        %v2986 = vadd.f32 0.0, %v2985
        %v2987 = vpop.f32.mrb[0].mxu0
        %v2988 = vpop.f32.mrb[0].mxu0
        %v2989 = vadd.f32 0.0, %v2988
        %v2990 = vpop.f32.mrb[0].mxu0
        %2991 = vmatprep.mubr.bf16.mxu0 %v2432
        %2992 = vmatmul.mubr.bf16.gmra.mrb[0].mxu0 %v2431
        %v2993 = vpop.f32.mrb[0].mxu0
        %v2994 = vadd.f32 0.0, %v2993
        %v2995 = vpop.f32.mrb[0].mxu0
        %v2996 = vpop.f32.mrb[0].mxu0
        %v2997 = vadd.f32 0.0, %v2996
        %v2998 = vpop.f32.mrb[0].mxu0
        %2999 = vdwg.mxu0
        %3000 = vmatprep.subr.bf16.mxu0 0
        %3001 = vmatpush1.bf16.msra.mxu0 %v2839
        %3002 = vmatprep.subr.bf16.mxu0 0
        %3003 = vmatpush1.bf16.msra.mxu0 %v2840
        %3004 = vmatprep.subr.bf16.mxu0 0
        %3005 = vmatpush1.bf16.msra.mxu0 %v2841
        %3006 = vmatprep.subr.bf16.mxu0 0
        %3007 = vmatpush1.bf16.msra.mxu0 %v2842
        %3008 = vmatprep.subr.bf16.mxu0 0
        %3009 = vmatpush1.bf16.msra.mxu0 %v2843
        %3010 = vmatprep.subr.bf16.mxu0 0
        %3011 = vmatpush1.bf16.msra.mxu0 %v2844
        %3012 = vmatprep.subr.bf16.mxu0 0
        %3013 = vmatpush1.bf16.msra.mxu0 %v2845
        %3014 = vmatprep.subr.bf16.mxu0 0
        %3015 = vmatpush1.bf16.msra.mxu0 %v2846
        %3016 = vmatprep.subr.bf16.mxu0 0
        %3017 = vmatpush1.bf16.msra.mxu0 %v2847
        %3018 = vmatprep.subr.bf16.mxu0 0
        %3019 = vmatpush1.bf16.msra.mxu0 %v2848
        %3020 = vmatprep.subr.bf16.mxu0 0
        %3021 = vmatpush1.bf16.msra.mxu0 %v2849
        %3022 = vmatprep.subr.bf16.mxu0 0
        %3023 = vmatpush1.bf16.msra.mxu0 %v2850
        %3024 = vmatprep.subr.bf16.mxu0 0
        %3025 = vmatpush1.bf16.msra.mxu0 %v2851
        %3026 = vmatprep.subr.bf16.mxu0 0
        %3027 = vmatpush1.bf16.msra.mxu0 %v2852
        %3028 = vmatprep.subr.bf16.mxu0 0
        %3029 = vmatpush1.bf16.msra.mxu0 %v2853
        %3030 = vmatprep.subr.bf16.mxu0 0
        %3031 = vmatpush1.bf16.msra.mxu0 %v2854
        %3032 = vmatprep.mubr.bf16.mxu0 %v2426
        %3033 = vmatmul.mubr.bf16.gmra.mrb[0].mxu0 %v2425
        %v3034 = vpop.f32.mrb[0].mxu0
        %v3035 = vadd.f32 %v2986, %v3034
        %v3036 = vpop.f32.mrb[0].mxu0
        %v3037 = vpop.f32.mrb[0].mxu0
        %v3038 = vadd.f32 %v2989, %v3037
        %v3039 = vpop.f32.mrb[0].mxu0
        %3040 = vmatprep.mubr.bf16.mxu0 %v2434
        %3041 = vmatmul.mubr.bf16.gmra.mrb[0].mxu0 %v2433
        %v3042 = vpop.f32.mrb[0].mxu0
        %v3043 = vadd.f32 %v2994, %v3042
        %v3044 = vpop.f32.mrb[0].mxu0
        %v3045 = vpop.f32.mrb[0].mxu0
        %v3046 = vadd.f32 %v2997, %v3045
        %v3047 = vpop.f32.mrb[0].mxu0
        %3048 = vdwg.mxu0
        %3049 = vmatprep.subr.bf16.mxu0 0
        %3050 = vmatpush1.bf16.msra.mxu0 %v2855
        %3051 = vmatprep.subr.bf16.mxu0 0
        %3052 = vmatpush1.bf16.msra.mxu0 %v2856
        %3053 = vmatprep.subr.bf16.mxu0 0
        %3054 = vmatpush1.bf16.msra.mxu0 %v2857
        %3055 = vmatprep.subr.bf16.mxu0 0
        %3056 = vmatpush1.bf16.msra.mxu0 %v2858
        %3057 = vmatprep.subr.bf16.mxu0 0
        %3058 = vmatpush1.bf16.msra.mxu0 %v2859
        %3059 = vmatprep.subr.bf16.mxu0 0
        %3060 = vmatpush1.bf16.msra.mxu0 %v2860
        %3061 = vmatprep.subr.bf16.mxu0 0
        %3062 = vmatpush1.bf16.msra.mxu0 %v2861
        %3063 = vmatprep.subr.bf16.mxu0 0
        %3064 = vmatpush1.bf16.msra.mxu0 %v2862
        %3065 = vmatprep.subr.bf16.mxu0 0
        %3066 = vmatpush1.bf16.msra.mxu0 %v2863
        %3067 = vmatprep.subr.bf16.mxu0 0
        %3068 = vmatpush1.bf16.msra.mxu0 %v2864
        %3069 = vmatprep.subr.bf16.mxu0 0
        %3070 = vmatpush1.bf16.msra.mxu0 %v2865
        %3071 = vmatprep.subr.bf16.mxu0 0
        %3072 = vmatpush1.bf16.msra.mxu0 %v2866
        %3073 = vmatprep.subr.bf16.mxu0 0
        %3074 = vmatpush1.bf16.msra.mxu0 %v2867
        %3075 = vmatprep.subr.bf16.mxu0 0
        %3076 = vmatpush1.bf16.msra.mxu0 %v2868
        %3077 = vmatprep.subr.bf16.mxu0 0
        %3078 = vmatpush1.bf16.msra.mxu0 %v2869
        %3079 = vmatprep.subr.bf16.mxu0 0
        %3080 = vmatpush1.bf16.msra.mxu0 %v2870
        %3081 = vmatprep.mubr.bf16.mxu0 %v2428
        %3082 = vmatmul.mubr.bf16.gmra.mrb[0].mxu0 %v2427
        %v3083 = vpop.f32.mrb[0].mxu0
        %v3084 = vadd.f32 %v3035, %v3083
        %v3085 = vpop.f32.mrb[0].mxu0
        %v3086 = vpop.f32.mrb[0].mxu0
        %v3087 = vadd.f32 %v3038, %v3086
        %v3088 = vpop.f32.mrb[0].mxu0
        %3089 = vmatprep.mubr.bf16.mxu0 %v2436
        %3090 = vmatmul.mubr.bf16.gmra.mrb[0].mxu0 %v2435
        %v3091 = vpop.f32.mrb[0].mxu0
        %v3092 = vadd.f32 %v3043, %v3091
        %v3093 = vpop.f32.mrb[0].mxu0
        %v3094 = vpop.f32.mrb[0].mxu0
        %v3095 = vadd.f32 %v3046, %v3094
        %v3096 = vpop.f32.mrb[0].mxu0
        %3097 = vdwg.mxu0
        %3098 = vmatprep.subr.bf16.mxu0 0
        %3099 = vmatpush1.bf16.msra.mxu0 %v2871
        %3100 = vmatprep.subr.bf16.mxu0 0
        %3101 = vmatpush1.bf16.msra.mxu0 %v2872
        %3102 = vmatprep.subr.bf16.mxu0 0
        %3103 = vmatpush1.bf16.msra.mxu0 %v2873
        %3104 = vmatprep.subr.bf16.mxu0 0
        %3105 = vmatpush1.bf16.msra.mxu0 %v2874
        %3106 = vmatprep.subr.bf16.mxu0 0
        %3107 = vmatpush1.bf16.msra.mxu0 %v2875
        %3108 = vmatprep.subr.bf16.mxu0 0
        %3109 = vmatpush1.bf16.msra.mxu0 %v2876
        %3110 = vmatprep.subr.bf16.mxu0 0
        %3111 = vmatpush1.bf16.msra.mxu0 %v2877
        %3112 = vmatprep.subr.bf16.mxu0 0
        %3113 = vmatpush1.bf16.msra.mxu0 %v2878
        %3114 = vmatprep.subr.bf16.mxu0 0
        %3115 = vmatpush1.bf16.msra.mxu0 %v2879
        %3116 = vmatprep.subr.bf16.mxu0 0
        %3117 = vmatpush1.bf16.msra.mxu0 %v2880
        %3118 = vmatprep.subr.bf16.mxu0 0
        %3119 = vmatpush1.bf16.msra.mxu0 %v2881
        %3120 = vmatprep.subr.bf16.mxu0 0
        %3121 = vmatpush1.bf16.msra.mxu0 %v2882
        %3122 = vmatprep.subr.bf16.mxu0 0
        %3123 = vmatpush1.bf16.msra.mxu0 %v2883
        %3124 = vmatprep.subr.bf16.mxu0 0
        %3125 = vmatpush1.bf16.msra.mxu0 %v2884
        %3126 = vmatprep.subr.bf16.mxu0 0
        %3127 = vmatpush1.bf16.msra.mxu0 %v2885
        %3128 = vmatprep.subr.bf16.mxu0 0
        %3129 = vmatpush1.bf16.msra.mxu0 %v2886
        %3130 = vmatprep.mubr.bf16.mxu0 %v2430
        %3131 = vmatmul.mubr.bf16.gmra.mrb[0].mxu0 %v2429
        %v3132 = vpop.f32.mrb[0].mxu0
        %v3133 = vadd.f32 %v3084, %v3132
        %v3134 = vpop.f32.mrb[0].mxu0
        %v3135 = vpop.f32.mrb[0].mxu0
        %v3136 = vadd.f32 %v3087, %v3135
        %v3137 = vpop.f32.mrb[0].mxu0
        %3138 = vmatprep.mubr.bf16.mxu0 %v2438
        %3139 = vmatmul.mubr.bf16.gmra.mrb[0].mxu0 %v2437
        %v3140 = vpop.f32.mrb[0].mxu0
        %v3141 = vadd.f32 %v3092, %v3140
        %v3142 = vpop.f32.mrb[0].mxu0
        %v3143 = vpop.f32.mrb[0].mxu0
        %v3144 = vadd.f32 %v3095, %v3143
        %v3145 = vpop.f32.mrb[0].mxu0
        %3146 = vdwg.mxu0
        %v3147 = vmul.f32 %v3133, 0.015625
        %v3148 = vmul.f32 %v3136, 0.015625
        %v3149 = vmul.f32 %v3141, 0.015625
        %v3150 = vmul.f32 %v3144, 0.015625
        %v3151 = vpack.c.bf16 %v3148, %v3147
        %v3152 = vpack.c.bf16 %v3150, %v3149
        %v3153 = vld [vmem:[#allocation11] sm:$0xff]
        %v3154 = vld [vmem:[#allocation11 + $0x8] sm:$0xff]
        %v3155 = vld [vmem:[#allocation11 + $0x10] sm:$0xff]
        %v3156 = vld [vmem:[#allocation11 + $0x18] sm:$0xff]
        %v3157 = vld [vmem:[#allocation11 + $0x20] sm:$0xff]
        %v3158 = vld [vmem:[#allocation11 + $0x28] sm:$0xff]
        %v3159 = vld [vmem:[#allocation11 + $0x30] sm:$0xff]
        %v3160 = vld [vmem:[#allocation11 + $0x38] sm:$0xff]
        %v3161 = vld [vmem:[#allocation11 + $0x40] sm:$0xff]
        %v3162 = vld [vmem:[#allocation11 + $0x48] sm:$0xff]
        %v3163 = vld [vmem:[#allocation11 + $0x50] sm:$0xff]
        %v3164 = vld [vmem:[#allocation11 + $0x58] sm:$0xff]
        %v3165 = vld [vmem:[#allocation11 + $0x60] sm:$0xff]
        %v3166 = vld [vmem:[#allocation11 + $0x68] sm:$0xff]
        %v3167 = vld [vmem:[#allocation11 + $0x70] sm:$0xff]
        %v3168 = vld [vmem:[#allocation11 + $0x78] sm:$0xff]
        %v3169 = vld [vmem:[#allocation11 + $0x80] sm:$0xff]
        %v3170 = vld [vmem:[#allocation11 + $0x88] sm:$0xff]
        %v3171 = vld [vmem:[#allocation11 + $0x90] sm:$0xff]
        %v3172 = vld [vmem:[#allocation11 + $0x98] sm:$0xff]
        %v3173 = vld [vmem:[#allocation11 + $0xa0] sm:$0xff]
        %v3174 = vld [vmem:[#allocation11 + $0xa8] sm:$0xff]
        %v3175 = vld [vmem:[#allocation11 + $0xb0] sm:$0xff]
        %v3176 = vld [vmem:[#allocation11 + $0xb8] sm:$0xff]
        %v3177 = vld [vmem:[#allocation11 + $0xc0] sm:$0xff]
        %v3178 = vld [vmem:[#allocation11 + $0xc8] sm:$0xff]
        %v3179 = vld [vmem:[#allocation11 + $0xd0] sm:$0xff]
        %v3180 = vld [vmem:[#allocation11 + $0xd8] sm:$0xff]
        %v3181 = vld [vmem:[#allocation11 + $0xe0] sm:$0xff]
        %v3182 = vld [vmem:[#allocation11 + $0xe8] sm:$0xff]
        %v3183 = vld [vmem:[#allocation11 + $0xf0] sm:$0xff]
        %v3184 = vld [vmem:[#allocation11 + $0xf8] sm:$0xff]
        %v3185 = vld [vmem:[#allocation11 + $0x100] sm:$0xff]
        %v3186 = vld [vmem:[#allocation11 + $0x108] sm:$0xff]
        %v3187 = vld [vmem:[#allocation11 + $0x110] sm:$0xff]
        %v3188 = vld [vmem:[#allocation11 + $0x118] sm:$0xff]
        %v3189 = vld [vmem:[#allocation11 + $0x120] sm:$0xff]
        %v3190 = vld [vmem:[#allocation11 + $0x128] sm:$0xff]
        %v3191 = vld [vmem:[#allocation11 + $0x130] sm:$0xff]
        %v3192 = vld [vmem:[#allocation11 + $0x138] sm:$0xff]
        %v3193 = vld [vmem:[#allocation11 + $0x140] sm:$0xff]
        %v3194 = vld [vmem:[#allocation11 + $0x148] sm:$0xff]
        %v3195 = vld [vmem:[#allocation11 + $0x150] sm:$0xff]
        %v3196 = vld [vmem:[#allocation11 + $0x158] sm:$0xff]
        %v3197 = vld [vmem:[#allocation11 + $0x160] sm:$0xff]
        %v3198 = vld [vmem:[#allocation11 + $0x168] sm:$0xff]
        %v3199 = vld [vmem:[#allocation11 + $0x170] sm:$0xff]
        %v3200 = vld [vmem:[#allocation11 + $0x178] sm:$0xff]
        %v3201 = vld [vmem:[#allocation11 + $0x180] sm:$0xff]
        %v3202 = vld [vmem:[#allocation11 + $0x188] sm:$0xff]
        %v3203 = vld [vmem:[#allocation11 + $0x190] sm:$0xff]
        %v3204 = vld [vmem:[#allocation11 + $0x198] sm:$0xff]
        %v3205 = vld [vmem:[#allocation11 + $0x1a0] sm:$0xff]
        %v3206 = vld [vmem:[#allocation11 + $0x1a8] sm:$0xff]
        %v3207 = vld [vmem:[#allocation11 + $0x1b0] sm:$0xff]
        %v3208 = vld [vmem:[#allocation11 + $0x1b8] sm:$0xff]
        %v3209 = vld [vmem:[#allocation11 + $0x1c0] sm:$0xff]
        %v3210 = vld [vmem:[#allocation11 + $0x1c8] sm:$0xff]
        %v3211 = vld [vmem:[#allocation11 + $0x1d0] sm:$0xff]
        %v3212 = vld [vmem:[#allocation11 + $0x1d8] sm:$0xff]
        %v3213 = vld [vmem:[#allocation11 + $0x1e0] sm:$0xff]
        %v3214 = vld [vmem:[#allocation11 + $0x1e8] sm:$0xff]
        %v3215 = vld [vmem:[#allocation11 + $0x1f0] sm:$0xff]
        %v3216 = vld [vmem:[#allocation11 + $0x1f8] sm:$0xff]
        %v3281 = vunpack.c.l.b16 %v3153
        %v3282 = vunpack.c.h.b16 %v3153
        %v3283 = vunpack.c.l.b16 %v3154
        %v3284 = vunpack.c.h.b16 %v3154
        %v3285 = vunpack.c.l.b16 %v3155
        %v3286 = vunpack.c.h.b16 %v3155
        %v3287 = vunpack.c.l.b16 %v3156
        %v3288 = vunpack.c.h.b16 %v3156
        %v3289 = vunpack.c.l.b16 %v3157
        %v3290 = vunpack.c.h.b16 %v3157
        %v3291 = vunpack.c.l.b16 %v3158
        %v3292 = vunpack.c.h.b16 %v3158
        %v3293 = vunpack.c.l.b16 %v3159
        %v3294 = vunpack.c.h.b16 %v3159
        %v3295 = vunpack.c.l.b16 %v3160
        %v3296 = vunpack.c.h.b16 %v3160
        %v3297 = vunpack.c.l.b16 %v3161
        %v3298 = vunpack.c.h.b16 %v3161
        %v3299 = vunpack.c.l.b16 %v3162
        %v3300 = vunpack.c.h.b16 %v3162
        %v3301 = vunpack.c.l.b16 %v3163
        %v3302 = vunpack.c.h.b16 %v3163
        %v3303 = vunpack.c.l.b16 %v3164
        %v3304 = vunpack.c.h.b16 %v3164
        %v3305 = vunpack.c.l.b16 %v3165
        %v3306 = vunpack.c.h.b16 %v3165
        %v3307 = vunpack.c.l.b16 %v3166
        %v3308 = vunpack.c.h.b16 %v3166
        %v3309 = vunpack.c.l.b16 %v3167
        %v3310 = vunpack.c.h.b16 %v3167
        %v3311 = vunpack.c.l.b16 %v3168
        %v3312 = vunpack.c.h.b16 %v3168
        %v3313 = vunpack.c.l.b16 %v3169
        %v3314 = vunpack.c.h.b16 %v3169
        %v3315 = vunpack.c.l.b16 %v3170
        %v3316 = vunpack.c.h.b16 %v3170
        %v3317 = vunpack.c.l.b16 %v3171
        %v3318 = vunpack.c.h.b16 %v3171
        %v3319 = vunpack.c.l.b16 %v3172
        %v3320 = vunpack.c.h.b16 %v3172
        %v3321 = vunpack.c.l.b16 %v3173
        %v3322 = vunpack.c.h.b16 %v3173
        %v3323 = vunpack.c.l.b16 %v3174
        %v3324 = vunpack.c.h.b16 %v3174
        %v3325 = vunpack.c.l.b16 %v3175
        %v3326 = vunpack.c.h.b16 %v3175
        %v3327 = vunpack.c.l.b16 %v3176
        %v3328 = vunpack.c.h.b16 %v3176
        %v3329 = vunpack.c.l.b16 %v3177
        %v3330 = vunpack.c.h.b16 %v3177
        %v3331 = vunpack.c.l.b16 %v3178
        %v3332 = vunpack.c.h.b16 %v3178
        %v3333 = vunpack.c.l.b16 %v3179
        %v3334 = vunpack.c.h.b16 %v3179
        %v3335 = vunpack.c.l.b16 %v3180
        %v3336 = vunpack.c.h.b16 %v3180
        %v3337 = vunpack.c.l.b16 %v3181
        %v3338 = vunpack.c.h.b16 %v3181
        %v3339 = vunpack.c.l.b16 %v3182
        %v3340 = vunpack.c.h.b16 %v3182
        %v3341 = vunpack.c.l.b16 %v3183
        %v3342 = vunpack.c.h.b16 %v3183
        %v3343 = vunpack.c.l.b16 %v3184
        %v3344 = vunpack.c.h.b16 %v3184
        %v3345 = vunpack.c.l.b16 %v3185
        %v3346 = vunpack.c.h.b16 %v3185
        %v3347 = vunpack.c.l.b16 %v3186
        %v3348 = vunpack.c.h.b16 %v3186
        %v3349 = vunpack.c.l.b16 %v3187
        %v3350 = vunpack.c.h.b16 %v3187
        %v3351 = vunpack.c.l.b16 %v3188
        %v3352 = vunpack.c.h.b16 %v3188
        %v3353 = vunpack.c.l.b16 %v3189
        %v3354 = vunpack.c.h.b16 %v3189
        %v3355 = vunpack.c.l.b16 %v3190
        %v3356 = vunpack.c.h.b16 %v3190
        %v3357 = vunpack.c.l.b16 %v3191
        %v3358 = vunpack.c.h.b16 %v3191
        %v3359 = vunpack.c.l.b16 %v3192
        %v3360 = vunpack.c.h.b16 %v3192
        %v3361 = vunpack.c.l.b16 %v3193
        %v3362 = vunpack.c.h.b16 %v3193
        %v3363 = vunpack.c.l.b16 %v3194
        %v3364 = vunpack.c.h.b16 %v3194
        %v3365 = vunpack.c.l.b16 %v3195
        %v3366 = vunpack.c.h.b16 %v3195
        %v3367 = vunpack.c.l.b16 %v3196
        %v3368 = vunpack.c.h.b16 %v3196
        %v3369 = vunpack.c.l.b16 %v3197
        %v3370 = vunpack.c.h.b16 %v3197
        %v3371 = vunpack.c.l.b16 %v3198
        %v3372 = vunpack.c.h.b16 %v3198
        %v3373 = vunpack.c.l.b16 %v3199
        %v3374 = vunpack.c.h.b16 %v3199
        %v3375 = vunpack.c.l.b16 %v3200
        %v3376 = vunpack.c.h.b16 %v3200
        %v3377 = vunpack.c.l.b16 %v3201
        %v3378 = vunpack.c.h.b16 %v3201
        %v3379 = vunpack.c.l.b16 %v3202
        %v3380 = vunpack.c.h.b16 %v3202
        %v3381 = vunpack.c.l.b16 %v3203
        %v3382 = vunpack.c.h.b16 %v3203
        %v3383 = vunpack.c.l.b16 %v3204
        %v3384 = vunpack.c.h.b16 %v3204
        %v3385 = vunpack.c.l.b16 %v3205
        %v3386 = vunpack.c.h.b16 %v3205
        %v3387 = vunpack.c.l.b16 %v3206
        %v3388 = vunpack.c.h.b16 %v3206
        %v3389 = vunpack.c.l.b16 %v3207
        %v3390 = vunpack.c.h.b16 %v3207
        %v3391 = vunpack.c.l.b16 %v3208
        %v3392 = vunpack.c.h.b16 %v3208
        %v3393 = vunpack.c.l.b16 %v3209
        %v3394 = vunpack.c.h.b16 %v3209
        %v3395 = vunpack.c.l.b16 %v3210
        %v3396 = vunpack.c.h.b16 %v3210
        %v3397 = vunpack.c.l.b16 %v3211
        %v3398 = vunpack.c.h.b16 %v3211
        %v3399 = vunpack.c.l.b16 %v3212
        %v3400 = vunpack.c.h.b16 %v3212
        %v3401 = vunpack.c.l.b16 %v3213
        %v3402 = vunpack.c.h.b16 %v3213
        %v3403 = vunpack.c.l.b16 %v3214
        %v3404 = vunpack.c.h.b16 %v3214
        %v3405 = vunpack.c.l.b16 %v3215
        %v3406 = vunpack.c.h.b16 %v3215
        %v3407 = vunpack.c.l.b16 %v3216
        %v3408 = vunpack.c.h.b16 %v3216
        %v3409 = vpack.c.b16 %v3289, %v3281
        %v3410 = vpack.c.b16 %v3290, %v3282
        %v3411 = vpack.c.b16 %v3291, %v3283
        %v3412 = vpack.c.b16 %v3292, %v3284
        %v3413 = vpack.c.b16 %v3293, %v3285
        %v3414 = vpack.c.b16 %v3294, %v3286
        %v3415 = vpack.c.b16 %v3295, %v3287
        %v3416 = vpack.c.b16 %v3296, %v3288
        %v3417 = vpack.c.b16 %v3305, %v3297
        %v3418 = vpack.c.b16 %v3306, %v3298
        %v3419 = vpack.c.b16 %v3307, %v3299
        %v3420 = vpack.c.b16 %v3308, %v3300
        %v3421 = vpack.c.b16 %v3309, %v3301
        %v3422 = vpack.c.b16 %v3310, %v3302
        %v3423 = vpack.c.b16 %v3311, %v3303
        %v3424 = vpack.c.b16 %v3312, %v3304
        %v3425 = vpack.c.b16 %v3321, %v3313
        %v3426 = vpack.c.b16 %v3322, %v3314
        %v3427 = vpack.c.b16 %v3323, %v3315
        %v3428 = vpack.c.b16 %v3324, %v3316
        %v3429 = vpack.c.b16 %v3325, %v3317
        %v3430 = vpack.c.b16 %v3326, %v3318
        %v3431 = vpack.c.b16 %v3327, %v3319
        %v3432 = vpack.c.b16 %v3328, %v3320
        %v3433 = vpack.c.b16 %v3337, %v3329
        %v3434 = vpack.c.b16 %v3338, %v3330
        %v3435 = vpack.c.b16 %v3339, %v3331
        %v3436 = vpack.c.b16 %v3340, %v3332
        %v3437 = vpack.c.b16 %v3341, %v3333
        %v3438 = vpack.c.b16 %v3342, %v3334
        %v3439 = vpack.c.b16 %v3343, %v3335
        %v3440 = vpack.c.b16 %v3344, %v3336
        %v3441 = vpack.c.b16 %v3353, %v3345
        %v3442 = vpack.c.b16 %v3354, %v3346
        %v3443 = vpack.c.b16 %v3355, %v3347
        %v3444 = vpack.c.b16 %v3356, %v3348
        %v3445 = vpack.c.b16 %v3357, %v3349
        %v3446 = vpack.c.b16 %v3358, %v3350
        %v3447 = vpack.c.b16 %v3359, %v3351
        %v3448 = vpack.c.b16 %v3360, %v3352
        %v3449 = vpack.c.b16 %v3369, %v3361
        %v3450 = vpack.c.b16 %v3370, %v3362
        %v3451 = vpack.c.b16 %v3371, %v3363
        %v3452 = vpack.c.b16 %v3372, %v3364
        %v3453 = vpack.c.b16 %v3373, %v3365
        %v3454 = vpack.c.b16 %v3374, %v3366
        %v3455 = vpack.c.b16 %v3375, %v3367
        %v3456 = vpack.c.b16 %v3376, %v3368
        %v3457 = vpack.c.b16 %v3385, %v3377
        %v3458 = vpack.c.b16 %v3386, %v3378
        %v3459 = vpack.c.b16 %v3387, %v3379
        %v3460 = vpack.c.b16 %v3388, %v3380
        %v3461 = vpack.c.b16 %v3389, %v3381
        %v3462 = vpack.c.b16 %v3390, %v3382
        %v3463 = vpack.c.b16 %v3391, %v3383
        %v3464 = vpack.c.b16 %v3392, %v3384
        %v3465 = vpack.c.b16 %v3401, %v3393
        %v3466 = vpack.c.b16 %v3402, %v3394
        %v3467 = vpack.c.b16 %v3403, %v3395
        %v3468 = vpack.c.b16 %v3404, %v3396
        %v3469 = vpack.c.b16 %v3405, %v3397
        %v3470 = vpack.c.b16 %v3406, %v3398
        %v3471 = vpack.c.b16 %v3407, %v3399
        %v3472 = vpack.c.b16 %v3408, %v3400
        %3537 = vmatprep.subr.bf16.mxu0 %v3410
        %3538 = vmatpush1.bf16.msra.mxu0 %v3409
        %3539 = vmatprep.subr.bf16.mxu0 %v3418
        %3540 = vmatpush1.bf16.msra.mxu0 %v3417
        %3541 = vmatprep.subr.bf16.mxu0 %v3426
        %3542 = vmatpush1.bf16.msra.mxu0 %v3425
        %3543 = vmatprep.subr.bf16.mxu0 %v3434
        %3544 = vmatpush1.bf16.msra.mxu0 %v3433
        %3545 = vmatprep.subr.bf16.mxu0 %v3442
        %3546 = vmatpush1.bf16.msra.mxu0 %v3441
        %3547 = vmatprep.subr.bf16.mxu0 %v3450
        %3548 = vmatpush1.bf16.msra.mxu0 %v3449
        %3549 = vmatprep.subr.bf16.mxu0 %v3458
        %3550 = vmatpush1.bf16.msra.mxu0 %v3457
        %3551 = vmatprep.subr.bf16.mxu0 %v3466
        %3552 = vmatpush1.bf16.msra.mxu0 %v3465
        %3553 = vmatprep.subr.bf16.mxu0 0
        %3554 = vmatpush1.bf16.msra.mxu0 0
        %3555 = vmatprep.subr.bf16.mxu0 0
        %3556 = vmatpush1.bf16.msra.mxu0 0
        %3557 = vmatprep.subr.bf16.mxu0 0
        %3558 = vmatpush1.bf16.msra.mxu0 0
        %3559 = vmatprep.subr.bf16.mxu0 0
        %3560 = vmatpush1.bf16.msra.mxu0 0
        %3561 = vmatprep.subr.bf16.mxu0 0
        %3562 = vmatpush1.bf16.msra.mxu0 0
        %3563 = vmatprep.subr.bf16.mxu0 0
        %3564 = vmatpush1.bf16.msra.mxu0 0
        %3565 = vmatprep.subr.bf16.mxu0 0
        %3566 = vmatpush1.bf16.msra.mxu0 0
        %3567 = vmatprep.subr.bf16.mxu0 0
        %3568 = vmatpush1.bf16.msra.mxu0 0
        %3569 = vmatprep.mubr.bf16.mxu0 0
        %3570 = vmatmul.mubr.bf16.gmra.mrb[0].mxu0 %v3151
        %v3571 = vpop.f32.mrb[0].mxu0
        %v3572 = vadd.f32 0.0, %v3571
        %v3573 = vpop.f32.mrb[0].mxu0
        %v3574 = vadd.f32 0.0, %v3573
        %v3575 = vpop.f32.mrb[0].mxu0
        %v3576 = vadd.f32 0.0, %v3575
        %v3577 = vpop.f32.mrb[0].mxu0
        %v3578 = vadd.f32 0.0, %v3577
        %3579 = vmatprep.mubr.bf16.mxu0 0
        %3580 = vmatmul.mubr.bf16.gmra.mrb[0].mxu0 %v3152
        %v3581 = vpop.f32.mrb[0].mxu0
        %v3582 = vadd.f32 0.0, %v3581
        %v3583 = vpop.f32.mrb[0].mxu0
        %v3584 = vadd.f32 0.0, %v3583
        %v3585 = vpop.f32.mrb[0].mxu0
        %v3586 = vadd.f32 0.0, %v3585
        %v3587 = vpop.f32.mrb[0].mxu0
        %v3588 = vadd.f32 0.0, %v3587
        %3589 = vdwg.mxu0
        %3590 = vmatprep.subr.bf16.mxu0 %v3412
        %3591 = vmatpush1.bf16.msra.mxu0 %v3411
        %3592 = vmatprep.subr.bf16.mxu0 %v3420
        %3593 = vmatpush1.bf16.msra.mxu0 %v3419
        %3594 = vmatprep.subr.bf16.mxu0 %v3428
        %3595 = vmatpush1.bf16.msra.mxu0 %v3427
        %3596 = vmatprep.subr.bf16.mxu0 %v3436
        %3597 = vmatpush1.bf16.msra.mxu0 %v3435
        %3598 = vmatprep.subr.bf16.mxu0 %v3444
        %3599 = vmatpush1.bf16.msra.mxu0 %v3443
        %3600 = vmatprep.subr.bf16.mxu0 %v3452
        %3601 = vmatpush1.bf16.msra.mxu0 %v3451
        %3602 = vmatprep.subr.bf16.mxu0 %v3460
        %3603 = vmatpush1.bf16.msra.mxu0 %v3459
        %3604 = vmatprep.subr.bf16.mxu0 %v3468
        %3605 = vmatpush1.bf16.msra.mxu0 %v3467
        %3606 = vmatprep.subr.bf16.mxu0 0
        %3607 = vmatpush1.bf16.msra.mxu0 0
        %3608 = vmatprep.subr.bf16.mxu0 0
        %3609 = vmatpush1.bf16.msra.mxu0 0
        %3610 = vmatprep.subr.bf16.mxu0 0
        %3611 = vmatpush1.bf16.msra.mxu0 0
        %3612 = vmatprep.subr.bf16.mxu0 0
        %3613 = vmatpush1.bf16.msra.mxu0 0
        %3614 = vmatprep.subr.bf16.mxu0 0
        %3615 = vmatpush1.bf16.msra.mxu0 0
        %3616 = vmatprep.subr.bf16.mxu0 0
        %3617 = vmatpush1.bf16.msra.mxu0 0
        %3618 = vmatprep.subr.bf16.mxu0 0
        %3619 = vmatpush1.bf16.msra.mxu0 0
        %3620 = vmatprep.subr.bf16.mxu0 0
        %3621 = vmatpush1.bf16.msra.mxu0 0
        %3622 = vmatprep.mubr.bf16.mxu0 0
        %3623 = vmatmul.mubr.bf16.gmra.mrb[0].mxu0 %v3151
        %v3624 = vpop.f32.mrb[0].mxu0
        %v3625 = vadd.f32 0.0, %v3624
        %v3626 = vpop.f32.mrb[0].mxu0
        %v3627 = vadd.f32 0.0, %v3626
        %v3628 = vpop.f32.mrb[0].mxu0
        %v3629 = vadd.f32 0.0, %v3628
        %v3630 = vpop.f32.mrb[0].mxu0
        %v3631 = vadd.f32 0.0, %v3630
        %3632 = vmatprep.mubr.bf16.mxu0 0
        %3633 = vmatmul.mubr.bf16.gmra.mrb[0].mxu0 %v3152
        %v3634 = vpop.f32.mrb[0].mxu0
        %v3635 = vadd.f32 0.0, %v3634
        %v3636 = vpop.f32.mrb[0].mxu0
        %v3637 = vadd.f32 0.0, %v3636
        %v3638 = vpop.f32.mrb[0].mxu0
        %v3639 = vadd.f32 0.0, %v3638
        %v3640 = vpop.f32.mrb[0].mxu0
        %v3641 = vadd.f32 0.0, %v3640
        %3642 = vdwg.mxu0
        %3643 = vmatprep.subr.bf16.mxu0 %v3414
        %3644 = vmatpush1.bf16.msra.mxu0 %v3413
        %3645 = vmatprep.subr.bf16.mxu0 %v3422
        %3646 = vmatpush1.bf16.msra.mxu0 %v3421
        %3647 = vmatprep.subr.bf16.mxu0 %v3430
        %3648 = vmatpush1.bf16.msra.mxu0 %v3429
        %3649 = vmatprep.subr.bf16.mxu0 %v3438
        %3650 = vmatpush1.bf16.msra.mxu0 %v3437
        %3651 = vmatprep.subr.bf16.mxu0 %v3446
        %3652 = vmatpush1.bf16.msra.mxu0 %v3445
        %3653 = vmatprep.subr.bf16.mxu0 %v3454
        %3654 = vmatpush1.bf16.msra.mxu0 %v3453
        %3655 = vmatprep.subr.bf16.mxu0 %v3462
        %3656 = vmatpush1.bf16.msra.mxu0 %v3461
        %3657 = vmatprep.subr.bf16.mxu0 %v3470
        %3658 = vmatpush1.bf16.msra.mxu0 %v3469
        %3659 = vmatprep.subr.bf16.mxu0 0
        %3660 = vmatpush1.bf16.msra.mxu0 0
        %3661 = vmatprep.subr.bf16.mxu0 0
        %3662 = vmatpush1.bf16.msra.mxu0 0
        %3663 = vmatprep.subr.bf16.mxu0 0
        %3664 = vmatpush1.bf16.msra.mxu0 0
        %3665 = vmatprep.subr.bf16.mxu0 0
        %3666 = vmatpush1.bf16.msra.mxu0 0
        %3667 = vmatprep.subr.bf16.mxu0 0
        %3668 = vmatpush1.bf16.msra.mxu0 0
        %3669 = vmatprep.subr.bf16.mxu0 0
        %3670 = vmatpush1.bf16.msra.mxu0 0
        %3671 = vmatprep.subr.bf16.mxu0 0
        %3672 = vmatpush1.bf16.msra.mxu0 0
        %3673 = vmatprep.subr.bf16.mxu0 0
        %3674 = vmatpush1.bf16.msra.mxu0 0
        %3675 = vmatprep.mubr.bf16.mxu0 0
        %3676 = vmatmul.mubr.bf16.gmra.mrb[0].mxu0 %v3151
        %v3677 = vpop.f32.mrb[0].mxu0
        %v3678 = vadd.f32 0.0, %v3677
        %v3679 = vpop.f32.mrb[0].mxu0
        %v3680 = vadd.f32 0.0, %v3679
        %v3681 = vpop.f32.mrb[0].mxu0
        %v3682 = vadd.f32 0.0, %v3681
        %v3683 = vpop.f32.mrb[0].mxu0
        %v3684 = vadd.f32 0.0, %v3683
        %3685 = vmatprep.mubr.bf16.mxu0 0
        %3686 = vmatmul.mubr.bf16.gmra.mrb[0].mxu0 %v3152
        %v3687 = vpop.f32.mrb[0].mxu0
        %v3688 = vadd.f32 0.0, %v3687
        %v3689 = vpop.f32.mrb[0].mxu0
        %v3690 = vadd.f32 0.0, %v3689
        %v3691 = vpop.f32.mrb[0].mxu0
        %v3692 = vadd.f32 0.0, %v3691
        %v3693 = vpop.f32.mrb[0].mxu0
        %v3694 = vadd.f32 0.0, %v3693
        %3695 = vdwg.mxu0
        %3696 = vmatprep.subr.bf16.mxu0 %v3416
        %3697 = vmatpush1.bf16.msra.mxu0 %v3415
        %3698 = vmatprep.subr.bf16.mxu0 %v3424
        %3699 = vmatpush1.bf16.msra.mxu0 %v3423
        %3700 = vmatprep.subr.bf16.mxu0 %v3432
        %3701 = vmatpush1.bf16.msra.mxu0 %v3431
        %3702 = vmatprep.subr.bf16.mxu0 %v3440
        %3703 = vmatpush1.bf16.msra.mxu0 %v3439
        %3704 = vmatprep.subr.bf16.mxu0 %v3448
        %3705 = vmatpush1.bf16.msra.mxu0 %v3447
        %3706 = vmatprep.subr.bf16.mxu0 %v3456
        %3707 = vmatpush1.bf16.msra.mxu0 %v3455
        %3708 = vmatprep.subr.bf16.mxu0 %v3464
        %3709 = vmatpush1.bf16.msra.mxu0 %v3463
        %3710 = vmatprep.subr.bf16.mxu0 %v3472
        %3711 = vmatpush1.bf16.msra.mxu0 %v3471
        %3712 = vmatprep.subr.bf16.mxu0 0
        %3713 = vmatpush1.bf16.msra.mxu0 0
        %3714 = vmatprep.subr.bf16.mxu0 0
        %3715 = vmatpush1.bf16.msra.mxu0 0
        %3716 = vmatprep.subr.bf16.mxu0 0
        %3717 = vmatpush1.bf16.msra.mxu0 0
        %3718 = vmatprep.subr.bf16.mxu0 0
        %3719 = vmatpush1.bf16.msra.mxu0 0
        %3720 = vmatprep.subr.bf16.mxu0 0
        %3721 = vmatpush1.bf16.msra.mxu0 0
        %3722 = vmatprep.subr.bf16.mxu0 0
        %3723 = vmatpush1.bf16.msra.mxu0 0
        %3724 = vmatprep.subr.bf16.mxu0 0
        %3725 = vmatpush1.bf16.msra.mxu0 0
        %3726 = vmatprep.subr.bf16.mxu0 0
        %3727 = vmatpush1.bf16.msra.mxu0 0
        %3728 = vmatprep.mubr.bf16.mxu0 0
        %3729 = vmatmul.mubr.bf16.gmra.mrb[0].mxu0 %v3151
        %v3730 = vpop.f32.mrb[0].mxu0
        %v3731 = vadd.f32 0.0, %v3730
        %v3732 = vpop.f32.mrb[0].mxu0
        %v3733 = vadd.f32 0.0, %v3732
        %v3734 = vpop.f32.mrb[0].mxu0
        %v3735 = vadd.f32 0.0, %v3734
        %v3736 = vpop.f32.mrb[0].mxu0
        %v3737 = vadd.f32 0.0, %v3736
        %3738 = vmatprep.mubr.bf16.mxu0 0
        %3739 = vmatmul.mubr.bf16.gmra.mrb[0].mxu0 %v3152
        %v3740 = vpop.f32.mrb[0].mxu0
        %v3741 = vadd.f32 0.0, %v3740
        %v3742 = vpop.f32.mrb[0].mxu0
        %v3743 = vadd.f32 0.0, %v3742
        %v3744 = vpop.f32.mrb[0].mxu0
        %v3745 = vadd.f32 0.0, %v3744
        %v3746 = vpop.f32.mrb[0].mxu0
        %v3747 = vadd.f32 0.0, %v3746
        %3748 = vdwg.mxu0
        %v3749 = vsub.f32 %v2087, %v3572
        %v3750 = vsub.f32 %v2089, %v3574
        %v3751 = vsub.f32 %v2193, %v3625
        %v3752 = vsub.f32 %v2195, %v3627
        %v3753 = vsub.f32 %v2299, %v3678
        %v3754 = vsub.f32 %v2301, %v3680
        %v3755 = vsub.f32 %v2405, %v3731
        %v3756 = vsub.f32 %v2407, %v3733
        %v3757 = vsub.f32 %v2091, %v3576
        %v3758 = vsub.f32 %v2093, %v3578
        %v3759 = vsub.f32 %v2197, %v3629
        %v3760 = vsub.f32 %v2199, %v3631
        %v3761 = vsub.f32 %v2303, %v3682
        %v3762 = vsub.f32 %v2305, %v3684
        %v3763 = vsub.f32 %v2409, %v3735
        %v3764 = vsub.f32 %v2411, %v3737
        %v3765 = vsub.f32 %v2097, %v3582
        %v3766 = vsub.f32 %v2099, %v3584
        %v3767 = vsub.f32 %v2203, %v3635
        %v3768 = vsub.f32 %v2205, %v3637
        %v3769 = vsub.f32 %v2309, %v3688
        %v3770 = vsub.f32 %v2311, %v3690
        %v3771 = vsub.f32 %v2415, %v3741
        %v3772 = vsub.f32 %v2417, %v3743
        %v3773 = vsub.f32 %v2101, %v3586
        %v3774 = vsub.f32 %v2103, %v3588
        %v3775 = vsub.f32 %v2207, %v3639
        %v3776 = vsub.f32 %v2209, %v3641
        %v3777 = vsub.f32 %v2313, %v3692
        %v3778 = vsub.f32 %v2315, %v3694
        %v3779 = vsub.f32 %v2419, %v3745
        %v3780 = vsub.f32 %v2421, %v3747
        %v3781 = vmul.f32 %v3749, %v3749
        %v3782 = vmul.f32 %v3750, %v3750
        %v3783 = vmul.f32 %v3751, %v3751
        %v3784 = vmul.f32 %v3752, %v3752
        %v3785 = vmul.f32 %v3753, %v3753
        %v3786 = vmul.f32 %v3754, %v3754
        %v3787 = vmul.f32 %v3755, %v3755
        %v3788 = vmul.f32 %v3756, %v3756
        %v3789 = vmul.f32 %v3757, %v3757
        %v3790 = vmul.f32 %v3758, %v3758
        %v3791 = vmul.f32 %v3759, %v3759
        %v3792 = vmul.f32 %v3760, %v3760
        %v3793 = vmul.f32 %v3761, %v3761
        %v3794 = vmul.f32 %v3762, %v3762
        %v3795 = vmul.f32 %v3763, %v3763
        %v3796 = vmul.f32 %v3764, %v3764
        %v3797 = vmul.f32 %v3765, %v3765
        %v3798 = vmul.f32 %v3766, %v3766
        %v3799 = vmul.f32 %v3767, %v3767
        %v3800 = vmul.f32 %v3768, %v3768
        %v3801 = vmul.f32 %v3769, %v3769
        %v3802 = vmul.f32 %v3770, %v3770
        %v3803 = vmul.f32 %v3771, %v3771
        %v3804 = vmul.f32 %v3772, %v3772
        %v3805 = vmul.f32 %v3773, %v3773
        %v3806 = vmul.f32 %v3774, %v3774
        %v3807 = vmul.f32 %v3775, %v3775
        %v3808 = vmul.f32 %v3776, %v3776
        %v3809 = vmul.f32 %v3777, %v3777
        %v3810 = vmul.f32 %v3778, %v3778
        %v3811 = vmul.f32 %v3779, %v3779
        %v3812 = vmul.f32 %v3780, %v3780
        %v3813 = vpack.c.bf16 %v3789, %v3781
        %v3814 = vpack.c.bf16 %v3790, %v3782
        %v3815 = vpack.c.bf16 %v3791, %v3783
        %v3816 = vpack.c.bf16 %v3792, %v3784
        %v3817 = vpack.c.bf16 %v3793, %v3785
        %v3818 = vpack.c.bf16 %v3794, %v3786
        %v3819 = vpack.c.bf16 %v3795, %v3787
        %v3820 = vpack.c.bf16 %v3796, %v3788
        %v3821 = vpack.c.bf16 %v3805, %v3797
        %v3822 = vpack.c.bf16 %v3806, %v3798
        %v3823 = vpack.c.bf16 %v3807, %v3799
        %v3824 = vpack.c.bf16 %v3808, %v3800
        %v3825 = vpack.c.bf16 %v3809, %v3801
        %v3826 = vpack.c.bf16 %v3810, %v3802
        %v3827 = vpack.c.bf16 %v3811, %v3803
        %v3828 = vpack.c.bf16 %v3812, %v3804
        %3829 = vmatprep.subr.bf16.mxu0 0
        %3830 = vmatpush1.bf16.msra.mxu0 %v2823
        %3831 = vmatprep.subr.bf16.mxu0 0
        %3832 = vmatpush1.bf16.msra.mxu0 %v2824
        %3833 = vmatprep.subr.bf16.mxu0 0
        %3834 = vmatpush1.bf16.msra.mxu0 %v2825
        %3835 = vmatprep.subr.bf16.mxu0 0
        %3836 = vmatpush1.bf16.msra.mxu0 %v2826
        %3837 = vmatprep.subr.bf16.mxu0 0
        %3838 = vmatpush1.bf16.msra.mxu0 %v2827
        %3839 = vmatprep.subr.bf16.mxu0 0
        %3840 = vmatpush1.bf16.msra.mxu0 %v2828
        %3841 = vmatprep.subr.bf16.mxu0 0
        %3842 = vmatpush1.bf16.msra.mxu0 %v2829
        %3843 = vmatprep.subr.bf16.mxu0 0
        %3844 = vmatpush1.bf16.msra.mxu0 %v2830
        %3845 = vmatprep.subr.bf16.mxu0 0
        %3846 = vmatpush1.bf16.msra.mxu0 %v2831
        %3847 = vmatprep.subr.bf16.mxu0 0
        %3848 = vmatpush1.bf16.msra.mxu0 %v2832
        %3849 = vmatprep.subr.bf16.mxu0 0
        %3850 = vmatpush1.bf16.msra.mxu0 %v2833
        %3851 = vmatprep.subr.bf16.mxu0 0
        %3852 = vmatpush1.bf16.msra.mxu0 %v2834
        %3853 = vmatprep.subr.bf16.mxu0 0
        %3854 = vmatpush1.bf16.msra.mxu0 %v2835
        %3855 = vmatprep.subr.bf16.mxu0 0
        %3856 = vmatpush1.bf16.msra.mxu0 %v2836
        %3857 = vmatprep.subr.bf16.mxu0 0
        %3858 = vmatpush1.bf16.msra.mxu0 %v2837
        %3859 = vmatprep.subr.bf16.mxu0 0
        %3860 = vmatpush1.bf16.msra.mxu0 %v2838
        %3861 = vmatprep.mubr.bf16.mxu0 %v3814
        %3862 = vmatmul.mubr.bf16.gmra.mrb[0].mxu0 %v3813
        %v3863 = vpop.f32.mrb[0].mxu0
        %v3864 = vadd.f32 0.0, %v3863
        %v3865 = vpop.f32.mrb[0].mxu0
        %v3866 = vpop.f32.mrb[0].mxu0
        %v3867 = vadd.f32 0.0, %v3866
        %v3868 = vpop.f32.mrb[0].mxu0
        %3869 = vmatprep.mubr.bf16.mxu0 %v3822
        %3870 = vmatmul.mubr.bf16.gmra.mrb[0].mxu0 %v3821
        %v3871 = vpop.f32.mrb[0].mxu0
        %v3872 = vadd.f32 0.0, %v3871
        %v3873 = vpop.f32.mrb[0].mxu0
        %v3874 = vpop.f32.mrb[0].mxu0
        %v3875 = vadd.f32 0.0, %v3874
        %v3876 = vpop.f32.mrb[0].mxu0
        %3877 = vdwg.mxu0
        %3878 = vmatprep.subr.bf16.mxu0 0
        %3879 = vmatpush1.bf16.msra.mxu0 %v2839
        %3880 = vmatprep.subr.bf16.mxu0 0
        %3881 = vmatpush1.bf16.msra.mxu0 %v2840
        %3882 = vmatprep.subr.bf16.mxu0 0
        %3883 = vmatpush1.bf16.msra.mxu0 %v2841
        %3884 = vmatprep.subr.bf16.mxu0 0
        %3885 = vmatpush1.bf16.msra.mxu0 %v2842
        %3886 = vmatprep.subr.bf16.mxu0 0
        %3887 = vmatpush1.bf16.msra.mxu0 %v2843
        %3888 = vmatprep.subr.bf16.mxu0 0
        %3889 = vmatpush1.bf16.msra.mxu0 %v2844
        %3890 = vmatprep.subr.bf16.mxu0 0
        %3891 = vmatpush1.bf16.msra.mxu0 %v2845
        %3892 = vmatprep.subr.bf16.mxu0 0
        %3893 = vmatpush1.bf16.msra.mxu0 %v2846
        %3894 = vmatprep.subr.bf16.mxu0 0
        %3895 = vmatpush1.bf16.msra.mxu0 %v2847
        %3896 = vmatprep.subr.bf16.mxu0 0
        %3897 = vmatpush1.bf16.msra.mxu0 %v2848
        %3898 = vmatprep.subr.bf16.mxu0 0
        %3899 = vmatpush1.bf16.msra.mxu0 %v2849
        %3900 = vmatprep.subr.bf16.mxu0 0
        %3901 = vmatpush1.bf16.msra.mxu0 %v2850
        %3902 = vmatprep.subr.bf16.mxu0 0
        %3903 = vmatpush1.bf16.msra.mxu0 %v2851
        %3904 = vmatprep.subr.bf16.mxu0 0
        %3905 = vmatpush1.bf16.msra.mxu0 %v2852
        %3906 = vmatprep.subr.bf16.mxu0 0
        %3907 = vmatpush1.bf16.msra.mxu0 %v2853
        %3908 = vmatprep.subr.bf16.mxu0 0
        %3909 = vmatpush1.bf16.msra.mxu0 %v2854
        %3910 = vmatprep.mubr.bf16.mxu0 %v3816
        %3911 = vmatmul.mubr.bf16.gmra.mrb[0].mxu0 %v3815
        %v3912 = vpop.f32.mrb[0].mxu0
        %v3913 = vadd.f32 %v3864, %v3912
        %v3914 = vpop.f32.mrb[0].mxu0
        %v3915 = vpop.f32.mrb[0].mxu0
        %v3916 = vadd.f32 %v3867, %v3915
        %v3917 = vpop.f32.mrb[0].mxu0
        %3918 = vmatprep.mubr.bf16.mxu0 %v3824
        %3919 = vmatmul.mubr.bf16.gmra.mrb[0].mxu0 %v3823
        %v3920 = vpop.f32.mrb[0].mxu0
        %v3921 = vadd.f32 %v3872, %v3920
        %v3922 = vpop.f32.mrb[0].mxu0
        %v3923 = vpop.f32.mrb[0].mxu0
        %v3924 = vadd.f32 %v3875, %v3923
        %v3925 = vpop.f32.mrb[0].mxu0
        %3926 = vdwg.mxu0
        %3927 = vmatprep.subr.bf16.mxu0 0
        %3928 = vmatpush1.bf16.msra.mxu0 %v2855
        %3929 = vmatprep.subr.bf16.mxu0 0
        %3930 = vmatpush1.bf16.msra.mxu0 %v2856
        %3931 = vmatprep.subr.bf16.mxu0 0
        %3932 = vmatpush1.bf16.msra.mxu0 %v2857
        %3933 = vmatprep.subr.bf16.mxu0 0
        %3934 = vmatpush1.bf16.msra.mxu0 %v2858
        %3935 = vmatprep.subr.bf16.mxu0 0
        %3936 = vmatpush1.bf16.msra.mxu0 %v2859
        %3937 = vmatprep.subr.bf16.mxu0 0
        %3938 = vmatpush1.bf16.msra.mxu0 %v2860
        %3939 = vmatprep.subr.bf16.mxu0 0
        %3940 = vmatpush1.bf16.msra.mxu0 %v2861
        %3941 = vmatprep.subr.bf16.mxu0 0
        %3942 = vmatpush1.bf16.msra.mxu0 %v2862
        %3943 = vmatprep.subr.bf16.mxu0 0
        %3944 = vmatpush1.bf16.msra.mxu0 %v2863
        %3945 = vmatprep.subr.bf16.mxu0 0
        %3946 = vmatpush1.bf16.msra.mxu0 %v2864
        %3947 = vmatprep.subr.bf16.mxu0 0
        %3948 = vmatpush1.bf16.msra.mxu0 %v2865
        %3949 = vmatprep.subr.bf16.mxu0 0
        %3950 = vmatpush1.bf16.msra.mxu0 %v2866
        %3951 = vmatprep.subr.bf16.mxu0 0
        %3952 = vmatpush1.bf16.msra.mxu0 %v2867
        %3953 = vmatprep.subr.bf16.mxu0 0
        %3954 = vmatpush1.bf16.msra.mxu0 %v2868
        %3955 = vmatprep.subr.bf16.mxu0 0
        %3956 = vmatpush1.bf16.msra.mxu0 %v2869
        %3957 = vmatprep.subr.bf16.mxu0 0
        %3958 = vmatpush1.bf16.msra.mxu0 %v2870
        %3959 = vmatprep.mubr.bf16.mxu0 %v3818
        %3960 = vmatmul.mubr.bf16.gmra.mrb[0].mxu0 %v3817
        %v3961 = vpop.f32.mrb[0].mxu0
        %v3962 = vadd.f32 %v3913, %v3961
        %v3963 = vpop.f32.mrb[0].mxu0
        %v3964 = vpop.f32.mrb[0].mxu0
        %v3965 = vadd.f32 %v3916, %v3964
        %v3966 = vpop.f32.mrb[0].mxu0
        %3967 = vmatprep.mubr.bf16.mxu0 %v3826
        %3968 = vmatmul.mubr.bf16.gmra.mrb[0].mxu0 %v3825
        %v3969 = vpop.f32.mrb[0].mxu0
        %v3970 = vadd.f32 %v3921, %v3969
        %v3971 = vpop.f32.mrb[0].mxu0
        %v3972 = vpop.f32.mrb[0].mxu0
        %v3973 = vadd.f32 %v3924, %v3972
        %v3974 = vpop.f32.mrb[0].mxu0
        %3975 = vdwg.mxu0
        %3976 = vmatprep.subr.bf16.mxu0 0
        %3977 = vmatpush1.bf16.msra.mxu0 %v2871
        %3978 = vmatprep.subr.bf16.mxu0 0
        %3979 = vmatpush1.bf16.msra.mxu0 %v2872
        %3980 = vmatprep.subr.bf16.mxu0 0
        %3981 = vmatpush1.bf16.msra.mxu0 %v2873
        %3982 = vmatprep.subr.bf16.mxu0 0
        %3983 = vmatpush1.bf16.msra.mxu0 %v2874
        %3984 = vmatprep.subr.bf16.mxu0 0
        %3985 = vmatpush1.bf16.msra.mxu0 %v2875
        %3986 = vmatprep.subr.bf16.mxu0 0
        %3987 = vmatpush1.bf16.msra.mxu0 %v2876
        %3988 = vmatprep.subr.bf16.mxu0 0
        %3989 = vmatpush1.bf16.msra.mxu0 %v2877
        %3990 = vmatprep.subr.bf16.mxu0 0
        %3991 = vmatpush1.bf16.msra.mxu0 %v2878
        %3992 = vmatprep.subr.bf16.mxu0 0
        %3993 = vmatpush1.bf16.msra.mxu0 %v2879
        %3994 = vmatprep.subr.bf16.mxu0 0
        %3995 = vmatpush1.bf16.msra.mxu0 %v2880
        %3996 = vmatprep.subr.bf16.mxu0 0
        %3997 = vmatpush1.bf16.msra.mxu0 %v2881
        %3998 = vmatprep.subr.bf16.mxu0 0
        %3999 = vmatpush1.bf16.msra.mxu0 %v2882
        %4000 = vmatprep.subr.bf16.mxu0 0
        %4001 = vmatpush1.bf16.msra.mxu0 %v2883
        %4002 = vmatprep.subr.bf16.mxu0 0
        %4003 = vmatpush1.bf16.msra.mxu0 %v2884
        %4004 = vmatprep.subr.bf16.mxu0 0
        %4005 = vmatpush1.bf16.msra.mxu0 %v2885
        %4006 = vmatprep.subr.bf16.mxu0 0
        %4007 = vmatpush1.bf16.msra.mxu0 %v2886
        %4008 = vmatprep.mubr.bf16.mxu0 %v3820
        %4009 = vmatmul.mubr.bf16.gmra.mrb[0].mxu0 %v3819
        %v4010 = vpop.f32.mrb[0].mxu0
        %v4011 = vadd.f32 %v3962, %v4010
        %v4012 = vpop.f32.mrb[0].mxu0
        %v4013 = vpop.f32.mrb[0].mxu0
        %v4014 = vadd.f32 %v3965, %v4013
        %v4015 = vpop.f32.mrb[0].mxu0
        %4016 = vmatprep.mubr.bf16.mxu0 %v3828
        %4017 = vmatmul.mubr.bf16.gmra.mrb[0].mxu0 %v3827
        %v4018 = vpop.f32.mrb[0].mxu0
        %v4019 = vadd.f32 %v3970, %v4018
        %v4020 = vpop.f32.mrb[0].mxu0
        %v4021 = vpop.f32.mrb[0].mxu0
        %v4022 = vadd.f32 %v3973, %v4021
        %v4023 = vpop.f32.mrb[0].mxu0
        %4024 = vdwg.mxu0
        %v4025 = vmul.f32 %v4011, 0.015625
        %v4026 = vmul.f32 %v4014, 0.015625
        %v4027 = vmul.f32 %v4019, 0.015625
        %v4028 = vmul.f32 %v4022, 0.015625
        %v4029 = vadd.f32 %v4025, 1e-05
        %v4030 = vadd.f32 %v4026, 1e-05
        %v4031 = vadd.f32 %v4027, 1e-05
        %v4032 = vadd.f32 %v4028, 1e-05
        %v4033 = vrsqrt.pop %v4029
        %v4034 = vrsqrt.pop %v4030
        %v4035 = vrsqrt.pop %v4031
        %v4036 = vrsqrt.pop %v4032
        %v4037 = vpack.c.bf16 %v4034, %v4033
        %v4038 = vpack.c.bf16 %v4036, %v4035
        %4039 = vmatprep.subr.bf16.mxu0 %v3410
        %4040 = vmatpush1.bf16.msra.mxu0 %v3409
        %4041 = vmatprep.subr.bf16.mxu0 %v3418
        %4042 = vmatpush1.bf16.msra.mxu0 %v3417
        %4043 = vmatprep.subr.bf16.mxu0 %v3426
        %4044 = vmatpush1.bf16.msra.mxu0 %v3425
        %4045 = vmatprep.subr.bf16.mxu0 %v3434
        %4046 = vmatpush1.bf16.msra.mxu0 %v3433
        %4047 = vmatprep.subr.bf16.mxu0 %v3442
        %4048 = vmatpush1.bf16.msra.mxu0 %v3441
        %4049 = vmatprep.subr.bf16.mxu0 %v3450
        %4050 = vmatpush1.bf16.msra.mxu0 %v3449
        %4051 = vmatprep.subr.bf16.mxu0 %v3458
        %4052 = vmatpush1.bf16.msra.mxu0 %v3457
        %4053 = vmatprep.subr.bf16.mxu0 %v3466
        %4054 = vmatpush1.bf16.msra.mxu0 %v3465
        %4055 = vmatprep.subr.bf16.mxu0 0
        %4056 = vmatpush1.bf16.msra.mxu0 0
        %4057 = vmatprep.subr.bf16.mxu0 0
        %4058 = vmatpush1.bf16.msra.mxu0 0
        %4059 = vmatprep.subr.bf16.mxu0 0
        %4060 = vmatpush1.bf16.msra.mxu0 0
        %4061 = vmatprep.subr.bf16.mxu0 0
        %4062 = vmatpush1.bf16.msra.mxu0 0
        %4063 = vmatprep.subr.bf16.mxu0 0
        %4064 = vmatpush1.bf16.msra.mxu0 0
        %4065 = vmatprep.subr.bf16.mxu0 0
        %4066 = vmatpush1.bf16.msra.mxu0 0
        %4067 = vmatprep.subr.bf16.mxu0 0
        %4068 = vmatpush1.bf16.msra.mxu0 0
        %4069 = vmatprep.subr.bf16.mxu0 0
        %4070 = vmatpush1.bf16.msra.mxu0 0
        %4071 = vmatprep.mubr.bf16.mxu0 0
        %4072 = vmatmul.mubr.bf16.gmra.mrb[0].mxu0 %v4037
        %v4073 = vpop.f32.mrb[0].mxu0
        %v4074 = vadd.f32 0.0, %v4073
        %v4075 = vpop.f32.mrb[0].mxu0
        %v4076 = vadd.f32 0.0, %v4075
        %v4077 = vpop.f32.mrb[0].mxu0
        %v4078 = vadd.f32 0.0, %v4077
        %v4079 = vpop.f32.mrb[0].mxu0
        %v4080 = vadd.f32 0.0, %v4079
        %4081 = vmatprep.mubr.bf16.mxu0 0
        %4082 = vmatmul.mubr.bf16.gmra.mrb[0].mxu0 %v4038
        %v4083 = vpop.f32.mrb[0].mxu0
        %v4084 = vadd.f32 0.0, %v4083
        %v4085 = vpop.f32.mrb[0].mxu0
        %v4086 = vadd.f32 0.0, %v4085
        %v4087 = vpop.f32.mrb[0].mxu0
        %v4088 = vadd.f32 0.0, %v4087
        %v4089 = vpop.f32.mrb[0].mxu0
        %v4090 = vadd.f32 0.0, %v4089
        %4091 = vdwg.mxu0
        %4092 = vmatprep.subr.bf16.mxu0 %v3412
        %4093 = vmatpush1.bf16.msra.mxu0 %v3411
        %4094 = vmatprep.subr.bf16.mxu0 %v3420
        %4095 = vmatpush1.bf16.msra.mxu0 %v3419
        %4096 = vmatprep.subr.bf16.mxu0 %v3428
        %4097 = vmatpush1.bf16.msra.mxu0 %v3427
        %4098 = vmatprep.subr.bf16.mxu0 %v3436
        %4099 = vmatpush1.bf16.msra.mxu0 %v3435
        %4100 = vmatprep.subr.bf16.mxu0 %v3444
        %4101 = vmatpush1.bf16.msra.mxu0 %v3443
        %4102 = vmatprep.subr.bf16.mxu0 %v3452
        %4103 = vmatpush1.bf16.msra.mxu0 %v3451
        %4104 = vmatprep.subr.bf16.mxu0 %v3460
        %4105 = vmatpush1.bf16.msra.mxu0 %v3459
        %4106 = vmatprep.subr.bf16.mxu0 %v3468
        %4107 = vmatpush1.bf16.msra.mxu0 %v3467
        %4108 = vmatprep.subr.bf16.mxu0 0
        %4109 = vmatpush1.bf16.msra.mxu0 0
        %4110 = vmatprep.subr.bf16.mxu0 0
        %4111 = vmatpush1.bf16.msra.mxu0 0
        %4112 = vmatprep.subr.bf16.mxu0 0
        %4113 = vmatpush1.bf16.msra.mxu0 0
        %4114 = vmatprep.subr.bf16.mxu0 0
        %4115 = vmatpush1.bf16.msra.mxu0 0
        %4116 = vmatprep.subr.bf16.mxu0 0
        %4117 = vmatpush1.bf16.msra.mxu0 0
        %4118 = vmatprep.subr.bf16.mxu0 0
        %4119 = vmatpush1.bf16.msra.mxu0 0
        %4120 = vmatprep.subr.bf16.mxu0 0
        %4121 = vmatpush1.bf16.msra.mxu0 0
        %4122 = vmatprep.subr.bf16.mxu0 0
        %4123 = vmatpush1.bf16.msra.mxu0 0
        %4124 = vmatprep.mubr.bf16.mxu0 0
        %4125 = vmatmul.mubr.bf16.gmra.mrb[0].mxu0 %v4037
        %v4126 = vpop.f32.mrb[0].mxu0
        %v4127 = vadd.f32 0.0, %v4126
        %v4128 = vpop.f32.mrb[0].mxu0
        %v4129 = vadd.f32 0.0, %v4128
        %v4130 = vpop.f32.mrb[0].mxu0
        %v4131 = vadd.f32 0.0, %v4130
        %v4132 = vpop.f32.mrb[0].mxu0
        %v4133 = vadd.f32 0.0, %v4132
        %4134 = vmatprep.mubr.bf16.mxu0 0
        %4135 = vmatmul.mubr.bf16.gmra.mrb[0].mxu0 %v4038
        %v4136 = vpop.f32.mrb[0].mxu0
        %v4137 = vadd.f32 0.0, %v4136
        %v4138 = vpop.f32.mrb[0].mxu0
        %v4139 = vadd.f32 0.0, %v4138
        %v4140 = vpop.f32.mrb[0].mxu0
        %v4141 = vadd.f32 0.0, %v4140
        %v4142 = vpop.f32.mrb[0].mxu0
        %v4143 = vadd.f32 0.0, %v4142
        %4144 = vdwg.mxu0
        %4145 = vmatprep.subr.bf16.mxu0 %v3414
        %4146 = vmatpush1.bf16.msra.mxu0 %v3413
        %4147 = vmatprep.subr.bf16.mxu0 %v3422
        %4148 = vmatpush1.bf16.msra.mxu0 %v3421
        %4149 = vmatprep.subr.bf16.mxu0 %v3430
        %4150 = vmatpush1.bf16.msra.mxu0 %v3429
        %4151 = vmatprep.subr.bf16.mxu0 %v3438
        %4152 = vmatpush1.bf16.msra.mxu0 %v3437
        %4153 = vmatprep.subr.bf16.mxu0 %v3446
        %4154 = vmatpush1.bf16.msra.mxu0 %v3445
        %4155 = vmatprep.subr.bf16.mxu0 %v3454
        %4156 = vmatpush1.bf16.msra.mxu0 %v3453
        %4157 = vmatprep.subr.bf16.mxu0 %v3462
        %4158 = vmatpush1.bf16.msra.mxu0 %v3461
        %4159 = vmatprep.subr.bf16.mxu0 %v3470
        %4160 = vmatpush1.bf16.msra.mxu0 %v3469
        %4161 = vmatprep.subr.bf16.mxu0 0
        %4162 = vmatpush1.bf16.msra.mxu0 0
        %4163 = vmatprep.subr.bf16.mxu0 0
        %4164 = vmatpush1.bf16.msra.mxu0 0
        %4165 = vmatprep.subr.bf16.mxu0 0
        %4166 = vmatpush1.bf16.msra.mxu0 0
        %4167 = vmatprep.subr.bf16.mxu0 0
        %4168 = vmatpush1.bf16.msra.mxu0 0
        %4169 = vmatprep.subr.bf16.mxu0 0
        %4170 = vmatpush1.bf16.msra.mxu0 0
        %4171 = vmatprep.subr.bf16.mxu0 0
        %4172 = vmatpush1.bf16.msra.mxu0 0
        %4173 = vmatprep.subr.bf16.mxu0 0
        %4174 = vmatpush1.bf16.msra.mxu0 0
        %4175 = vmatprep.subr.bf16.mxu0 0
        %4176 = vmatpush1.bf16.msra.mxu0 0
        %4177 = vmatprep.mubr.bf16.mxu0 0
        %4178 = vmatmul.mubr.bf16.gmra.mrb[0].mxu0 %v4037
        %v4179 = vpop.f32.mrb[0].mxu0
        %v4180 = vadd.f32 0.0, %v4179
        %v4181 = vpop.f32.mrb[0].mxu0
        %v4182 = vadd.f32 0.0, %v4181
        %v4183 = vpop.f32.mrb[0].mxu0
        %v4184 = vadd.f32 0.0, %v4183
        %v4185 = vpop.f32.mrb[0].mxu0
        %v4186 = vadd.f32 0.0, %v4185
        %4187 = vmatprep.mubr.bf16.mxu0 0
        %4188 = vmatmul.mubr.bf16.gmra.mrb[0].mxu0 %v4038
        %v4189 = vpop.f32.mrb[0].mxu0
        %v4190 = vadd.f32 0.0, %v4189
        %v4191 = vpop.f32.mrb[0].mxu0
        %v4192 = vadd.f32 0.0, %v4191
        %v4193 = vpop.f32.mrb[0].mxu0
        %v4194 = vadd.f32 0.0, %v4193
        %v4195 = vpop.f32.mrb[0].mxu0
        %v4196 = vadd.f32 0.0, %v4195
        %4197 = vdwg.mxu0
        %4198 = vmatprep.subr.bf16.mxu0 %v3416
        %4199 = vmatpush1.bf16.msra.mxu0 %v3415
        %4200 = vmatprep.subr.bf16.mxu0 %v3424
        %4201 = vmatpush1.bf16.msra.mxu0 %v3423
        %4202 = vmatprep.subr.bf16.mxu0 %v3432
        %4203 = vmatpush1.bf16.msra.mxu0 %v3431
        %4204 = vmatprep.subr.bf16.mxu0 %v3440
        %4205 = vmatpush1.bf16.msra.mxu0 %v3439
        %4206 = vmatprep.subr.bf16.mxu0 %v3448
        %4207 = vmatpush1.bf16.msra.mxu0 %v3447
        %4208 = vmatprep.subr.bf16.mxu0 %v3456
        %4209 = vmatpush1.bf16.msra.mxu0 %v3455
        %4210 = vmatprep.subr.bf16.mxu0 %v3464
        %4211 = vmatpush1.bf16.msra.mxu0 %v3463
        %4212 = vmatprep.subr.bf16.mxu0 %v3472
        %4213 = vmatpush1.bf16.msra.mxu0 %v3471
        %4214 = vmatprep.subr.bf16.mxu0 0
        %4215 = vmatpush1.bf16.msra.mxu0 0
        %4216 = vmatprep.subr.bf16.mxu0 0
        %4217 = vmatpush1.bf16.msra.mxu0 0
        %4218 = vmatprep.subr.bf16.mxu0 0
        %4219 = vmatpush1.bf16.msra.mxu0 0
        %4220 = vmatprep.subr.bf16.mxu0 0
        %4221 = vmatpush1.bf16.msra.mxu0 0
        %4222 = vmatprep.subr.bf16.mxu0 0
        %4223 = vmatpush1.bf16.msra.mxu0 0
        %4224 = vmatprep.subr.bf16.mxu0 0
        %4225 = vmatpush1.bf16.msra.mxu0 0
        %4226 = vmatprep.subr.bf16.mxu0 0
        %4227 = vmatpush1.bf16.msra.mxu0 0
        %4228 = vmatprep.subr.bf16.mxu0 0
        %4229 = vmatpush1.bf16.msra.mxu0 0
        %4230 = vmatprep.mubr.bf16.mxu0 0
        %4231 = vmatmul.mubr.bf16.gmra.mrb[0].mxu0 %v4037
        %v4232 = vpop.f32.mrb[0].mxu0
        %v4233 = vadd.f32 0.0, %v4232
        %v4234 = vpop.f32.mrb[0].mxu0
        %v4235 = vadd.f32 0.0, %v4234
        %v4236 = vpop.f32.mrb[0].mxu0
        %v4237 = vadd.f32 0.0, %v4236
        %v4238 = vpop.f32.mrb[0].mxu0
        %v4239 = vadd.f32 0.0, %v4238
        %4240 = vmatprep.mubr.bf16.mxu0 0
        %4241 = vmatmul.mubr.bf16.gmra.mrb[0].mxu0 %v4038
        %v4242 = vpop.f32.mrb[0].mxu0
        %v4243 = vadd.f32 0.0, %v4242
        %v4244 = vpop.f32.mrb[0].mxu0
        %v4245 = vadd.f32 0.0, %v4244
        %v4246 = vpop.f32.mrb[0].mxu0
        %v4247 = vadd.f32 0.0, %v4246
        %v4248 = vpop.f32.mrb[0].mxu0
        %v4249 = vadd.f32 0.0, %v4248
        %4250 = vdwg.mxu0
        %v4251 = vld [vmem:[%s3] sm:$0xff]
        %v4253 = vlaneseq
        %v4254 = vshrl.u32 %v4253, 7
        %v4255 = vsub.s32 0, %v4254
        %v4256 = vrot.slane %v4251, %v4255
        %v4257 = vlaneseq
        %v4258 = vshrl.u32 %v4257, 7
        %v4259 = vsub.s32 1, %v4258
        %v4260 = vrot.slane %v4251, %v4259
        %v4261 = vlaneseq
        %v4262 = vshrl.u32 %v4261, 7
        %v4263 = vsub.s32 2, %v4262
        %v4264 = vrot.slane %v4251, %v4263
        %v4265 = vlaneseq
        %v4266 = vshrl.u32 %v4265, 7
        %v4267 = vsub.s32 3, %v4266
        %v4268 = vrot.slane %v4251, %v4267
        %v4269 = vlaneseq
        %v4270 = vshrl.u32 %v4269, 7
        %v4271 = vsub.s32 4, %v4270
        %v4272 = vrot.slane %v4251, %v4271
        %v4273 = vlaneseq
        %v4274 = vshrl.u32 %v4273, 7
        %v4275 = vsub.s32 5, %v4274
        %v4276 = vrot.slane %v4251, %v4275
        %v4277 = vlaneseq
        %v4278 = vshrl.u32 %v4277, 7
        %v4279 = vsub.s32 6, %v4278
        %v4280 = vrot.slane %v4251, %v4279
        %v4281 = vlaneseq
        %v4282 = vshrl.u32 %v4281, 7
        %v4283 = vsub.s32 7, %v4282
        %v4284 = vrot.slane %v4251, %v4283
        %v4293 = vmul.f32 %v4074, %v4256
        %v4294 = vmul.f32 %v4076, %v4260
        %v4295 = vmul.f32 %v4127, %v4264
        %v4296 = vmul.f32 %v4129, %v4268
        %v4297 = vmul.f32 %v4180, %v4272
        %v4298 = vmul.f32 %v4182, %v4276
        %v4299 = vmul.f32 %v4233, %v4280
        %v4300 = vmul.f32 %v4235, %v4284
        %v4301 = vmul.f32 %v4078, %v4256
        %v4302 = vmul.f32 %v4080, %v4260
        %v4303 = vmul.f32 %v4131, %v4264
        %v4304 = vmul.f32 %v4133, %v4268
        %v4305 = vmul.f32 %v4184, %v4272
        %v4306 = vmul.f32 %v4186, %v4276
        %v4307 = vmul.f32 %v4237, %v4280
        %v4308 = vmul.f32 %v4239, %v4284
        %v4309 = vmul.f32 %v4084, %v4256
        %v4310 = vmul.f32 %v4086, %v4260
        %v4311 = vmul.f32 %v4137, %v4264
        %v4312 = vmul.f32 %v4139, %v4268
        %v4313 = vmul.f32 %v4190, %v4272
        %v4314 = vmul.f32 %v4192, %v4276
        %v4315 = vmul.f32 %v4243, %v4280
        %v4316 = vmul.f32 %v4245, %v4284
        %v4317 = vmul.f32 %v4088, %v4256
        %v4318 = vmul.f32 %v4090, %v4260
        %v4319 = vmul.f32 %v4141, %v4264
        %v4320 = vmul.f32 %v4143, %v4268
        %v4321 = vmul.f32 %v4194, %v4272
        %v4322 = vmul.f32 %v4196, %v4276
        %v4323 = vmul.f32 %v4247, %v4280
        %v4324 = vmul.f32 %v4249, %v4284
        %v4325 = vmul.f32 %v3749, %v4293
        %v4326 = vmul.f32 %v3750, %v4294
        %v4327 = vmul.f32 %v3751, %v4295
        %v4328 = vmul.f32 %v3752, %v4296
        %v4329 = vmul.f32 %v3753, %v4297
        %v4330 = vmul.f32 %v3754, %v4298
        %v4331 = vmul.f32 %v3755, %v4299
        %v4332 = vmul.f32 %v3756, %v4300
        %v4333 = vmul.f32 %v3757, %v4301
        %v4334 = vmul.f32 %v3758, %v4302
        %v4335 = vmul.f32 %v3759, %v4303
        %v4336 = vmul.f32 %v3760, %v4304
        %v4337 = vmul.f32 %v3761, %v4305
        %v4338 = vmul.f32 %v3762, %v4306
        %v4339 = vmul.f32 %v3763, %v4307
        %v4340 = vmul.f32 %v3764, %v4308
        %v4341 = vmul.f32 %v3765, %v4309
        %v4342 = vmul.f32 %v3766, %v4310
        %v4343 = vmul.f32 %v3767, %v4311
        %v4344 = vmul.f32 %v3768, %v4312
        %v4345 = vmul.f32 %v3769, %v4313
        %v4346 = vmul.f32 %v3770, %v4314
        %v4347 = vmul.f32 %v3771, %v4315
        %v4348 = vmul.f32 %v3772, %v4316
        %v4349 = vmul.f32 %v3773, %v4317
        %v4350 = vmul.f32 %v3774, %v4318
        %v4351 = vmul.f32 %v3775, %v4319
        %v4352 = vmul.f32 %v3776, %v4320
        %v4353 = vmul.f32 %v3777, %v4321
        %v4354 = vmul.f32 %v3778, %v4322
        %v4355 = vmul.f32 %v3779, %v4323
        %v4356 = vmul.f32 %v3780, %v4324
        %v4357 = vld [vmem:[#allocation8] sm:$0xff]
        %v4359 = vlaneseq
        %v4360 = vshrl.u32 %v4359, 7
        %v4361 = vsub.s32 0, %v4360
        %v4362 = vrot.slane %v4357, %v4361
        %v4363 = vlaneseq
        %v4364 = vshrl.u32 %v4363, 7
        %v4365 = vsub.s32 1, %v4364
        %v4366 = vrot.slane %v4357, %v4365
        %v4367 = vlaneseq
        %v4368 = vshrl.u32 %v4367, 7
        %v4369 = vsub.s32 2, %v4368
        %v4370 = vrot.slane %v4357, %v4369
        %v4371 = vlaneseq
        %v4372 = vshrl.u32 %v4371, 7
        %v4373 = vsub.s32 3, %v4372
        %v4374 = vrot.slane %v4357, %v4373
        %v4375 = vlaneseq
        %v4376 = vshrl.u32 %v4375, 7
        %v4377 = vsub.s32 4, %v4376
        %v4378 = vrot.slane %v4357, %v4377
        %v4379 = vlaneseq
        %v4380 = vshrl.u32 %v4379, 7
        %v4381 = vsub.s32 5, %v4380
        %v4382 = vrot.slane %v4357, %v4381
        %v4383 = vlaneseq
        %v4384 = vshrl.u32 %v4383, 7
        %v4385 = vsub.s32 6, %v4384
        %v4386 = vrot.slane %v4357, %v4385
        %v4387 = vlaneseq
        %v4388 = vshrl.u32 %v4387, 7
        %v4389 = vsub.s32 7, %v4388
        %v4390 = vrot.slane %v4357, %v4389
        %v4399 = vadd.f32 %v4325, %v4362
        %v4400 = vadd.f32 %v4326, %v4366
        %v4401 = vadd.f32 %v4327, %v4370
        %v4402 = vadd.f32 %v4328, %v4374
        %v4403 = vadd.f32 %v4329, %v4378
        %v4404 = vadd.f32 %v4330, %v4382
        %v4405 = vadd.f32 %v4331, %v4386
        %v4406 = vadd.f32 %v4332, %v4390
        %v4407 = vadd.f32 %v4333, %v4362
        %v4408 = vadd.f32 %v4334, %v4366
        %v4409 = vadd.f32 %v4335, %v4370
        %v4410 = vadd.f32 %v4336, %v4374
        %v4411 = vadd.f32 %v4337, %v4378
        %v4412 = vadd.f32 %v4338, %v4382
        %v4413 = vadd.f32 %v4339, %v4386
        %v4414 = vadd.f32 %v4340, %v4390
        %v4415 = vadd.f32 %v4341, %v4362
        %v4416 = vadd.f32 %v4342, %v4366
        %v4417 = vadd.f32 %v4343, %v4370
        %v4418 = vadd.f32 %v4344, %v4374
        %v4419 = vadd.f32 %v4345, %v4378
        %v4420 = vadd.f32 %v4346, %v4382
        %v4421 = vadd.f32 %v4347, %v4386
        %v4422 = vadd.f32 %v4348, %v4390
        %v4423 = vadd.f32 %v4349, %v4362
        %v4424 = vadd.f32 %v4350, %v4366
        %v4425 = vadd.f32 %v4351, %v4370
        %v4426 = vadd.f32 %v4352, %v4374
        %v4427 = vadd.f32 %v4353, %v4378
        %v4428 = vadd.f32 %v4354, %v4382
        %v4429 = vadd.f32 %v4355, %v4386
        %v4430 = vadd.f32 %v4356, %v4390
        %v4431 = vmul.f32 %v4399, 0.5
        %v4432 = vmul.f32 %v4400, 0.5
        %v4433 = vmul.f32 %v4401, 0.5
        %v4434 = vmul.f32 %v4402, 0.5
        %v4435 = vmul.f32 %v4403, 0.5
        %v4436 = vmul.f32 %v4404, 0.5
        %v4437 = vmul.f32 %v4405, 0.5
        %v4438 = vmul.f32 %v4406, 0.5
        %v4439 = vmul.f32 %v4407, 0.5
        %v4440 = vmul.f32 %v4408, 0.5
        %v4441 = vmul.f32 %v4409, 0.5
        %v4442 = vmul.f32 %v4410, 0.5
        %v4443 = vmul.f32 %v4411, 0.5
        %v4444 = vmul.f32 %v4412, 0.5
        %v4445 = vmul.f32 %v4413, 0.5
        %v4446 = vmul.f32 %v4414, 0.5
        %v4447 = vmul.f32 %v4415, 0.5
        %v4448 = vmul.f32 %v4416, 0.5
        %v4449 = vmul.f32 %v4417, 0.5
        %v4450 = vmul.f32 %v4418, 0.5
        %v4451 = vmul.f32 %v4419, 0.5
        %v4452 = vmul.f32 %v4420, 0.5
        %v4453 = vmul.f32 %v4421, 0.5
        %v4454 = vmul.f32 %v4422, 0.5
        %v4455 = vmul.f32 %v4423, 0.5
        %v4456 = vmul.f32 %v4424, 0.5
        %v4457 = vmul.f32 %v4425, 0.5
        %v4458 = vmul.f32 %v4426, 0.5
        %v4459 = vmul.f32 %v4427, 0.5
        %v4460 = vmul.f32 %v4428, 0.5
        %v4461 = vmul.f32 %v4429, 0.5
        %v4462 = vmul.f32 %v4430, 0.5
        %v4463 = vtanh.pop %v4431
        %v4464 = vtanh.pop %v4432
        %v4465 = vtanh.pop %v4433
        %v4466 = vtanh.pop %v4434
        %v4467 = vtanh.pop %v4435
        %v4468 = vtanh.pop %v4436
        %v4469 = vtanh.pop %v4437
        %v4470 = vtanh.pop %v4438
        %v4471 = vtanh.pop %v4439
        %v4472 = vtanh.pop %v4440
        %v4473 = vtanh.pop %v4441
        %v4474 = vtanh.pop %v4442
        %v4475 = vtanh.pop %v4443
        %v4476 = vtanh.pop %v4444
        %v4477 = vtanh.pop %v4445
        %v4478 = vtanh.pop %v4446
        %v4479 = vtanh.pop %v4447
        %v4480 = vtanh.pop %v4448
        %v4481 = vtanh.pop %v4449
        %v4482 = vtanh.pop %v4450
        %v4483 = vtanh.pop %v4451
        %v4484 = vtanh.pop %v4452
        %v4485 = vtanh.pop %v4453
        %v4486 = vtanh.pop %v4454
        %v4487 = vtanh.pop %v4455
        %v4488 = vtanh.pop %v4456
        %v4489 = vtanh.pop %v4457
        %v4490 = vtanh.pop %v4458
        %v4491 = vtanh.pop %v4459
        %v4492 = vtanh.pop %v4460
        %v4493 = vtanh.pop %v4461
        %v4494 = vtanh.pop %v4462
        %v4495 = vadd.f32 %v4463, 1.0
        %v4496 = vadd.f32 %v4464, 1.0
        %v4497 = vadd.f32 %v4465, 1.0
        %v4498 = vadd.f32 %v4466, 1.0
        %v4499 = vadd.f32 %v4467, 1.0
        %v4500 = vadd.f32 %v4468, 1.0
        %v4501 = vadd.f32 %v4469, 1.0
        %v4502 = vadd.f32 %v4470, 1.0
        %v4503 = vadd.f32 %v4471, 1.0
        %v4504 = vadd.f32 %v4472, 1.0
        %v4505 = vadd.f32 %v4473, 1.0
        %v4506 = vadd.f32 %v4474, 1.0
        %v4507 = vadd.f32 %v4475, 1.0
        %v4508 = vadd.f32 %v4476, 1.0
        %v4509 = vadd.f32 %v4477, 1.0
        %v4510 = vadd.f32 %v4478, 1.0
        %v4511 = vadd.f32 %v4479, 1.0
        %v4512 = vadd.f32 %v4480, 1.0
        %v4513 = vadd.f32 %v4481, 1.0
        %v4514 = vadd.f32 %v4482, 1.0
        %v4515 = vadd.f32 %v4483, 1.0
        %v4516 = vadd.f32 %v4484, 1.0
        %v4517 = vadd.f32 %v4485, 1.0
        %v4518 = vadd.f32 %v4486, 1.0
        %v4519 = vadd.f32 %v4487, 1.0
        %v4520 = vadd.f32 %v4488, 1.0
        %v4521 = vadd.f32 %v4489, 1.0
        %v4522 = vadd.f32 %v4490, 1.0
        %v4523 = vadd.f32 %v4491, 1.0
        %v4524 = vadd.f32 %v4492, 1.0
        %v4525 = vadd.f32 %v4493, 1.0
        %v4526 = vadd.f32 %v4494, 1.0
        %v4527 = vmul.f32 %v4495, 0.5
        %v4528 = vmul.f32 %v4496, 0.5
        %v4529 = vmul.f32 %v4497, 0.5
        %v4530 = vmul.f32 %v4498, 0.5
        %v4531 = vmul.f32 %v4499, 0.5
        %v4532 = vmul.f32 %v4500, 0.5
        %v4533 = vmul.f32 %v4501, 0.5
        %v4534 = vmul.f32 %v4502, 0.5
        %v4535 = vmul.f32 %v4503, 0.5
        %v4536 = vmul.f32 %v4504, 0.5
        %v4537 = vmul.f32 %v4505, 0.5
        %v4538 = vmul.f32 %v4506, 0.5
        %v4539 = vmul.f32 %v4507, 0.5
        %v4540 = vmul.f32 %v4508, 0.5
        %v4541 = vmul.f32 %v4509, 0.5
        %v4542 = vmul.f32 %v4510, 0.5
        %v4543 = vmul.f32 %v4511, 0.5
        %v4544 = vmul.f32 %v4512, 0.5
        %v4545 = vmul.f32 %v4513, 0.5
        %v4546 = vmul.f32 %v4514, 0.5
        %v4547 = vmul.f32 %v4515, 0.5
        %v4548 = vmul.f32 %v4516, 0.5
        %v4549 = vmul.f32 %v4517, 0.5
        %v4550 = vmul.f32 %v4518, 0.5
        %v4551 = vmul.f32 %v4519, 0.5
        %v4552 = vmul.f32 %v4520, 0.5
        %v4553 = vmul.f32 %v4521, 0.5
        %v4554 = vmul.f32 %v4522, 0.5
        %v4555 = vmul.f32 %v4523, 0.5
        %v4556 = vmul.f32 %v4524, 0.5
        %v4557 = vmul.f32 %v4525, 0.5
        %v4558 = vmul.f32 %v4526, 0.5
        %v4559 = vmul.f32 %v4399, %v4527
        %v4560 = vmul.f32 %v4400, %v4528
        %v4561 = vmul.f32 %v4401, %v4529
        %v4562 = vmul.f32 %v4402, %v4530
        %v4563 = vmul.f32 %v4403, %v4531
        %v4564 = vmul.f32 %v4404, %v4532
        %v4565 = vmul.f32 %v4405, %v4533
        %v4566 = vmul.f32 %v4406, %v4534
        %v4567 = vmul.f32 %v4407, %v4535
        %v4568 = vmul.f32 %v4408, %v4536
        %v4569 = vmul.f32 %v4409, %v4537
        %v4570 = vmul.f32 %v4410, %v4538
        %v4571 = vmul.f32 %v4411, %v4539
        %v4572 = vmul.f32 %v4412, %v4540
        %v4573 = vmul.f32 %v4413, %v4541
        %v4574 = vmul.f32 %v4414, %v4542
        %v4575 = vmul.f32 %v4415, %v4543
        %v4576 = vmul.f32 %v4416, %v4544
        %v4577 = vmul.f32 %v4417, %v4545
        %v4578 = vmul.f32 %v4418, %v4546
        %v4579 = vmul.f32 %v4419, %v4547
        %v4580 = vmul.f32 %v4420, %v4548
        %v4581 = vmul.f32 %v4421, %v4549
        %v4582 = vmul.f32 %v4422, %v4550
        %v4583 = vmul.f32 %v4423, %v4551
        %v4584 = vmul.f32 %v4424, %v4552
        %v4585 = vmul.f32 %v4425, %v4553
        %v4586 = vmul.f32 %v4426, %v4554
        %v4587 = vmul.f32 %v4427, %v4555
        %v4588 = vmul.f32 %v4428, %v4556
        %v4589 = vmul.f32 %v4429, %v4557
        %v4590 = vmul.f32 %v4430, %v4558
        %v4591 = vld [vmem:[%s5] sm:$0xff]
        %v4593 = vlaneseq
        %v4594 = vshrl.u32 %v4593, 7
        %v4595 = vsub.s32 0, %v4594
        %v4596 = vrot.slane %v4591, %v4595
        %v4597 = vlaneseq
        %v4598 = vshrl.u32 %v4597, 7
        %v4599 = vsub.s32 1, %v4598
        %v4600 = vrot.slane %v4591, %v4599
        %v4601 = vlaneseq
        %v4602 = vshrl.u32 %v4601, 7
        %v4603 = vsub.s32 2, %v4602
        %v4604 = vrot.slane %v4591, %v4603
        %v4605 = vlaneseq
        %v4606 = vshrl.u32 %v4605, 7
        %v4607 = vsub.s32 3, %v4606
        %v4608 = vrot.slane %v4591, %v4607
        %v4609 = vlaneseq
        %v4610 = vshrl.u32 %v4609, 7
        %v4611 = vsub.s32 4, %v4610
        %v4612 = vrot.slane %v4591, %v4611
        %v4613 = vlaneseq
        %v4614 = vshrl.u32 %v4613, 7
        %v4615 = vsub.s32 5, %v4614
        %v4616 = vrot.slane %v4591, %v4615
        %v4617 = vlaneseq
        %v4618 = vshrl.u32 %v4617, 7
        %v4619 = vsub.s32 6, %v4618
        %v4620 = vrot.slane %v4591, %v4619
        %v4621 = vlaneseq
        %v4622 = vshrl.u32 %v4621, 7
        %v4623 = vsub.s32 7, %v4622
        %v4624 = vrot.slane %v4591, %v4623
        %v4633 = vmul.f32 %v4559, %v4596
        %v4634 = vmul.f32 %v4560, %v4600
        %v4635 = vmul.f32 %v4561, %v4604
        %v4636 = vmul.f32 %v4562, %v4608
        %v4637 = vmul.f32 %v4563, %v4612
        %v4638 = vmul.f32 %v4564, %v4616
        %v4639 = vmul.f32 %v4565, %v4620
        %v4640 = vmul.f32 %v4566, %v4624
        %v4641 = vmul.f32 %v4567, %v4596
        %v4642 = vmul.f32 %v4568, %v4600
        %v4643 = vmul.f32 %v4569, %v4604
        %v4644 = vmul.f32 %v4570, %v4608
        %v4645 = vmul.f32 %v4571, %v4612
        %v4646 = vmul.f32 %v4572, %v4616
        %v4647 = vmul.f32 %v4573, %v4620
        %v4648 = vmul.f32 %v4574, %v4624
        %v4649 = vmul.f32 %v4575, %v4596
        %v4650 = vmul.f32 %v4576, %v4600
        %v4651 = vmul.f32 %v4577, %v4604
        %v4652 = vmul.f32 %v4578, %v4608
        %v4653 = vmul.f32 %v4579, %v4612
        %v4654 = vmul.f32 %v4580, %v4616
        %v4655 = vmul.f32 %v4581, %v4620
        %v4656 = vmul.f32 %v4582, %v4624
        %v4657 = vmul.f32 %v4583, %v4596
        %v4658 = vmul.f32 %v4584, %v4600
        %v4659 = vmul.f32 %v4585, %v4604
        %v4660 = vmul.f32 %v4586, %v4608
        %v4661 = vmul.f32 %v4587, %v4612
        %v4662 = vmul.f32 %v4588, %v4616
        %v4663 = vmul.f32 %v4589, %v4620
        %v4664 = vmul.f32 %v4590, %v4624
        %v4665 = vmul.f32 %v4633, 0.5
        %v4666 = vmul.f32 %v4634, 0.5
        %v4667 = vmul.f32 %v4635, 0.5
        %v4668 = vmul.f32 %v4636, 0.5
        %v4669 = vmul.f32 %v4637, 0.5
        %v4670 = vmul.f32 %v4638, 0.5
        %v4671 = vmul.f32 %v4639, 0.5
        %v4672 = vmul.f32 %v4640, 0.5
        %v4673 = vmul.f32 %v4641, 0.5
        %v4674 = vmul.f32 %v4642, 0.5
        %v4675 = vmul.f32 %v4643, 0.5
        %v4676 = vmul.f32 %v4644, 0.5
        %v4677 = vmul.f32 %v4645, 0.5
        %v4678 = vmul.f32 %v4646, 0.5
        %v4679 = vmul.f32 %v4647, 0.5
        %v4680 = vmul.f32 %v4648, 0.5
        %v4681 = vmul.f32 %v4649, 0.5
        %v4682 = vmul.f32 %v4650, 0.5
        %v4683 = vmul.f32 %v4651, 0.5
        %v4684 = vmul.f32 %v4652, 0.5
        %v4685 = vmul.f32 %v4653, 0.5
        %v4686 = vmul.f32 %v4654, 0.5
        %v4687 = vmul.f32 %v4655, 0.5
        %v4688 = vmul.f32 %v4656, 0.5
        %v4689 = vmul.f32 %v4657, 0.5
        %v4690 = vmul.f32 %v4658, 0.5
        %v4691 = vmul.f32 %v4659, 0.5
        %v4692 = vmul.f32 %v4660, 0.5
        %v4693 = vmul.f32 %v4661, 0.5
        %v4694 = vmul.f32 %v4662, 0.5
        %v4695 = vmul.f32 %v4663, 0.5
        %v4696 = vmul.f32 %v4664, 0.5
        %v4697 = vtanh.pop %v4665
        %v4698 = vtanh.pop %v4666
        %v4699 = vtanh.pop %v4667
        %v4700 = vtanh.pop %v4668
        %v4701 = vtanh.pop %v4669
        %v4702 = vtanh.pop %v4670
        %v4703 = vtanh.pop %v4671
        %v4704 = vtanh.pop %v4672
        %v4705 = vtanh.pop %v4673
        %v4706 = vtanh.pop %v4674
        %v4707 = vtanh.pop %v4675
        %v4708 = vtanh.pop %v4676
        %v4709 = vtanh.pop %v4677
        %v4710 = vtanh.pop %v4678
        %v4711 = vtanh.pop %v4679
        %v4712 = vtanh.pop %v4680
        %v4713 = vtanh.pop %v4681
        %v4714 = vtanh.pop %v4682
        %v4715 = vtanh.pop %v4683
        %v4716 = vtanh.pop %v4684
        %v4717 = vtanh.pop %v4685
        %v4718 = vtanh.pop %v4686
        %v4719 = vtanh.pop %v4687
        %v4720 = vtanh.pop %v4688
        %v4721 = vtanh.pop %v4689
        %v4722 = vtanh.pop %v4690
        %v4723 = vtanh.pop %v4691
        %v4724 = vtanh.pop %v4692
        %v4725 = vtanh.pop %v4693
        %v4726 = vtanh.pop %v4694
        %v4727 = vtanh.pop %v4695
        %v4728 = vtanh.pop %v4696
        %v4729 = vadd.f32 %v4697, 1.0
        %v4730 = vadd.f32 %v4698, 1.0
        %v4731 = vadd.f32 %v4699, 1.0
        %v4732 = vadd.f32 %v4700, 1.0
        %v4733 = vadd.f32 %v4701, 1.0
        %v4734 = vadd.f32 %v4702, 1.0
        %v4735 = vadd.f32 %v4703, 1.0
        %v4736 = vadd.f32 %v4704, 1.0
        %v4737 = vadd.f32 %v4705, 1.0
        %v4738 = vadd.f32 %v4706, 1.0
        %v4739 = vadd.f32 %v4707, 1.0
        %v4740 = vadd.f32 %v4708, 1.0
        %v4741 = vadd.f32 %v4709, 1.0
        %v4742 = vadd.f32 %v4710, 1.0
        %v4743 = vadd.f32 %v4711, 1.0
        %v4744 = vadd.f32 %v4712, 1.0
        %v4745 = vadd.f32 %v4713, 1.0
        %v4746 = vadd.f32 %v4714, 1.0
        %v4747 = vadd.f32 %v4715, 1.0
        %v4748 = vadd.f32 %v4716, 1.0
        %v4749 = vadd.f32 %v4717, 1.0
        %v4750 = vadd.f32 %v4718, 1.0
        %v4751 = vadd.f32 %v4719, 1.0
        %v4752 = vadd.f32 %v4720, 1.0
        %v4753 = vadd.f32 %v4721, 1.0
        %v4754 = vadd.f32 %v4722, 1.0
        %v4755 = vadd.f32 %v4723, 1.0
        %v4756 = vadd.f32 %v4724, 1.0
        %v4757 = vadd.f32 %v4725, 1.0
        %v4758 = vadd.f32 %v4726, 1.0
        %v4759 = vadd.f32 %v4727, 1.0
        %v4760 = vadd.f32 %v4728, 1.0
        %v4761 = vmul.f32 %v4729, 0.5
        %v4762 = vmul.f32 %v4730, 0.5
        %v4763 = vmul.f32 %v4731, 0.5
        %v4764 = vmul.f32 %v4732, 0.5
        %v4765 = vmul.f32 %v4733, 0.5
        %v4766 = vmul.f32 %v4734, 0.5
        %v4767 = vmul.f32 %v4735, 0.5
        %v4768 = vmul.f32 %v4736, 0.5
        %v4769 = vmul.f32 %v4737, 0.5
        %v4770 = vmul.f32 %v4738, 0.5
        %v4771 = vmul.f32 %v4739, 0.5
        %v4772 = vmul.f32 %v4740, 0.5
        %v4773 = vmul.f32 %v4741, 0.5
        %v4774 = vmul.f32 %v4742, 0.5
        %v4775 = vmul.f32 %v4743, 0.5
        %v4776 = vmul.f32 %v4744, 0.5
        %v4777 = vmul.f32 %v4745, 0.5
        %v4778 = vmul.f32 %v4746, 0.5
        %v4779 = vmul.f32 %v4747, 0.5
        %v4780 = vmul.f32 %v4748, 0.5
        %v4781 = vmul.f32 %v4749, 0.5
        %v4782 = vmul.f32 %v4750, 0.5
        %v4783 = vmul.f32 %v4751, 0.5
        %v4784 = vmul.f32 %v4752, 0.5
        %v4785 = vmul.f32 %v4753, 0.5
        %v4786 = vmul.f32 %v4754, 0.5
        %v4787 = vmul.f32 %v4755, 0.5
        %v4788 = vmul.f32 %v4756, 0.5
        %v4789 = vmul.f32 %v4757, 0.5
        %v4790 = vmul.f32 %v4758, 0.5
        %v4791 = vmul.f32 %v4759, 0.5
        %v4792 = vmul.f32 %v4760, 0.5
        %v4793 = vmul.f32 %v4633, %v4761
        %v4794 = vmul.f32 %v4634, %v4762
        %v4795 = vmul.f32 %v4635, %v4763
        %v4796 = vmul.f32 %v4636, %v4764
        %v4797 = vmul.f32 %v4637, %v4765
        %v4798 = vmul.f32 %v4638, %v4766
        %v4799 = vmul.f32 %v4639, %v4767
        %v4800 = vmul.f32 %v4640, %v4768
        %v4801 = vmul.f32 %v4641, %v4769
        %v4802 = vmul.f32 %v4642, %v4770
        %v4803 = vmul.f32 %v4643, %v4771
        %v4804 = vmul.f32 %v4644, %v4772
        %v4805 = vmul.f32 %v4645, %v4773
        %v4806 = vmul.f32 %v4646, %v4774
        %v4807 = vmul.f32 %v4647, %v4775
        %v4808 = vmul.f32 %v4648, %v4776
        %v4809 = vmul.f32 %v4649, %v4777
        %v4810 = vmul.f32 %v4650, %v4778
        %v4811 = vmul.f32 %v4651, %v4779
        %v4812 = vmul.f32 %v4652, %v4780
        %v4813 = vmul.f32 %v4653, %v4781
        %v4814 = vmul.f32 %v4654, %v4782
        %v4815 = vmul.f32 %v4655, %v4783
        %v4816 = vmul.f32 %v4656, %v4784
        %v4817 = vmul.f32 %v4657, %v4785
        %v4818 = vmul.f32 %v4658, %v4786
        %v4819 = vmul.f32 %v4659, %v4787
        %v4820 = vmul.f32 %v4660, %v4788
        %v4821 = vmul.f32 %v4661, %v4789
        %v4822 = vmul.f32 %v4662, %v4790
        %v4823 = vmul.f32 %v4663, %v4791
        %v4824 = vmul.f32 %v4664, %v4792
        %4825 = vst [vmem:[%s393] sm:$0xff] %v4793
        %4826 = vst [vmem:[%s393 + $0x8] sm:$0xff] %v4794
        %4827 = vst [vmem:[%s393 + $0x10] sm:$0xff] %v4795
        %4828 = vst [vmem:[%s393 + $0x18] sm:$0xff] %v4796
        %4829 = vst [vmem:[%s393 + $0x20] sm:$0xff] %v4797
        %4830 = vst [vmem:[%s393 + $0x28] sm:$0xff] %v4798
        %4831 = vst [vmem:[%s393 + $0x30] sm:$0xff] %v4799
        %4832 = vst [vmem:[%s393 + $0x38] sm:$0xff] %v4800
        %4833 = vst [vmem:[%s393 + $0x40] sm:$0xff] %v4801
        %4834 = vst [vmem:[%s393 + $0x48] sm:$0xff] %v4802
        %4835 = vst [vmem:[%s393 + $0x50] sm:$0xff] %v4803
        %4836 = vst [vmem:[%s393 + $0x58] sm:$0xff] %v4804
        %4837 = vst [vmem:[%s393 + $0x60] sm:$0xff] %v4805
        %4838 = vst [vmem:[%s393 + $0x68] sm:$0xff] %v4806
        %4839 = vst [vmem:[%s393 + $0x70] sm:$0xff] %v4807
        %4840 = vst [vmem:[%s393 + $0x78] sm:$0xff] %v4808
        %4841 = vst [vmem:[%s393 + $0x80] sm:$0xff] %v4809
        %4842 = vst [vmem:[%s393 + $0x88] sm:$0xff] %v4810
        %4843 = vst [vmem:[%s393 + $0x90] sm:$0xff] %v4811
        %4844 = vst [vmem:[%s393 + $0x98] sm:$0xff] %v4812
        %4845 = vst [vmem:[%s393 + $0xa0] sm:$0xff] %v4813
        %4846 = vst [vmem:[%s393 + $0xa8] sm:$0xff] %v4814
        %4847 = vst [vmem:[%s393 + $0xb0] sm:$0xff] %v4815
        %4848 = vst [vmem:[%s393 + $0xb8] sm:$0xff] %v4816
        %4849 = vst [vmem:[%s393 + $0xc0] sm:$0xff] %v4817
        %4850 = vst [vmem:[%s393 + $0xc8] sm:$0xff] %v4818
        %4851 = vst [vmem:[%s393 + $0xd0] sm:$0xff] %v4819
        %4852 = vst [vmem:[%s393 + $0xd8] sm:$0xff] %v4820
        %4853 = vst [vmem:[%s393 + $0xe0] sm:$0xff] %v4821
        %4854 = vst [vmem:[%s393 + $0xe8] sm:$0xff] %v4822
        %4855 = vst [vmem:[%s393 + $0xf0] sm:$0xff] %v4823
        %4856 = vst [vmem:[%s393 + $0xf8] sm:$0xff] %v4824
        %s4857 = sand.u32 %s209, 1
        %s4858 = scalar_lea.sflag [#allocation4], %s4857
        %s4859 = sand.u32 %s209, 1
        %s4860 = smul.addr %s4859, 256
        %s4861 = scalar_lea.vmem [#allocation13], %s4860
        // Predicated region
        $region77: #{gemm_groupnorm_swish_multiply_swish.1} parent=51 // pred_check
          %p4862 = pneg %p219
        $region78: #{gemm_groupnorm_swish_multiply_swish.1} parent=51 // pred_check_branch
          %4864 = sbr.rel (%p4862) target = $region80
        $region79: #{gemm_groupnorm_swish_multiply_swish.1} parent=51 // pred_region
          %s4865 = smul.u32 4, %s28
          %s4867 = ssub.s32 4096, 4096
          %4868 = vsyncadd %s4858, %s4867
          %s4869 = smul.addr %s4865, 8
          %s4870 = smul.addr %s4869, 128
          %s4871 = scalar_lea.hbm %s8, %s4870
          %s4872 = sshll.u32 %s4861, 4
          %s4873 = int_to_ptr.vmem [resolvable:$true] %s4872
          %4878 = dma.vmem_to_hbm [thread:$0]  %s4873, 4096, %s4871, %s4858, 1024, 1024, 64
        $region80: #{gemm_groupnorm_swish_multiply_swish.1} parent=51 // pred_fallthru
          _
      $region52: #{gemm_groupnorm_swish_multiply_swish.1} parent=5 // pred_fallthru
        _
      %p4879 = scmp.le.s32.totalorder 2, %s23
      // Predicated region
      $region81: #{gemm_groupnorm_swish_multiply_swish.1} parent=5 // pred_check
        %p4880 = pneg %p4879
      $region82: #{gemm_groupnorm_swish_multiply_swish.1} parent=5 // pred_check_branch
        %4882 = sbr.rel (%p4880) target = $region84
      $region83: #{gemm_groupnorm_swish_multiply_swish.1} parent=5 // pred_region
        %s4883 = ssub.s32 %s23, 2
        // Predicated region
        $region85: #{gemm_groupnorm_swish_multiply_swish.1} parent=83 // pred_check
          %p4884 = pneg %p225
        $region86: #{gemm_groupnorm_swish_multiply_swish.1} parent=83 // pred_check_branch
          %4886 = sbr.rel (%p4884) target = $region88
        $region87: #{gemm_groupnorm_swish_multiply_swish.1} parent=83 // pred_region
          %s4887 = sand.u32 %s210, 1
          %s4888 = scalar_lea.sflag [#allocation4], %s4887
          %s4889 = sand.u32 %s210, 1
          %s4890 = smul.addr %s4889, 256
          %s4891 = scalar_lea.vmem [#allocation13], %s4890
          %4892 = dma.done %s4888, 4096
        $region88: #{gemm_groupnorm_swish_multiply_swish.1} parent=83 // pred_fallthru
          _
      $region84: #{gemm_groupnorm_swish_multiply_swish.1} parent=5 // pred_fallthru
        _
    $region6: #{gemm_groupnorm_swish_multiply_swish.1} parent=1 // loop_footer
      %s27 = sadd.s32 1, %s23
    $region7: #{gemm_groupnorm_swish_multiply_swish.1} parent=1 // loop_footer_branch
      %22 = sbr.rel target = $region3
    $region8: #{gemm_groupnorm_swish_multiply_swish.1} parent=1 // loop_exit
      _
    %4893 = vsyncpa [#allocation3], 1
    %s4894 = scalar_lea.sflag [#allocation3], 1
    %4895 = vsyncpa %s4894, 1
    %4896 = vsyncpa [#allocation6], 1
    %4897 = vsyncpa [#allocation9], 1
    %4898 = vsyncpa [#allocation12], 1
    %4899 = vsyncpa [#allocation4], 1
    %s4900 = scalar_lea.sflag [#allocation4], 1
    %4901 = vsyncpa %s4900, 1

</llo_original>
